<compile_context>
chip_gen: v7x
topology: tpu7x:2x2x1
jax: 0.10.0
libtpu: 0.0.40
codegen_flags: <defaults>
</compile_context>

<pallas_src>
import functools
import math

import jax
import jax.numpy as jnp
from jax import lax
from jax.experimental import pallas as pl
from jax.experimental.pallas import tpu as pltpu


def _layer_norm(y, gamma, beta, eps=1e-5):
    mu = jnp.mean(y, axis=-1, keepdims=True)
    var = jnp.mean(jnp.square(y - mu), axis=-1, keepdims=True)
    return (y - mu) * lax.rsqrt(var + eps) * gamma + beta


def encoder_layer_kernel(
    # per-(batch, query-tile) blocks
    x_q_ref, x_kv_ref, mask_ref,
    # attention weights (scale folded into wq/bq at prep time)
    wq_ref, bq_ref,          # (D, D) bf16, (1, D) f32
    wkv_ref, bkv_ref,        # (D, 2D) bf16, (1, 2D) f32
    wo_ref, bo_ref,          # (H, hd, D) bf16, (1, D) f32
    # layernorm 1
    g1_ref, beta1_ref,
    # feed-forward
    w1_ref, b1_ref,          # (D, d_ff) bf16, (1, d_ff) f32
    w2_ref, b2_ref,          # (d_ff, D) bf16, (1, D) f32
    # layernorm 2
    g2_ref, beta2_ref,
    # output
    o_ref,
    *, num_heads, head_dim, d_model, ff_chunk, exp_in_bf16,
):
    bf16 = jnp.bfloat16
    x_q = x_q_ref[0].astype(jnp.float32)                 # (TQ, D) residual path stays f32
    tq = x_q.shape[0]

    # Q projection for this query tile (1/sqrt(hd) already folded into wq/bq);
    # cast to bf16 right away so only the narrow copy stays live.
    q_bf = (jnp.dot(x_q.astype(bf16), wq_ref[...],
                    preferred_element_type=jnp.float32) + bq_ref[...]).astype(bf16)

    # K/V projection over the full sequence; cast to bf16 immediately after the bias add.
    kv_bf = (jnp.dot(x_kv_ref[0].astype(bf16), wkv_ref[...],
                     preferred_element_type=jnp.float32) + bkv_ref[...]).astype(bf16)

    # Additive attention bias for this query tile, computed once and reused for every head.
    neg_mask = mask_ref[0].astype(jnp.float32) * (-1e9)  # (TQ, S)

    # --- per-head attention; output projection accumulated directly (no concatenate) ---
    attn_out = jnp.zeros((tq, d_model), jnp.float32)
    for h in range(num_heads):
        lo = h * head_dim
        q_h = q_bf[:, lo:lo + head_dim]                       # (TQ, hd)
        k_h = kv_bf[:, lo:lo + head_dim]                      # (S, hd)
        v_h = kv_bf[:, d_model + lo:d_model + lo + head_dim]  # (S, hd)

        # q_h @ k_h^T without an explicit transpose: contract the last dims of both.
        logits = lax.dot_general(q_h, k_h, (((1,), (1,)), ((), ())),
                                 preferred_element_type=jnp.float32)  # (TQ, S)
        logits = logits + neg_mask

        m = jnp.max(logits, axis=-1, keepdims=True)
        z = logits - m
        # bf16 exp halves the EUP-bound softmax on v6e/v7x; keep f32 on v5e (no bf16 EUP).
        p = jnp.exp(z.astype(bf16)) if exp_in_bf16 else jnp.exp(z)
        denom = jnp.sum(p.astype(jnp.float32), axis=-1, keepdims=True)

        # PV matmul on un-normalized probabilities; normalize afterwards on the (TQ, hd)
        # context instead of the (TQ, S) probabilities.
        ctx = jnp.dot(p.astype(bf16), v_h, preferred_element_type=jnp.float32)
        ctx = ctx * pl.reciprocal(denom, approx=True)

        # attn_out @ wo == sum_h ctx_h @ wo[h]
        attn_out = attn_out + jnp.dot(ctx.astype(bf16), wo_ref[h],
                                      preferred_element_type=jnp.float32)
    attn_out = attn_out + bo_ref[...]

    # --- residual + layernorm 1 (dropout = identity) ---
    y = _layer_norm(x_q + attn_out, g1_ref[...], beta1_ref[...])

    # --- position-wise FFN, chunked over d_ff so (TQ, d_ff) is never materialized at once ---
    d_ff = w1_ref.shape[1]
    y_bf = y.astype(bf16)
    ffn = jnp.zeros((tq, d_model), jnp.float32)
    for c0 in range(0, d_ff, ff_chunk):
        c1 = min(c0 + ff_chunk, d_ff)
        h1 = jnp.dot(y_bf, w1_ref[:, c0:c1], preferred_element_type=jnp.float32)
        h1 = jnp.maximum(h1 + b1_ref[:, c0:c1], 0.0)
        ffn = ffn + jnp.dot(h1.astype(bf16), w2_ref[c0:c1, :],
                            preferred_element_type=jnp.float32)
    ffn = ffn + b2_ref[...]

    # --- residual + layernorm 2 (dropout = identity) ---
    out = _layer_norm(y + ffn, g2_ref[...], beta2_ref[...])
    o_ref[0] = out.astype(o_ref.dtype)


def prepare_params(params, num_heads):
    """One-time weight prep: fuse K/V, fold the softmax scale into Q, cast matmul weights
    to bf16. Do this once and reuse across calls (avoids a per-call concat/cast rewrite)."""
    bf16 = jnp.bfloat16
    D = params["wq"].shape[0]
    hd = D // num_heads
    scale = 1.0 / math.sqrt(float(hd))
    return {
        "wq": (params["wq"] * scale).astype(bf16),
        "bq": params["bq"] * scale,
        "wkv": jnp.concatenate([params["wk"], params["wv"]], axis=1).astype(bf16),
        "bkv": jnp.concatenate([params["bk"], params["bv"]], axis=1),
        "wo3": params["wo"].reshape(num_heads, hd, D).astype(bf16),
        "bo": params["bo"],
        "gamma1": params["gamma1"], "beta1": params["beta1"],
        "w1": params["w_ff1"].astype(bf16), "b1": params["b_ff1"],
        "w2": params["w_ff2"].astype(bf16), "b2": params["b_ff2"],
        "gamma2": params["gamma2"], "beta2": params["beta2"],
    }


def encoder_layer(x, mask, prep, *, num_heads, q_tile=None, exp_in_bf16=False):
    """x: (B, S, D) f32, mask: (B, S, S) (1.0 = masked position), prep = prepare_params(...)."""
    B, S, D = x.shape
    hd = D // num_heads
    d_ff = prep["w1"].shape[1]
    ff_chunk = min(512, d_ff)
    bf16 = jnp.bfloat16

    # Query tile: lane/MXU friendly 256 when it divides S, otherwise the full sequence
    # (small-shape path; block then equals the array dims so the (8,128) rule is satisfied).
    if q_tile is None:
        q_tile = 256 if (S > 256 and S % 256 == 0) else S
    assert S % q_tile == 0
    num_q = S // q_tile  # on v7x keep B * num_q even so both TensorCores get work

    # mask is the largest DMA'd operand (S^2); bf16 halves the dominant HBM stream.
    mask = mask.astype(bf16)

    def const_spec(shape, single):
        idx = lambda b, qi: (0,) * len(shape)
        if single:
            # Grid-invariant weights: single-buffered so they are not doubled in VMEM.
            return pl.BlockSpec(shape, idx, pipeline_mode=pl.Buffered(1))
        return pl.BlockSpec(shape, idx)

    def build(single_buffer):
        in_specs = [
            pl.BlockSpec((1, q_tile, D), lambda b, qi: (b, qi, 0)),  # x: query tile
            pl.BlockSpec((1, S, D), lambda b, qi: (b, 0, 0)),        # x: full seq (K/V side)
            pl.BlockSpec((1, q_tile, S), lambda b, qi: (b, qi, 0)),  # mask tile
            const_spec((D, D), single_buffer), const_spec((1, D), single_buffer),        # wq, bq
            const_spec((D, 2 * D), single_buffer), const_spec((1, 2 * D), single_buffer),# wkv, bkv
            const_spec((num_heads, hd, D), single_buffer), const_spec((1, D), single_buffer),  # wo3, bo
            const_spec((1, D), single_buffer), const_spec((1, D), single_buffer),        # gamma1, beta1
            const_spec((D, d_ff), single_buffer), const_spec((1, d_ff), single_buffer),  # w1, b1
            const_spec((d_ff, D), single_buffer), const_spec((1, D), single_buffer),     # w2, b2
            const_spec((1, D), single_buffer), const_spec((1, D), single_buffer),        # gamma2, beta2
        ]
        kernel = functools.partial(
            encoder_layer_kernel,
            num_heads=num_heads, head_dim=hd, d_model=D,
            ff_chunk=ff_chunk, exp_in_bf16=exp_in_bf16)
        return pl.pallas_call(
            kernel,
            out_shape=jax.ShapeDtypeStruct((B, S, D), x.dtype),
            grid=(B, num_q),
            in_specs=in_specs,
            out_specs=pl.BlockSpec((1, q_tile, D), lambda b, qi: (b, qi, 0)),
            compiler_params=pltpu.CompilerParams(
                dimension_semantics=("parallel", "parallel"),
                vmem_limit_bytes=64 * 1024 * 1024,  # sized for v7x's 64 MiB physical VMEM
            ),
        )

    args = (x, x, mask,
            prep["wq"], prep["bq"], prep["wkv"], prep["bkv"],
            prep["wo3"], prep["bo"],
            prep["gamma1"], prep["beta1"],
            prep["w1"], prep["b1"], prep["w2"], prep["b2"],
            prep["gamma2"], prep["beta2"])

    try:
        return build(True)(*args)
    except Exception:
        # Only reached if the runtime rejects pl.Buffered(1) single-buffering (a lowering /
        # compile error). Numeric correctness asserts run in the caller, so this fallback
        # cannot hide a wrong answer.
        return build(False)(*args)


def init_params(key, d_model, d_ff):
    ks = jax.random.split(key, 6)
    s = 1.0 / math.sqrt(d_model)
    return {
        "wq": jax.random.normal(ks[0], (d_model, d_model), jnp.float32) * s,
        "wk": jax.random.normal(ks[1], (d_model, d_model), jnp.float32) * s,
        "wv": jax.random.normal(ks[2], (d_model, d_model), jnp.float32) * s,
        "wo": jax.random.normal(ks[3], (d_model, d_model), jnp.float32) * s,
        "bq": jnp.zeros((1, d_model), jnp.float32),
        "bk": jnp.zeros((1, d_model), jnp.float32),
        "bv": jnp.zeros((1, d_model), jnp.float32),
        "bo": jnp.zeros((1, d_model), jnp.float32),
        "gamma1": jnp.ones((1, d_model), jnp.float32),
        "beta1": jnp.zeros((1, d_model), jnp.float32),
        "w_ff1": jax.random.normal(ks[4], (d_model, d_ff), jnp.float32) * s,
        "b_ff1": jnp.zeros((1, d_ff), jnp.float32),
        "w_ff2": jax.random.normal(ks[5], (d_ff, d_model), jnp.float32) * (1.0 / math.sqrt(d_ff)),
        "b_ff2": jnp.zeros((1, d_model), jnp.float32),
        "gamma2": jnp.ones((1, d_model), jnp.float32),
        "beta2": jnp.zeros((1, d_model), jnp.float32),
    }


def reference_encoder(x, mask, params, *, num_heads):
    """Pure-JAX f32 reference mirroring the PyTorch forward (dropout = identity)."""
    B, S, D = x.shape
    hd = D // num_heads
    q = x @ params["wq"] + params["bq"]
    k = x @ params["wk"] + params["bk"]
    v = x @ params["wv"] + params["bv"]
    split = lambda t: t.reshape(B, S, num_heads, hd).transpose(0, 2, 1, 3)
    q, k, v = split(q), split(k), split(v)
    logits = jnp.einsum("bhqd,bhkd->bhqk", q, k) / jnp.sqrt(jnp.float32(hd))
    logits = logits + mask[:, None, :, :] * (-1e9)
    attn = jax.nn.softmax(logits, axis=-1)
    out = jnp.einsum("bhqk,bhkd->bhqd", attn, v).transpose(0, 2, 1, 3).reshape(B, S, D)
    out = out @ params["wo"] + params["bo"]

    def ln(y, g, b, eps=1e-5):
        mu = y.mean(-1, keepdims=True)
        var = ((y - mu) ** 2).mean(-1, keepdims=True)
        return (y - mu) / jnp.sqrt(var + eps) * g + b

    y = ln(x + out, params["gamma1"], params["beta1"])
    h = jax.nn.relu(y @ params["w_ff1"] + params["b_ff1"])
    ffn = h @ params["w_ff2"] + params["b_ff2"]
    return ln(y + ffn, params["gamma2"], params["beta2"])


if __name__ == "__main__":
    B, S, D, NH, DFF = 2, 8, 32, 4, 64
    key = jax.random.PRNGKey(0)
    kx, km, kp = jax.random.split(key, 3)
    x = jax.random.normal(kx, (B, S, D), jnp.float32)
    # mask: 1.0 marks positions to be suppressed (added as mask * -1e9), else 0.0
    mask = (jax.random.uniform(km, (B, S, S)) > 0.8).astype(jnp.float32)
    params = init_params(kp, D, DFF)
    prep = prepare_params(params, NH)

    ref = reference_encoder(x, mask, params, num_heads=NH)

    out = encoder_layer(x, mask, prep, num_heads=NH, exp_in_bf16=False)
    out = jax.block_until_ready(out)
    assert out.shape == (B, S, D)
    # bf16 matmul operands + approx reciprocal -> slightly looser tolerance vs f32 ref.
    err = float(jnp.max(jnp.abs(out - ref)))
    assert jnp.allclose(out, ref, atol=5e-2, rtol=5e-2), err

    print("KERNEL_OK")
</pallas_src>

<mosaic_0001>
module attributes {stable_mosaic.version = 11 : i64} {
  func.func @encoder_layer_kernel(%arg0: i32, %arg1: i32, %arg2: memref<1x8x32xf32, #tpu.memory_space<vmem>>, %arg3: memref<1x8x32xf32, #tpu.memory_space<vmem>>, %arg4: memref<1x8x8xbf16, #tpu.memory_space<vmem>>, %arg5: memref<32x32xbf16, #tpu.memory_space<vmem>>, %arg6: memref<1x32xf32, #tpu.memory_space<vmem>>, %arg7: memref<32x64xbf16, #tpu.memory_space<vmem>>, %arg8: memref<1x64xf32, #tpu.memory_space<vmem>>, %arg9: memref<4x8x32xbf16, #tpu.memory_space<vmem>>, %arg10: memref<1x32xf32, #tpu.memory_space<vmem>>, %arg11: memref<1x32xf32, #tpu.memory_space<vmem>>, %arg12: memref<1x32xf32, #tpu.memory_space<vmem>>, %arg13: memref<32x64xbf16, #tpu.memory_space<vmem>>, %arg14: memref<1x64xf32, #tpu.memory_space<vmem>>, %arg15: memref<64x32xbf16, #tpu.memory_space<vmem>>, %arg16: memref<1x32xf32, #tpu.memory_space<vmem>>, %arg17: memref<1x32xf32, #tpu.memory_space<vmem>>, %arg18: memref<1x32xf32, #tpu.memory_space<vmem>>, %arg19: memref<1x8x32xf32, #tpu.memory_space<vmem>>) attributes {dimension_semantics = [#tpu.dimension_semantics<parallel>, #tpu.dimension_semantics<parallel>], iteration_bounds = array<i64: 2, 1>, scalar_prefetch = 0 : i64, scratch_operands = 0 : i64, tpu.core_type = #tpu.core_type<tc>, window_params = [{transform_indices = @transform_0, window_bounds = array<i64: 1, 8, 32>}, {transform_indices = @transform_1, window_bounds = array<i64: 1, 8, 32>}, {transform_indices = @transform_2, window_bounds = array<i64: 1, 8, 8>}, {pipeline_mode = #tpu.pipeline_mode<synchronous>, transform_indices = @transform_3, window_bounds = array<i64: 32, 32>}, {pipeline_mode = #tpu.pipeline_mode<synchronous>, transform_indices = @transform_4, window_bounds = array<i64: 1, 32>}, {pipeline_mode = #tpu.pipeline_mode<synchronous>, transform_indices = @transform_5, window_bounds = array<i64: 32, 64>}, {pipeline_mode = #tpu.pipeline_mode<synchronous>, transform_indices = @transform_6, window_bounds = array<i64: 1, 64>}, {pipeline_mode = #tpu.pipeline_mode<synchronous>, transform_indices = @transform_7, window_bounds = array<i64: 4, 8, 32>}, {pipeline_mode = #tpu.pipeline_mode<synchronous>, transform_indices = @transform_8, window_bounds = array<i64: 1, 32>}, {pipeline_mode = #tpu.pipeline_mode<synchronous>, transform_indices = @transform_9, window_bounds = array<i64: 1, 32>}, {pipeline_mode = #tpu.pipeline_mode<synchronous>, transform_indices = @transform_10, window_bounds = array<i64: 1, 32>}, {pipeline_mode = #tpu.pipeline_mode<synchronous>, transform_indices = @transform_11, window_bounds = array<i64: 32, 64>}, {pipeline_mode = #tpu.pipeline_mode<synchronous>, transform_indices = @transform_12, window_bounds = array<i64: 1, 64>}, {pipeline_mode = #tpu.pipeline_mode<synchronous>, transform_indices = @transform_13, window_bounds = array<i64: 64, 32>}, {pipeline_mode = #tpu.pipeline_mode<synchronous>, transform_indices = @transform_14, window_bounds = array<i64: 1, 32>}, {pipeline_mode = #tpu.pipeline_mode<synchronous>, transform_indices = @transform_15, window_bounds = array<i64: 1, 32>}, {pipeline_mode = #tpu.pipeline_mode<synchronous>, transform_indices = @transform_16, window_bounds = array<i64: 1, 32>}, {transform_indices = @transform_17, window_bounds = array<i64: 1, 8, 32>}]} {
    %c0 = arith.constant 0 : index
    %c0_0 = arith.constant 0 : index
    %c0_1 = arith.constant 0 : index
    %0 = vector.load %arg2[%c0, %c0_0, %c0_1] : memref<1x8x32xf32, #tpu.memory_space<vmem>>, vector<1x8x32xf32>
    %1 = vector.shape_cast %0 : vector<1x8x32xf32> to vector<8x32xf32>
    %2 = arith.truncf %1 : vector<8x32xf32> to vector<8x32xbf16>
    %c0_2 = arith.constant 0 : index
    %c0_3 = arith.constant 0 : index
    %3 = vector.load %arg5[%c0_2, %c0_3] : memref<32x32xbf16, #tpu.memory_space<vmem>>, vector<32x32xbf16>
    %cst = arith.constant dense<0.000000e+00> : vector<8x32xf32>
    %4 = tpu.matmul %2, %3, %cst {dimension_numbers = #tpu.dot_dimension_numbers<[1], [0], [0], [1], [0, 0, 1, 1], [], []>} : vector<8x32xbf16>, vector<32x32xbf16>, vector<8x32xf32> -> vector<8x32xf32>
    %c0_4 = arith.constant 0 : index
    %c0_5 = arith.constant 0 : index
    %5 = vector.load %arg6[%c0_4, %c0_5] : memref<1x32xf32, #tpu.memory_space<vmem>>, vector<1x32xf32>
    %6 = vector.broadcast %5 : vector<1x32xf32> to vector<8x32xf32>
    %7 = arith.addf %4, %6 : vector<8x32xf32>
    %8 = arith.truncf %7 : vector<8x32xf32> to vector<8x32xbf16>
    %c0_6 = arith.constant 0 : index
    %c0_7 = arith.constant 0 : index
    %c0_8 = arith.constant 0 : index
    %9 = vector.load %arg3[%c0_6, %c0_7, %c0_8] : memref<1x8x32xf32, #tpu.memory_space<vmem>>, vector<1x8x32xf32>
    %10 = vector.shape_cast %9 : vector<1x8x32xf32> to vector<8x32xf32>
    %11 = arith.truncf %10 : vector<8x32xf32> to vector<8x32xbf16>
    %c0_9 = arith.constant 0 : index
    %c0_10 = arith.constant 0 : index
    %12 = vector.load %arg7[%c0_9, %c0_10] : memref<32x64xbf16, #tpu.memory_space<vmem>>, vector<32x64xbf16>
    %cst_11 = arith.constant dense<0.000000e+00> : vector<8x64xf32>
    %13 = tpu.matmul %11, %12, %cst_11 {dimension_numbers = #tpu.dot_dimension_numbers<[1], [0], [0], [1], [0, 0, 1, 1], [], []>} : vector<8x32xbf16>, vector<32x64xbf16>, vector<8x64xf32> -> vector<8x64xf32>
    %c0_12 = arith.constant 0 : index
    %c0_13 = arith.constant 0 : index
    %14 = vector.load %arg8[%c0_12, %c0_13] : memref<1x64xf32, #tpu.memory_space<vmem>>, vector<1x64xf32>
    %15 = vector.broadcast %14 : vector<1x64xf32> to vector<8x64xf32>
    %16 = arith.addf %13, %15 : vector<8x64xf32>
    %17 = arith.truncf %16 : vector<8x64xf32> to vector<8x64xbf16>
    %c0_14 = arith.constant 0 : index
    %c0_15 = arith.constant 0 : index
    %c0_16 = arith.constant 0 : index
    %18 = vector.load %arg4[%c0_14, %c0_15, %c0_16] : memref<1x8x8xbf16, #tpu.memory_space<vmem>>, vector<1x8x8xbf16>
    %19 = vector.shape_cast %18 : vector<1x8x8xbf16> to vector<8x8xbf16>
    %20 = arith.extf %19 : vector<8x8xbf16> to vector<8x8xf32>
    %cst_17 = arith.constant -1.000000e+09 : f32
    %21 = vector.broadcast %cst_17 : f32 to vector<8x8xf32>
    %22 = arith.mulf %20, %21 : vector<8x8xf32>
    %cst_18 = arith.constant 0.000000e+00 : f32
    %23 = vector.broadcast %cst_18 : f32 to vector<8x32xf32>
    %24 = vector.extract_strided_slice %8 {offsets = [0, 0], sizes = [8, 8], strides = [1, 1]} : vector<8x32xbf16> to vector<8x8xbf16>
    %25 = vector.extract_strided_slice %17 {offsets = [0, 0], sizes = [8, 8], strides = [1, 1]} : vector<8x64xbf16> to vector<8x8xbf16>
    %26 = vector.extract_strided_slice %17 {offsets = [0, 32], sizes = [8, 8], strides = [1, 1]} : vector<8x64xbf16> to vector<8x8xbf16>
    %cst_19 = arith.constant dense<0.000000e+00> : vector<8x8xf32>
    %27 = tpu.matmul %24, %25, %cst_19 {dimension_numbers = #tpu.dot_dimension_numbers<[1], [1], [0], [0], [0, 0, 1, 0], [], []>} : vector<8x8xbf16>, vector<8x8xbf16>, vector<8x8xf32> -> vector<8x8xf32>
    %28 = arith.addf %27, %22 : vector<8x8xf32>
    %cst_20 = arith.constant dense<0xFF800000> : vector<8xf32>
    %29 = vector.multi_reduction <maximumf>, %28, %cst_20 [1] : vector<8x8xf32> to vector<8xf32>
    %30 = vector.shape_cast %29 : vector<8xf32> to vector<8x1xf32>
    %31 = vector.broadcast %30 : vector<8x1xf32> to vector<8x8xf32>
    %32 = arith.subf %28, %31 : vector<8x8xf32>
    %33 = math.exp %32 : vector<8x8xf32>
    %cst_21 = arith.constant dense<0.000000e+00> : vector<8xf32>
    %34 = vector.multi_reduction <add>, %33, %cst_21 [1] : vector<8x8xf32> to vector<8xf32>
    %35 = vector.shape_cast %34 : vector<8xf32> to vector<8x1xf32>
    %36 = arith.truncf %33 : vector<8x8xf32> to vector<8x8xbf16>
    %cst_22 = arith.constant dense<0.000000e+00> : vector<8x8xf32>
    %37 = tpu.matmul %36, %26, %cst_22 {dimension_numbers = #tpu.dot_dimension_numbers<[1], [0], [0], [1], [0, 0, 1, 1], [], []>} : vector<8x8xbf16>, vector<8x8xbf16>, vector<8x8xf32> -> vector<8x8xf32>
    %38 = tpu.reciprocal %35 {approx = true} : vector<8x1xf32> -> vector<8x1xf32>
    %39 = vector.broadcast %38 : vector<8x1xf32> to vector<8x8xf32>
    %40 = arith.mulf %37, %39 : vector<8x8xf32>
    %41 = arith.truncf %40 : vector<8x8xf32> to vector<8x8xbf16>
    %c0_23 = arith.constant 0 : index
    %c0_24 = arith.constant 0 : index
    %c0_25 = arith.constant 0 : index
    %42 = vector.load %arg9[%c0_23, %c0_24, %c0_25] : memref<4x8x32xbf16, #tpu.memory_space<vmem>>, vector<1x8x32xbf16>
    %43 = vector.shape_cast %42 : vector<1x8x32xbf16> to vector<8x32xbf16>
    %cst_26 = arith.constant dense<0.000000e+00> : vector<8x32xf32>
    %44 = tpu.matmul %41, %43, %cst_26 {dimension_numbers = #tpu.dot_dimension_numbers<[1], [0], [0], [1], [0, 0, 1, 1], [], []>} : vector<8x8xbf16>, vector<8x32xbf16>, vector<8x32xf32> -> vector<8x32xf32>
    %45 = arith.addf %23, %44 : vector<8x32xf32>
    %46 = vector.extract_strided_slice %8 {offsets = [0, 8], sizes = [8, 8], strides = [1, 1]} : vector<8x32xbf16> to vector<8x8xbf16>
    %47 = vector.extract_strided_slice %17 {offsets = [0, 8], sizes = [8, 8], strides = [1, 1]} : vector<8x64xbf16> to vector<8x8xbf16>
    %48 = vector.extract_strided_slice %17 {offsets = [0, 40], sizes = [8, 8], strides = [1, 1]} : vector<8x64xbf16> to vector<8x8xbf16>
    %cst_27 = arith.constant dense<0.000000e+00> : vector<8x8xf32>
    %49 = tpu.matmul %46, %47, %cst_27 {dimension_numbers = #tpu.dot_dimension_numbers<[1], [1], [0], [0], [0, 0, 1, 0], [], []>} : vector<8x8xbf16>, vector<8x8xbf16>, vector<8x8xf32> -> vector<8x8xf32>
    %50 = arith.addf %49, %22 : vector<8x8xf32>
    %cst_28 = arith.constant dense<0xFF800000> : vector<8xf32>
    %51 = vector.multi_reduction <maximumf>, %50, %cst_28 [1] : vector<8x8xf32> to vector<8xf32>
    %52 = vector.shape_cast %51 : vector<8xf32> to vector<8x1xf32>
    %53 = vector.broadcast %52 : vector<8x1xf32> to vector<8x8xf32>
    %54 = arith.subf %50, %53 : vector<8x8xf32>
    %55 = math.exp %54 : vector<8x8xf32>
    %cst_29 = arith.constant dense<0.000000e+00> : vector<8xf32>
    %56 = vector.multi_reduction <add>, %55, %cst_29 [1] : vector<8x8xf32> to vector<8xf32>
    %57 = vector.shape_cast %56 : vector<8xf32> to vector<8x1xf32>
    %58 = arith.truncf %55 : vector<8x8xf32> to vector<8x8xbf16>
    %cst_30 = arith.constant dense<0.000000e+00> : vector<8x8xf32>
    %59 = tpu.matmul %58, %48, %cst_30 {dimension_numbers = #tpu.dot_dimension_numbers<[1], [0], [0], [1], [0, 0, 1, 1], [], []>} : vector<8x8xbf16>, vector<8x8xbf16>, vector<8x8xf32> -> vector<8x8xf32>
    %60 = tpu.reciprocal %57 {approx = true} : vector<8x1xf32> -> vector<8x1xf32>
    %61 = vector.broadcast %60 : vector<8x1xf32> to vector<8x8xf32>
    %62 = arith.mulf %59, %61 : vector<8x8xf32>
    %63 = arith.truncf %62 : vector<8x8xf32> to vector<8x8xbf16>
    %c1 = arith.constant 1 : index
    %c0_31 = arith.constant 0 : index
    %c0_32 = arith.constant 0 : index
    %64 = vector.load %arg9[%c1, %c0_31, %c0_32] : memref<4x8x32xbf16, #tpu.memory_space<vmem>>, vector<1x8x32xbf16>
    %65 = vector.shape_cast %64 : vector<1x8x32xbf16> to vector<8x32xbf16>
    %cst_33 = arith.constant dense<0.000000e+00> : vector<8x32xf32>
    %66 = tpu.matmul %63, %65, %cst_33 {dimension_numbers = #tpu.dot_dimension_numbers<[1], [0], [0], [1], [0, 0, 1, 1], [], []>} : vector<8x8xbf16>, vector<8x32xbf16>, vector<8x32xf32> -> vector<8x32xf32>
    %67 = arith.addf %45, %66 : vector<8x32xf32>
    %68 = vector.extract_strided_slice %8 {offsets = [0, 16], sizes = [8, 8], strides = [1, 1]} : vector<8x32xbf16> to vector<8x8xbf16>
    %69 = vector.extract_strided_slice %17 {offsets = [0, 16], sizes = [8, 8], strides = [1, 1]} : vector<8x64xbf16> to vector<8x8xbf16>
    %70 = vector.extract_strided_slice %17 {offsets = [0, 48], sizes = [8, 8], strides = [1, 1]} : vector<8x64xbf16> to vector<8x8xbf16>
    %cst_34 = arith.constant dense<0.000000e+00> : vector<8x8xf32>
    %71 = tpu.matmul %68, %69, %cst_34 {dimension_numbers = #tpu.dot_dimension_numbers<[1], [1], [0], [0], [0, 0, 1, 0], [], []>} : vector<8x8xbf16>, vector<8x8xbf16>, vector<8x8xf32> -> vector<8x8xf32>
    %72 = arith.addf %71, %22 : vector<8x8xf32>
    %cst_35 = arith.constant dense<0xFF800000> : vector<8xf32>
    %73 = vector.multi_reduction <maximumf>, %72, %cst_35 [1] : vector<8x8xf32> to vector<8xf32>
    %74 = vector.shape_cast %73 : vector<8xf32> to vector<8x1xf32>
    %75 = vector.broadcast %74 : vector<8x1xf32> to vector<8x8xf32>
    %76 = arith.subf %72, %75 : vector<8x8xf32>
    %77 = math.exp %76 : vector<8x8xf32>
    %cst_36 = arith.constant dense<0.000000e+00> : vector<8xf32>
    %78 = vector.multi_reduction <add>, %77, %cst_36 [1] : vector<8x8xf32> to vector<8xf32>
    %79 = vector.shape_cast %78 : vector<8xf32> to vector<8x1xf32>
    %80 = arith.truncf %77 : vector<8x8xf32> to vector<8x8xbf16>
    %cst_37 = arith.constant dense<0.000000e+00> : vector<8x8xf32>
    %81 = tpu.matmul %80, %70, %cst_37 {dimension_numbers = #tpu.dot_dimension_numbers<[1], [0], [0], [1], [0, 0, 1, 1], [], []>} : vector<8x8xbf16>, vector<8x8xbf16>, vector<8x8xf32> -> vector<8x8xf32>
    %82 = tpu.reciprocal %79 {approx = true} : vector<8x1xf32> -> vector<8x1xf32>
    %83 = vector.broadcast %82 : vector<8x1xf32> to vector<8x8xf32>
    %84 = arith.mulf %81, %83 : vector<8x8xf32>
    %85 = arith.truncf %84 : vector<8x8xf32> to vector<8x8xbf16>
    %c2 = arith.constant 2 : index
    %c0_38 = arith.constant 0 : index
    %c0_39 = arith.constant 0 : index
    %86 = vector.load %arg9[%c2, %c0_38, %c0_39] : memref<4x8x32xbf16, #tpu.memory_space<vmem>>, vector<1x8x32xbf16>
    %87 = vector.shape_cast %86 : vector<1x8x32xbf16> to vector<8x32xbf16>
    %cst_40 = arith.constant dense<0.000000e+00> : vector<8x32xf32>
    %88 = tpu.matmul %85, %87, %cst_40 {dimension_numbers = #tpu.dot_dimension_numbers<[1], [0], [0], [1], [0, 0, 1, 1], [], []>} : vector<8x8xbf16>, vector<8x32xbf16>, vector<8x32xf32> -> vector<8x32xf32>
    %89 = arith.addf %67, %88 : vector<8x32xf32>
    %90 = vector.extract_strided_slice %8 {offsets = [0, 24], sizes = [8, 8], strides = [1, 1]} : vector<8x32xbf16> to vector<8x8xbf16>
    %91 = vector.extract_strided_slice %17 {offsets = [0, 24], sizes = [8, 8], strides = [1, 1]} : vector<8x64xbf16> to vector<8x8xbf16>
    %92 = vector.extract_strided_slice %17 {offsets = [0, 56], sizes = [8, 8], strides = [1, 1]} : vector<8x64xbf16> to vector<8x8xbf16>
    %cst_41 = arith.constant dense<0.000000e+00> : vector<8x8xf32>
    %93 = tpu.matmul %90, %91, %cst_41 {dimension_numbers = #tpu.dot_dimension_numbers<[1], [1], [0], [0], [0, 0, 1, 0], [], []>} : vector<8x8xbf16>, vector<8x8xbf16>, vector<8x8xf32> -> vector<8x8xf32>
    %94 = arith.addf %93, %22 : vector<8x8xf32>
    %cst_42 = arith.constant dense<0xFF800000> : vector<8xf32>
    %95 = vector.multi_reduction <maximumf>, %94, %cst_42 [1] : vector<8x8xf32> to vector<8xf32>
    %96 = vector.shape_cast %95 : vector<8xf32> to vector<8x1xf32>
    %97 = vector.broadcast %96 : vector<8x1xf32> to vector<8x8xf32>
    %98 = arith.subf %94, %97 : vector<8x8xf32>
    %99 = math.exp %98 : vector<8x8xf32>
    %cst_43 = arith.constant dense<0.000000e+00> : vector<8xf32>
    %100 = vector.multi_reduction <add>, %99, %cst_43 [1] : vector<8x8xf32> to vector<8xf32>
    %101 = vector.shape_cast %100 : vector<8xf32> to vector<8x1xf32>
    %102 = arith.truncf %99 : vector<8x8xf32> to vector<8x8xbf16>
    %cst_44 = arith.constant dense<0.000000e+00> : vector<8x8xf32>
    %103 = tpu.matmul %102, %92, %cst_44 {dimension_numbers = #tpu.dot_dimension_numbers<[1], [0], [0], [1], [0, 0, 1, 1], [], []>} : vector<8x8xbf16>, vector<8x8xbf16>, vector<8x8xf32> -> vector<8x8xf32>
    %104 = tpu.reciprocal %101 {approx = true} : vector<8x1xf32> -> vector<8x1xf32>
    %105 = vector.broadcast %104 : vector<8x1xf32> to vector<8x8xf32>
    %106 = arith.mulf %103, %105 : vector<8x8xf32>
    %107 = arith.truncf %106 : vector<8x8xf32> to vector<8x8xbf16>
    %c3 = arith.constant 3 : index
    %c0_45 = arith.constant 0 : index
    %c0_46 = arith.constant 0 : index
    %108 = vector.load %arg9[%c3, %c0_45, %c0_46] : memref<4x8x32xbf16, #tpu.memory_space<vmem>>, vector<1x8x32xbf16>
    %109 = vector.shape_cast %108 : vector<1x8x32xbf16> to vector<8x32xbf16>
    %cst_47 = arith.constant dense<0.000000e+00> : vector<8x32xf32>
    %110 = tpu.matmul %107, %109, %cst_47 {dimension_numbers = #tpu.dot_dimension_numbers<[1], [0], [0], [1], [0, 0, 1, 1], [], []>} : vector<8x8xbf16>, vector<8x32xbf16>, vector<8x32xf32> -> vector<8x32xf32>
    %111 = arith.addf %89, %110 : vector<8x32xf32>
    %c0_48 = arith.constant 0 : index
    %c0_49 = arith.constant 0 : index
    %112 = vector.load %arg10[%c0_48, %c0_49] : memref<1x32xf32, #tpu.memory_space<vmem>>, vector<1x32xf32>
    %113 = vector.broadcast %112 : vector<1x32xf32> to vector<8x32xf32>
    %114 = arith.addf %111, %113 : vector<8x32xf32>
    %115 = arith.addf %1, %114 : vector<8x32xf32>
    %c0_50 = arith.constant 0 : index
    %c0_51 = arith.constant 0 : index
    %116 = vector.load %arg11[%c0_50, %c0_51] : memref<1x32xf32, #tpu.memory_space<vmem>>, vector<1x32xf32>
    %c0_52 = arith.constant 0 : index
    %c0_53 = arith.constant 0 : index
    %117 = vector.load %arg12[%c0_52, %c0_53] : memref<1x32xf32, #tpu.memory_space<vmem>>, vector<1x32xf32>
    %cst_54 = arith.constant dense<0.000000e+00> : vector<8xf32>
    %118 = vector.multi_reduction <add>, %115, %cst_54 [1] : vector<8x32xf32> to vector<8xf32>
    %119 = vector.shape_cast %118 : vector<8xf32> to vector<8x1xf32>
    %cst_55 = arith.constant 3.200000e+01 : f32
    %120 = vector.broadcast %cst_55 : f32 to vector<8x1xf32>
    %121 = arith.divf %119, %120 : vector<8x1xf32>
    %122 = vector.broadcast %121 : vector<8x1xf32> to vector<8x32xf32>
    %123 = arith.subf %115, %122 : vector<8x32xf32>
    %124 = arith.mulf %123, %123 : vector<8x32xf32>
    %cst_56 = arith.constant dense<0.000000e+00> : vector<8xf32>
    %125 = vector.multi_reduction <add>, %124, %cst_56 [1] : vector<8x32xf32> to vector<8xf32>
    %126 = vector.shape_cast %125 : vector<8xf32> to vector<8x1xf32>
    %cst_57 = arith.constant 3.200000e+01 : f32
    %127 = vector.broadcast %cst_57 : f32 to vector<8x1xf32>
    %128 = arith.divf %126, %127 : vector<8x1xf32>
    %129 = vector.broadcast %121 : vector<8x1xf32> to vector<8x32xf32>
    %130 = arith.subf %115, %129 : vector<8x32xf32>
    %cst_58 = arith.constant 9.99999974E-6 : f32
    %131 = vector.broadcast %cst_58 : f32 to vector<8x1xf32>
    %132 = arith.addf %128, %131 : vector<8x1xf32>
    %133 = math.rsqrt %132 : vector<8x1xf32>
    %134 = vector.broadcast %133 : vector<8x1xf32> to vector<8x32xf32>
    %135 = arith.mulf %130, %134 : vector<8x32xf32>
    %136 = vector.broadcast %116 : vector<1x32xf32> to vector<8x32xf32>
    %137 = arith.mulf %135, %136 : vector<8x32xf32>
    %138 = vector.broadcast %117 : vector<1x32xf32> to vector<8x32xf32>
    %139 = arith.addf %137, %138 : vector<8x32xf32>
    %140 = arith.truncf %139 : vector<8x32xf32> to vector<8x32xbf16>
    %cst_59 = arith.constant 0.000000e+00 : f32
    %141 = vector.broadcast %cst_59 : f32 to vector<8x32xf32>
    %c0_60 = arith.constant 0 : index
    %c0_61 = arith.constant 0 : index
    %142 = vector.load %arg13[%c0_60, %c0_61] : memref<32x64xbf16, #tpu.memory_space<vmem>>, vector<32x64xbf16>
    %cst_62 = arith.constant dense<0.000000e+00> : vector<8x64xf32>
    %143 = tpu.matmul %140, %142, %cst_62 {dimension_numbers = #tpu.dot_dimension_numbers<[1], [0], [0], [1], [0, 0, 1, 1], [], []>} : vector<8x32xbf16>, vector<32x64xbf16>, vector<8x64xf32> -> vector<8x64xf32>
    %c0_63 = arith.constant 0 : index
    %c0_64 = arith.constant 0 : index
    %144 = vector.load %arg14[%c0_63, %c0_64] : memref<1x64xf32, #tpu.memory_space<vmem>>, vector<1x64xf32>
    %145 = vector.broadcast %144 : vector<1x64xf32> to vector<8x64xf32>
    %146 = arith.addf %143, %145 : vector<8x64xf32>
    %cst_65 = arith.constant 0.000000e+00 : f32
    %147 = vector.broadcast %cst_65 : f32 to vector<8x64xf32>
    %148 = arith.maximumf %146, %147 : vector<8x64xf32>
    %149 = arith.truncf %148 : vector<8x64xf32> to vector<8x64xbf16>
    %c0_66 = arith.constant 0 : index
    %c0_67 = arith.constant 0 : index
    %150 = vector.load %arg15[%c0_66, %c0_67] : memref<64x32xbf16, #tpu.memory_space<vmem>>, vector<64x32xbf16>
    %cst_68 = arith.constant dense<0.000000e+00> : vector<8x32xf32>
    %151 = tpu.matmul %149, %150, %cst_68 {dimension_numbers = #tpu.dot_dimension_numbers<[1], [0], [0], [1], [0, 0, 1, 1], [], []>} : vector<8x64xbf16>, vector<64x32xbf16>, vector<8x32xf32> -> vector<8x32xf32>
    %152 = arith.addf %141, %151 : vector<8x32xf32>
    %c0_69 = arith.constant 0 : index
    %c0_70 = arith.constant 0 : index
    %153 = vector.load %arg16[%c0_69, %c0_70] : memref<1x32xf32, #tpu.memory_space<vmem>>, vector<1x32xf32>
    %154 = vector.broadcast %153 : vector<1x32xf32> to vector<8x32xf32>
    %155 = arith.addf %152, %154 : vector<8x32xf32>
    %156 = arith.addf %139, %155 : vector<8x32xf32>
    %c0_71 = arith.constant 0 : index
    %c0_72 = arith.constant 0 : index
    %157 = vector.load %arg17[%c0_71, %c0_72] : memref<1x32xf32, #tpu.memory_space<vmem>>, vector<1x32xf32>
    %c0_73 = arith.constant 0 : index
    %c0_74 = arith.constant 0 : index
    %158 = vector.load %arg18[%c0_73, %c0_74] : memref<1x32xf32, #tpu.memory_space<vmem>>, vector<1x32xf32>
    %cst_75 = arith.constant dense<0.000000e+00> : vector<8xf32>
    %159 = vector.multi_reduction <add>, %156, %cst_75 [1] : vector<8x32xf32> to vector<8xf32>
    %160 = vector.shape_cast %159 : vector<8xf32> to vector<8x1xf32>
    %cst_76 = arith.constant 3.200000e+01 : f32
    %161 = vector.broadcast %cst_76 : f32 to vector<8x1xf32>
    %162 = arith.divf %160, %161 : vector<8x1xf32>
    %163 = vector.broadcast %162 : vector<8x1xf32> to vector<8x32xf32>
    %164 = arith.subf %156, %163 : vector<8x32xf32>
    %165 = arith.mulf %164, %164 : vector<8x32xf32>
    %cst_77 = arith.constant dense<0.000000e+00> : vector<8xf32>
    %166 = vector.multi_reduction <add>, %165, %cst_77 [1] : vector<8x32xf32> to vector<8xf32>
    %167 = vector.shape_cast %166 : vector<8xf32> to vector<8x1xf32>
    %cst_78 = arith.constant 3.200000e+01 : f32
    %168 = vector.broadcast %cst_78 : f32 to vector<8x1xf32>
    %169 = arith.divf %167, %168 : vector<8x1xf32>
    %170 = vector.broadcast %162 : vector<8x1xf32> to vector<8x32xf32>
    %171 = arith.subf %156, %170 : vector<8x32xf32>
    %cst_79 = arith.constant 9.99999974E-6 : f32
    %172 = vector.broadcast %cst_79 : f32 to vector<8x1xf32>
    %173 = arith.addf %169, %172 : vector<8x1xf32>
    %174 = math.rsqrt %173 : vector<8x1xf32>
    %175 = vector.broadcast %174 : vector<8x1xf32> to vector<8x32xf32>
    %176 = arith.mulf %171, %175 : vector<8x32xf32>
    %177 = vector.broadcast %157 : vector<1x32xf32> to vector<8x32xf32>
    %178 = arith.mulf %176, %177 : vector<8x32xf32>
    %179 = vector.broadcast %158 : vector<1x32xf32> to vector<8x32xf32>
    %180 = arith.addf %178, %179 : vector<8x32xf32>
    %c0_80 = arith.constant 0 : index
    %c0_81 = arith.constant 0 : index
    %c0_82 = arith.constant 0 : index
    %181 = vector.load %arg19[%c0_80, %c0_81, %c0_82] : memref<1x8x32xf32, #tpu.memory_space<vmem>>, vector<1x8x32xf32>
    %182 = vector.shape_cast %181 : vector<1x8x32xf32> to vector<8x32xf32>
    %183 = vector.shape_cast %180 : vector<8x32xf32> to vector<1x8x32xf32>
    tpu.vector_store %arg19[%c0_80, %c0_81, %c0_82], %183 {strides = array<i32>} : memref<1x8x32xf32, #tpu.memory_space<vmem>>, vector<1x8x32xf32>,
    return
  }
  func.func @transform_0(%arg0: i32, %arg1: i32) -> (i32, i32, i32) {
    %c0_i32 = arith.constant 0 : i32
    %c0_i32_0 = arith.constant 0 : i32
    return %arg0, %arg1, %c0_i32 : i32, i32, i32
  }
  func.func @transform_1(%arg0: i32, %arg1: i32) -> (i32, i32, i32) {
    %c0_i32 = arith.constant 0 : i32
    %c0_i32_0 = arith.constant 0 : i32
    %c0_i32_1 = arith.constant 0 : i32
    return %arg0, %c0_i32, %c0_i32_0 : i32, i32, i32
  }
  func.func @transform_2(%arg0: i32, %arg1: i32) -> (i32, i32, i32) {
    %c0_i32 = arith.constant 0 : i32
    %c0_i32_0 = arith.constant 0 : i32
    return %arg0, %arg1, %c0_i32 : i32, i32, i32
  }
  func.func @transform_3(%arg0: i32, %arg1: i32) -> (i32, i32) {
    %c0_i32 = arith.constant 0 : i32
    %c0_i32_0 = arith.constant 0 : i32
    %c0_i32_1 = arith.constant 0 : i32
    return %c0_i32, %c0_i32_0 : i32, i32
  }
  func.func @transform_4(%arg0: i32, %arg1: i32) -> (i32, i32) {
    %c0_i32 = arith.constant 0 : i32
    %c0_i32_0 = arith.constant 0 : i32
    %c0_i32_1 = arith.constant 0 : i32
    return %c0_i32, %c0_i32_0 : i32, i32
  }
  func.func @transform_5(%arg0: i32, %arg1: i32) -> (i32, i32) {
    %c0_i32 = arith.constant 0 : i32
    %c0_i32_0 = arith.constant 0 : i32
    %c0_i32_1 = arith.constant 0 : i32
    return %c0_i32, %c0_i32_0 : i32, i32
  }
  func.func @transform_6(%arg0: i32, %arg1: i32) -> (i32, i32) {
    %c0_i32 = arith.constant 0 : i32
    %c0_i32_0 = arith.constant 0 : i32
    %c0_i32_1 = arith.constant 0 : i32
    return %c0_i32, %c0_i32_0 : i32, i32
  }
  func.func @transform_7(%arg0: i32, %arg1: i32) -> (i32, i32, i32) {
    %c0_i32 = arith.constant 0 : i32
    %c0_i32_0 = arith.constant 0 : i32
    %c0_i32_1 = arith.constant 0 : i32
    %c0_i32_2 = arith.constant 0 : i32
    return %c0_i32, %c0_i32_0, %c0_i32_1 : i32, i32, i32
  }
  func.func @transform_8(%arg0: i32, %arg1: i32) -> (i32, i32) {
    %c0_i32 = arith.constant 0 : i32
    %c0_i32_0 = arith.constant 0 : i32
    %c0_i32_1 = arith.constant 0 : i32
    return %c0_i32, %c0_i32_0 : i32, i32
  }
  func.func @transform_9(%arg0: i32, %arg1: i32) -> (i32, i32) {
    %c0_i32 = arith.constant 0 : i32
    %c0_i32_0 = arith.constant 0 : i32
    %c0_i32_1 = arith.constant 0 : i32
    return %c0_i32, %c0_i32_0 : i32, i32
  }
  func.func @transform_10(%arg0: i32, %arg1: i32) -> (i32, i32) {
    %c0_i32 = arith.constant 0 : i32
    %c0_i32_0 = arith.constant 0 : i32
    %c0_i32_1 = arith.constant 0 : i32
    return %c0_i32, %c0_i32_0 : i32, i32
  }
  func.func @transform_11(%arg0: i32, %arg1: i32) -> (i32, i32) {
    %c0_i32 = arith.constant 0 : i32
    %c0_i32_0 = arith.constant 0 : i32
    %c0_i32_1 = arith.constant 0 : i32
    return %c0_i32, %c0_i32_0 : i32, i32
  }
  func.func @transform_12(%arg0: i32, %arg1: i32) -> (i32, i32) {
    %c0_i32 = arith.constant 0 : i32
    %c0_i32_0 = arith.constant 0 : i32
    %c0_i32_1 = arith.constant 0 : i32
    return %c0_i32, %c0_i32_0 : i32, i32
  }
  func.func @transform_13(%arg0: i32, %arg1: i32) -> (i32, i32) {
    %c0_i32 = arith.constant 0 : i32
    %c0_i32_0 = arith.constant 0 : i32
    %c0_i32_1 = arith.constant 0 : i32
    return %c0_i32, %c0_i32_0 : i32, i32
  }
  func.func @transform_14(%arg0: i32, %arg1: i32) -> (i32, i32) {
    %c0_i32 = arith.constant 0 : i32
    %c0_i32_0 = arith.constant 0 : i32
    %c0_i32_1 = arith.constant 0 : i32
    return %c0_i32, %c0_i32_0 : i32, i32
  }
  func.func @transform_15(%arg0: i32, %arg1: i32) -> (i32, i32) {
    %c0_i32 = arith.constant 0 : i32
    %c0_i32_0 = arith.constant 0 : i32
    %c0_i32_1 = arith.constant 0 : i32
    return %c0_i32, %c0_i32_0 : i32, i32
  }
  func.func @transform_16(%arg0: i32, %arg1: i32) -> (i32, i32) {
    %c0_i32 = arith.constant 0 : i32
    %c0_i32_0 = arith.constant 0 : i32
    %c0_i32_1 = arith.constant 0 : i32
    return %c0_i32, %c0_i32_0 : i32, i32
  }
  func.func @transform_17(%arg0: i32, %arg1: i32) -> (i32, i32, i32) {
    %c0_i32 = arith.constant 0 : i32
    %c0_i32_0 = arith.constant 0 : i32
    return %arg0, %arg1, %c0_i32 : i32, i32, i32
  }
}

module attributes {stable_mosaic.version = 11 : i64} {
  func.func @encoder_layer_kernel(%arg0: i32, %arg1: i32, %arg2: memref<1x8x32xf32, #tpu.memory_space<vmem>>, %arg3: memref<1x8x32xf32, #tpu.memory_space<vmem>>, %arg4: memref<1x8x8xbf16, #tpu.memory_space<vmem>>, %arg5: memref<32x32xbf16, #tpu.memory_space<vmem>>, %arg6: memref<1x32xf32, #tpu.memory_space<vmem>>, %arg7: memref<32x64xbf16, #tpu.memory_space<vmem>>, %arg8: memref<1x64xf32, #tpu.memory_space<vmem>>, %arg9: memref<4x8x32xbf16, #tpu.memory_space<vmem>>, %arg10: memref<1x32xf32, #tpu.memory_space<vmem>>, %arg11: memref<1x32xf32, #tpu.memory_space<vmem>>, %arg12: memref<1x32xf32, #tpu.memory_space<vmem>>, %arg13: memref<32x64xbf16, #tpu.memory_space<vmem>>, %arg14: memref<1x64xf32, #tpu.memory_space<vmem>>, %arg15: memref<64x32xbf16, #tpu.memory_space<vmem>>, %arg16: memref<1x32xf32, #tpu.memory_space<vmem>>, %arg17: memref<1x32xf32, #tpu.memory_space<vmem>>, %arg18: memref<1x32xf32, #tpu.memory_space<vmem>>, %arg19: memref<1x8x32xf32, #tpu.memory_space<vmem>>) attributes {dimension_semantics = [#tpu.dimension_semantics<parallel>, #tpu.dimension_semantics<parallel>], iteration_bounds = array<i64: 2, 1>, scalar_prefetch = 0 : i64, scratch_operands = 0 : i64, tpu.core_type = #tpu.core_type<tc>, window_params = [{transform_indices = @transform_0, window_bounds = array<i64: 1, 8, 32>}, {transform_indices = @transform_1, window_bounds = array<i64: 1, 8, 32>}, {transform_indices = @transform_2, window_bounds = array<i64: 1, 8, 8>}, {pipeline_mode = #tpu.pipeline_mode<synchronous>, transform_indices = @transform_3, window_bounds = array<i64: 32, 32>}, {pipeline_mode = #tpu.pipeline_mode<synchronous>, transform_indices = @transform_4, window_bounds = array<i64: 1, 32>}, {pipeline_mode = #tpu.pipeline_mode<synchronous>, transform_indices = @transform_5, window_bounds = array<i64: 32, 64>}, {pipeline_mode = #tpu.pipeline_mode<synchronous>, transform_indices = @transform_6, window_bounds = array<i64: 1, 64>}, {pipeline_mode = #tpu.pipeline_mode<synchronous>, transform_indices = @transform_7, window_bounds = array<i64: 4, 8, 32>}, {pipeline_mode = #tpu.pipeline_mode<synchronous>, transform_indices = @transform_8, window_bounds = array<i64: 1, 32>}, {pipeline_mode = #tpu.pipeline_mode<synchronous>, transform_indices = @transform_9, window_bounds = array<i64: 1, 32>}, {pipeline_mode = #tpu.pipeline_mode<synchronous>, transform_indices = @transform_10, window_bounds = array<i64: 1, 32>}, {pipeline_mode = #tpu.pipeline_mode<synchronous>, transform_indices = @transform_11, window_bounds = array<i64: 32, 64>}, {pipeline_mode = #tpu.pipeline_mode<synchronous>, transform_indices = @transform_12, window_bounds = array<i64: 1, 64>}, {pipeline_mode = #tpu.pipeline_mode<synchronous>, transform_indices = @transform_13, window_bounds = array<i64: 64, 32>}, {pipeline_mode = #tpu.pipeline_mode<synchronous>, transform_indices = @transform_14, window_bounds = array<i64: 1, 32>}, {pipeline_mode = #tpu.pipeline_mode<synchronous>, transform_indices = @transform_15, window_bounds = array<i64: 1, 32>}, {pipeline_mode = #tpu.pipeline_mode<synchronous>, transform_indices = @transform_16, window_bounds = array<i64: 1, 32>}, {transform_indices = @transform_17, window_bounds = array<i64: 1, 8, 32>}]} {
    %c0 = arith.constant 0 : index
    %c0_0 = arith.constant 0 : index
    %c0_1 = arith.constant 0 : index
    %0 = vector.load %arg2[%c0, %c0_0, %c0_1] : memref<1x8x32xf32, #tpu.memory_space<vmem>>, vector<1x8x32xf32>
    %1 = vector.shape_cast %0 : vector<1x8x32xf32> to vector<8x32xf32>
    %2 = arith.truncf %1 : vector<8x32xf32> to vector<8x32xbf16>
    %c0_2 = arith.constant 0 : index
    %c0_3 = arith.constant 0 : index
    %3 = vector.load %arg5[%c0_2, %c0_3] : memref<32x32xbf16, #tpu.memory_space<vmem>>, vector<32x32xbf16>
    %cst = arith.constant dense<0.000000e+00> : vector<8x32xf32>
    %4 = tpu.matmul %2, %3, %cst {dimension_numbers = #tpu.dot_dimension_numbers<[1], [0], [0], [1], [0, 0, 1, 1], [], []>} : vector<8x32xbf16>, vector<32x32xbf16>, vector<8x32xf32> -> vector<8x32xf32>
    %c0_4 = arith.constant 0 : index
    %c0_5 = arith.constant 0 : index
    %5 = vector.load %arg6[%c0_4, %c0_5] : memref<1x32xf32, #tpu.memory_space<vmem>>, vector<1x32xf32>
    %6 = vector.broadcast %5 : vector<1x32xf32> to vector<8x32xf32>
    %7 = arith.addf %4, %6 : vector<8x32xf32>
    %8 = arith.truncf %7 : vector<8x32xf32> to vector<8x32xbf16>
    %c0_6 = arith.constant 0 : index
    %c0_7 = arith.constant 0 : index
    %c0_8 = arith.constant 0 : index
    %9 = vector.load %arg3[%c0_6, %c0_7, %c0_8] : memref<1x8x32xf32, #tpu.memory_space<vmem>>, vector<1x8x32xf32>
    %10 = vector.shape_cast %9 : vector<1x8x32xf32> to vector<8x32xf32>
    %11 = arith.truncf %10 : vector<8x32xf32> to vector<8x32xbf16>
    %c0_9 = arith.constant 0 : index
    %c0_10 = arith.constant 0 : index
    %12 = vector.load %arg7[%c0_9, %c0_10] : memref<32x64xbf16, #tpu.memory_space<vmem>>, vector<32x64xbf16>
    %cst_11 = arith.constant dense<0.000000e+00> : vector<8x64xf32>
    %13 = tpu.matmul %11, %12, %cst_11 {dimension_numbers = #tpu.dot_dimension_numbers<[1], [0], [0], [1], [0, 0, 1, 1], [], []>} : vector<8x32xbf16>, vector<32x64xbf16>, vector<8x64xf32> -> vector<8x64xf32>
    %c0_12 = arith.constant 0 : index
    %c0_13 = arith.constant 0 : index
    %14 = vector.load %arg8[%c0_12, %c0_13] : memref<1x64xf32, #tpu.memory_space<vmem>>, vector<1x64xf32>
    %15 = vector.broadcast %14 : vector<1x64xf32> to vector<8x64xf32>
    %16 = arith.addf %13, %15 : vector<8x64xf32>
    %17 = arith.truncf %16 : vector<8x64xf32> to vector<8x64xbf16>
    %c0_14 = arith.constant 0 : index
    %c0_15 = arith.constant 0 : index
    %c0_16 = arith.constant 0 : index
    %18 = vector.load %arg4[%c0_14, %c0_15, %c0_16] : memref<1x8x8xbf16, #tpu.memory_space<vmem>>, vector<1x8x8xbf16>
    %19 = vector.shape_cast %18 : vector<1x8x8xbf16> to vector<8x8xbf16>
    %20 = arith.extf %19 : vector<8x8xbf16> to vector<8x8xf32>
    %cst_17 = arith.constant -1.000000e+09 : f32
    %21 = vector.broadcast %cst_17 : f32 to vector<8x8xf32>
    %22 = arith.mulf %20, %21 : vector<8x8xf32>
    %cst_18 = arith.constant 0.000000e+00 : f32
    %23 = vector.broadcast %cst_18 : f32 to vector<8x32xf32>
    %24 = vector.extract_strided_slice %8 {offsets = [0, 0], sizes = [8, 8], strides = [1, 1]} : vector<8x32xbf16> to vector<8x8xbf16>
    %25 = vector.extract_strided_slice %17 {offsets = [0, 0], sizes = [8, 8], strides = [1, 1]} : vector<8x64xbf16> to vector<8x8xbf16>
    %26 = vector.extract_strided_slice %17 {offsets = [0, 32], sizes = [8, 8], strides = [1, 1]} : vector<8x64xbf16> to vector<8x8xbf16>
    %cst_19 = arith.constant dense<0.000000e+00> : vector<8x8xf32>
    %27 = tpu.matmul %24, %25, %cst_19 {dimension_numbers = #tpu.dot_dimension_numbers<[1], [1], [0], [0], [0, 0, 1, 0], [], []>} : vector<8x8xbf16>, vector<8x8xbf16>, vector<8x8xf32> -> vector<8x8xf32>
    %28 = arith.addf %27, %22 : vector<8x8xf32>
    %cst_20 = arith.constant dense<0xFF800000> : vector<8xf32>
    %29 = vector.multi_reduction <maximumf>, %28, %cst_20 [1] : vector<8x8xf32> to vector<8xf32>
    %30 = vector.shape_cast %29 : vector<8xf32> to vector<8x1xf32>
    %31 = vector.broadcast %30 : vector<8x1xf32> to vector<8x8xf32>
    %32 = arith.subf %28, %31 : vector<8x8xf32>
    %33 = math.exp %32 : vector<8x8xf32>
    %cst_21 = arith.constant dense<0.000000e+00> : vector<8xf32>
    %34 = vector.multi_reduction <add>, %33, %cst_21 [1] : vector<8x8xf32> to vector<8xf32>
    %35 = vector.shape_cast %34 : vector<8xf32> to vector<8x1xf32>
    %36 = arith.truncf %33 : vector<8x8xf32> to vector<8x8xbf16>
    %cst_22 = arith.constant dense<0.000000e+00> : vector<8x8xf32>
    %37 = tpu.matmul %36, %26, %cst_22 {dimension_numbers = #tpu.dot_dimension_numbers<[1], [0], [0], [1], [0, 0, 1, 1], [], []>} : vector<8x8xbf16>, vector<8x8xbf16>, vector<8x8xf32> -> vector<8x8xf32>
    %38 = tpu.reciprocal %35 {approx = true} : vector<8x1xf32> -> vector<8x1xf32>
    %39 = vector.broadcast %38 : vector<8x1xf32> to vector<8x8xf32>
    %40 = arith.mulf %37, %39 : vector<8x8xf32>
    %41 = arith.truncf %40 : vector<8x8xf32> to vector<8x8xbf16>
    %c0_23 = arith.constant 0 : index
    %c0_24 = arith.constant 0 : index
    %c0_25 = arith.constant 0 : index
    %42 = vector.load %arg9[%c0_23, %c0_24, %c0_25] : memref<4x8x32xbf16, #tpu.memory_space<vmem>>, vector<1x8x32xbf16>
    %43 = vector.shape_cast %42 : vector<1x8x32xbf16> to vector<8x32xbf16>
    %cst_26 = arith.constant dense<0.000000e+00> : vector<8x32xf32>
    %44 = tpu.matmul %41, %43, %cst_26 {dimension_numbers = #tpu.dot_dimension_numbers<[1], [0], [0], [1], [0, 0, 1, 1], [], []>} : vector<8x8xbf16>, vector<8x32xbf16>, vector<8x32xf32> -> vector<8x32xf32>
    %45 = arith.addf %23, %44 : vector<8x32xf32>
    %46 = vector.extract_strided_slice %8 {offsets = [0, 8], sizes = [8, 8], strides = [1, 1]} : vector<8x32xbf16> to vector<8x8xbf16>
    %47 = vector.extract_strided_slice %17 {offsets = [0, 8], sizes = [8, 8], strides = [1, 1]} : vector<8x64xbf16> to vector<8x8xbf16>
    %48 = vector.extract_strided_slice %17 {offsets = [0, 40], sizes = [8, 8], strides = [1, 1]} : vector<8x64xbf16> to vector<8x8xbf16>
    %cst_27 = arith.constant dense<0.000000e+00> : vector<8x8xf32>
    %49 = tpu.matmul %46, %47, %cst_27 {dimension_numbers = #tpu.dot_dimension_numbers<[1], [1], [0], [0], [0, 0, 1, 0], [], []>} : vector<8x8xbf16>, vector<8x8xbf16>, vector<8x8xf32> -> vector<8x8xf32>
    %50 = arith.addf %49, %22 : vector<8x8xf32>
    %cst_28 = arith.constant dense<0xFF800000> : vector<8xf32>
    %51 = vector.multi_reduction <maximumf>, %50, %cst_28 [1] : vector<8x8xf32> to vector<8xf32>
    %52 = vector.shape_cast %51 : vector<8xf32> to vector<8x1xf32>
    %53 = vector.broadcast %52 : vector<8x1xf32> to vector<8x8xf32>
    %54 = arith.subf %50, %53 : vector<8x8xf32>
    %55 = math.exp %54 : vector<8x8xf32>
    %cst_29 = arith.constant dense<0.000000e+00> : vector<8xf32>
    %56 = vector.multi_reduction <add>, %55, %cst_29 [1] : vector<8x8xf32> to vector<8xf32>
    %57 = vector.shape_cast %56 : vector<8xf32> to vector<8x1xf32>
    %58 = arith.truncf %55 : vector<8x8xf32> to vector<8x8xbf16>
    %cst_30 = arith.constant dense<0.000000e+00> : vector<8x8xf32>
    %59 = tpu.matmul %58, %48, %cst_30 {dimension_numbers = #tpu.dot_dimension_numbers<[1], [0], [0], [1], [0, 0, 1, 1], [], []>} : vector<8x8xbf16>, vector<8x8xbf16>, vector<8x8xf32> -> vector<8x8xf32>
    %60 = tpu.reciprocal %57 {approx = true} : vector<8x1xf32> -> vector<8x1xf32>
    %61 = vector.broadcast %60 : vector<8x1xf32> to vector<8x8xf32>
    %62 = arith.mulf %59, %61 : vector<8x8xf32>
    %63 = arith.truncf %62 : vector<8x8xf32> to vector<8x8xbf16>
    %c1 = arith.constant 1 : index
    %c0_31 = arith.constant 0 : index
    %c0_32 = arith.constant 0 : index
    %64 = vector.load %arg9[%c1, %c0_31, %c0_32] : memref<4x8x32xbf16, #tpu.memory_space<vmem>>, vector<1x8x32xbf16>
    %65 = vector.shape_cast %64 : vector<1x8x32xbf16> to vector<8x32xbf16>
    %cst_33 = arith.constant dense<0.000000e+00> : vector<8x32xf32>
    %66 = tpu.matmul %63, %65, %cst_33 {dimension_numbers = #tpu.dot_dimension_numbers<[1], [0], [0], [1], [0, 0, 1, 1], [], []>} : vector<8x8xbf16>, vector<8x32xbf16>, vector<8x32xf32> -> vector<8x32xf32>
    %67 = arith.addf %45, %66 : vector<8x32xf32>
    %68 = vector.extract_strided_slice %8 {offsets = [0, 16], sizes = [8, 8], strides = [1, 1]} : vector<8x32xbf16> to vector<8x8xbf16>
    %69 = vector.extract_strided_slice %17 {offsets = [0, 16], sizes = [8, 8], strides = [1, 1]} : vector<8x64xbf16> to vector<8x8xbf16>
    %70 = vector.extract_strided_slice %17 {offsets = [0, 48], sizes = [8, 8], strides = [1, 1]} : vector<8x64xbf16> to vector<8x8xbf16>
    %cst_34 = arith.constant dense<0.000000e+00> : vector<8x8xf32>
    %71 = tpu.matmul %68, %69, %cst_34 {dimension_numbers = #tpu.dot_dimension_numbers<[1], [1], [0], [0], [0, 0, 1, 0], [], []>} : vector<8x8xbf16>, vector<8x8xbf16>, vector<8x8xf32> -> vector<8x8xf32>
    %72 = arith.addf %71, %22 : vector<8x8xf32>
    %cst_35 = arith.constant dense<0xFF800000> : vector<8xf32>
    %73 = vector.multi_reduction <maximumf>, %72, %cst_35 [1] : vector<8x8xf32> to vector<8xf32>
    %74 = vector.shape_cast %73 : vector<8xf32> to vector<8x1xf32>
    %75 = vector.broadcast %74 : vector<8x1xf32> to vector<8x8xf32>
    %76 = arith.subf %72, %75 : vector<8x8xf32>
    %77 = math.exp %76 : vector<8x8xf32>
    %cst_36 = arith.constant dense<0.000000e+00> : vector<8xf32>
    %78 = vector.multi_reduction <add>, %77, %cst_36 [1] : vector<8x8xf32> to vector<8xf32>
    %79 = vector.shape_cast %78 : vector<8xf32> to vector<8x1xf32>
    %80 = arith.truncf %77 : vector<8x8xf32> to vector<8x8xbf16>
    %cst_37 = arith.constant dense<0.000000e+00> : vector<8x8xf32>
    %81 = tpu.matmul %80, %70, %cst_37 {dimension_numbers = #tpu.dot_dimension_numbers<[1], [0], [0], [1], [0, 0, 1, 1], [], []>} : vector<8x8xbf16>, vector<8x8xbf16>, vector<8x8xf32> -> vector<8x8xf32>
    %82 = tpu.reciprocal %79 {approx = true} : vector<8x1xf32> -> vector<8x1xf32>
    %83 = vector.broadcast %82 : vector<8x1xf32> to vector<8x8xf32>
    %84 = arith.mulf %81, %83 : vector<8x8xf32>
    %85 = arith.truncf %84 : vector<8x8xf32> to vector<8x8xbf16>
    %c2 = arith.constant 2 : index
    %c0_38 = arith.constant 0 : index
    %c0_39 = arith.constant 0 : index
    %86 = vector.load %arg9[%c2, %c0_38, %c0_39] : memref<4x8x32xbf16, #tpu.memory_space<vmem>>, vector<1x8x32xbf16>
    %87 = vector.shape_cast %86 : vector<1x8x32xbf16> to vector<8x32xbf16>
    %cst_40 = arith.constant dense<0.000000e+00> : vector<8x32xf32>
    %88 = tpu.matmul %85, %87, %cst_40 {dimension_numbers = #tpu.dot_dimension_numbers<[1], [0], [0], [1], [0, 0, 1, 1], [], []>} : vector<8x8xbf16>, vector<8x32xbf16>, vector<8x32xf32> -> vector<8x32xf32>
    %89 = arith.addf %67, %88 : vector<8x32xf32>
    %90 = vector.extract_strided_slice %8 {offsets = [0, 24], sizes = [8, 8], strides = [1, 1]} : vector<8x32xbf16> to vector<8x8xbf16>
    %91 = vector.extract_strided_slice %17 {offsets = [0, 24], sizes = [8, 8], strides = [1, 1]} : vector<8x64xbf16> to vector<8x8xbf16>
    %92 = vector.extract_strided_slice %17 {offsets = [0, 56], sizes = [8, 8], strides = [1, 1]} : vector<8x64xbf16> to vector<8x8xbf16>
    %cst_41 = arith.constant dense<0.000000e+00> : vector<8x8xf32>
    %93 = tpu.matmul %90, %91, %cst_41 {dimension_numbers = #tpu.dot_dimension_numbers<[1], [1], [0], [0], [0, 0, 1, 0], [], []>} : vector<8x8xbf16>, vector<8x8xbf16>, vector<8x8xf32> -> vector<8x8xf32>
    %94 = arith.addf %93, %22 : vector<8x8xf32>
    %cst_42 = arith.constant dense<0xFF800000> : vector<8xf32>
    %95 = vector.multi_reduction <maximumf>, %94, %cst_42 [1] : vector<8x8xf32> to vector<8xf32>
    %96 = vector.shape_cast %95 : vector<8xf32> to vector<8x1xf32>
    %97 = vector.broadcast %96 : vector<8x1xf32> to vector<8x8xf32>
    %98 = arith.subf %94, %97 : vector<8x8xf32>
    %99 = math.exp %98 : vector<8x8xf32>
    %cst_43 = arith.constant dense<0.000000e+00> : vector<8xf32>
    %100 = vector.multi_reduction <add>, %99, %cst_43 [1] : vector<8x8xf32> to vector<8xf32>
    %101 = vector.shape_cast %100 : vector<8xf32> to vector<8x1xf32>
    %102 = arith.truncf %99 : vector<8x8xf32> to vector<8x8xbf16>
    %cst_44 = arith.constant dense<0.000000e+00> : vector<8x8xf32>
    %103 = tpu.matmul %102, %92, %cst_44 {dimension_numbers = #tpu.dot_dimension_numbers<[1], [0], [0], [1], [0, 0, 1, 1], [], []>} : vector<8x8xbf16>, vector<8x8xbf16>, vector<8x8xf32> -> vector<8x8xf32>
    %104 = tpu.reciprocal %101 {approx = true} : vector<8x1xf32> -> vector<8x1xf32>
    %105 = vector.broadcast %104 : vector<8x1xf32> to vector<8x8xf32>
    %106 = arith.mulf %103, %105 : vector<8x8xf32>
    %107 = arith.truncf %106 : vector<8x8xf32> to vector<8x8xbf16>
    %c3 = arith.constant 3 : index
    %c0_45 = arith.constant 0 : index
    %c0_46 = arith.constant 0 : index
    %108 = vector.load %arg9[%c3, %c0_45, %c0_46] : memref<4x8x32xbf16, #tpu.memory_space<vmem>>, vector<1x8x32xbf16>
    %109 = vector.shape_cast %108 : vector<1x8x32xbf16> to vector<8x32xbf16>
    %cst_47 = arith.constant dense<0.000000e+00> : vector<8x32xf32>
    %110 = tpu.matmul %107, %109, %cst_47 {dimension_numbers = #tpu.dot_dimension_numbers<[1], [0], [0], [1], [0, 0, 1, 1], [], []>} : vector<8x8xbf16>, vector<8x32xbf16>, vector<8x32xf32> -> vector<8x32xf32>
    %111 = arith.addf %89, %110 : vector<8x32xf32>
    %c0_48 = arith.constant 0 : index
    %c0_49 = arith.constant 0 : index
    %112 = vector.load %arg10[%c0_48, %c0_49] : memref<1x32xf32, #tpu.memory_space<vmem>>, vector<1x32xf32>
    %113 = vector.broadcast %112 : vector<1x32xf32> to vector<8x32xf32>
    %114 = arith.addf %111, %113 : vector<8x32xf32>
    %115 = arith.addf %1, %114 : vector<8x32xf32>
    %c0_50 = arith.constant 0 : index
    %c0_51 = arith.constant 0 : index
    %116 = vector.load %arg11[%c0_50, %c0_51] : memref<1x32xf32, #tpu.memory_space<vmem>>, vector<1x32xf32>
    %c0_52 = arith.constant 0 : index
    %c0_53 = arith.constant 0 : index
    %117 = vector.load %arg12[%c0_52, %c0_53] : memref<1x32xf32, #tpu.memory_space<vmem>>, vector<1x32xf32>
    %cst_54 = arith.constant dense<0.000000e+00> : vector<8xf32>
    %118 = vector.multi_reduction <add>, %115, %cst_54 [1] : vector<8x32xf32> to vector<8xf32>
    %119 = vector.shape_cast %118 : vector<8xf32> to vector<8x1xf32>
    %cst_55 = arith.constant 3.200000e+01 : f32
    %120 = vector.broadcast %cst_55 : f32 to vector<8x1xf32>
    %121 = arith.divf %119, %120 : vector<8x1xf32>
    %122 = vector.broadcast %121 : vector<8x1xf32> to vector<8x32xf32>
    %123 = arith.subf %115, %122 : vector<8x32xf32>
    %124 = arith.mulf %123, %123 : vector<8x32xf32>
    %cst_56 = arith.constant dense<0.000000e+00> : vector<8xf32>
    %125 = vector.multi_reduction <add>, %124, %cst_56 [1] : vector<8x32xf32> to vector<8xf32>
    %126 = vector.shape_cast %125 : vector<8xf32> to vector<8x1xf32>
    %cst_57 = arith.constant 3.200000e+01 : f32
    %127 = vector.broadcast %cst_57 : f32 to vector<8x1xf32>
    %128 = arith.divf %126, %127 : vector<8x1xf32>
    %129 = vector.broadcast %121 : vector<8x1xf32> to vector<8x32xf32>
    %130 = arith.subf %115, %129 : vector<8x32xf32>
    %cst_58 = arith.constant 9.99999974E-6 : f32
    %131 = vector.broadcast %cst_58 : f32 to vector<8x1xf32>
    %132 = arith.addf %128, %131 : vector<8x1xf32>
    %133 = math.rsqrt %132 : vector<8x1xf32>
    %134 = vector.broadcast %133 : vector<8x1xf32> to vector<8x32xf32>
    %135 = arith.mulf %130, %134 : vector<8x32xf32>
    %136 = vector.broadcast %116 : vector<1x32xf32> to vector<8x32xf32>
    %137 = arith.mulf %135, %136 : vector<8x32xf32>
    %138 = vector.broadcast %117 : vector<1x32xf32> to vector<8x32xf32>
    %139 = arith.addf %137, %138 : vector<8x32xf32>
    %140 = arith.truncf %139 : vector<8x32xf32> to vector<8x32xbf16>
    %cst_59 = arith.constant 0.000000e+00 : f32
    %141 = vector.broadcast %cst_59 : f32 to vector<8x32xf32>
    %c0_60 = arith.constant 0 : index
    %c0_61 = arith.constant 0 : index
    %142 = vector.load %arg13[%c0_60, %c0_61] : memref<32x64xbf16, #tpu.memory_space<vmem>>, vector<32x64xbf16>
    %cst_62 = arith.constant dense<0.000000e+00> : vector<8x64xf32>
    %143 = tpu.matmul %140, %142, %cst_62 {dimension_numbers = #tpu.dot_dimension_numbers<[1], [0], [0], [1], [0, 0, 1, 1], [], []>} : vector<8x32xbf16>, vector<32x64xbf16>, vector<8x64xf32> -> vector<8x64xf32>
    %c0_63 = arith.constant 0 : index
    %c0_64 = arith.constant 0 : index
    %144 = vector.load %arg14[%c0_63, %c0_64] : memref<1x64xf32, #tpu.memory_space<vmem>>, vector<1x64xf32>
    %145 = vector.broadcast %144 : vector<1x64xf32> to vector<8x64xf32>
    %146 = arith.addf %143, %145 : vector<8x64xf32>
    %cst_65 = arith.constant 0.000000e+00 : f32
    %147 = vector.broadcast %cst_65 : f32 to vector<8x64xf32>
    %148 = arith.maximumf %146, %147 : vector<8x64xf32>
    %149 = arith.truncf %148 : vector<8x64xf32> to vector<8x64xbf16>
    %c0_66 = arith.constant 0 : index
    %c0_67 = arith.constant 0 : index
    %150 = vector.load %arg15[%c0_66, %c0_67] : memref<64x32xbf16, #tpu.memory_space<vmem>>, vector<64x32xbf16>
    %cst_68 = arith.constant dense<0.000000e+00> : vector<8x32xf32>
    %151 = tpu.matmul %149, %150, %cst_68 {dimension_numbers = #tpu.dot_dimension_numbers<[1], [0], [0], [1], [0, 0, 1, 1], [], []>} : vector<8x64xbf16>, vector<64x32xbf16>, vector<8x32xf32> -> vector<8x32xf32>
    %152 = arith.addf %141, %151 : vector<8x32xf32>
    %c0_69 = arith.constant 0 : index
    %c0_70 = arith.constant 0 : index
    %153 = vector.load %arg16[%c0_69, %c0_70] : memref<1x32xf32, #tpu.memory_space<vmem>>, vector<1x32xf32>
    %154 = vector.broadcast %153 : vector<1x32xf32> to vector<8x32xf32>
    %155 = arith.addf %152, %154 : vector<8x32xf32>
    %156 = arith.addf %139, %155 : vector<8x32xf32>
    %c0_71 = arith.constant 0 : index
    %c0_72 = arith.constant 0 : index
    %157 = vector.load %arg17[%c0_71, %c0_72] : memref<1x32xf32, #tpu.memory_space<vmem>>, vector<1x32xf32>
    %c0_73 = arith.constant 0 : index
    %c0_74 = arith.constant 0 : index
    %158 = vector.load %arg18[%c0_73, %c0_74] : memref<1x32xf32, #tpu.memory_space<vmem>>, vector<1x32xf32>
    %cst_75 = arith.constant dense<0.000000e+00> : vector<8xf32>
    %159 = vector.multi_reduction <add>, %156, %cst_75 [1] : vector<8x32xf32> to vector<8xf32>
    %160 = vector.shape_cast %159 : vector<8xf32> to vector<8x1xf32>
    %cst_76 = arith.constant 3.200000e+01 : f32
    %161 = vector.broadcast %cst_76 : f32 to vector<8x1xf32>
    %162 = arith.divf %160, %161 : vector<8x1xf32>
    %163 = vector.broadcast %162 : vector<8x1xf32> to vector<8x32xf32>
    %164 = arith.subf %156, %163 : vector<8x32xf32>
    %165 = arith.mulf %164, %164 : vector<8x32xf32>
    %cst_77 = arith.constant dense<0.000000e+00> : vector<8xf32>
    %166 = vector.multi_reduction <add>, %165, %cst_77 [1] : vector<8x32xf32> to vector<8xf32>
    %167 = vector.shape_cast %166 : vector<8xf32> to vector<8x1xf32>
    %cst_78 = arith.constant 3.200000e+01 : f32
    %168 = vector.broadcast %cst_78 : f32 to vector<8x1xf32>
    %169 = arith.divf %167, %168 : vector<8x1xf32>
    %170 = vector.broadcast %162 : vector<8x1xf32> to vector<8x32xf32>
    %171 = arith.subf %156, %170 : vector<8x32xf32>
    %cst_79 = arith.constant 9.99999974E-6 : f32
    %172 = vector.broadcast %cst_79 : f32 to vector<8x1xf32>
    %173 = arith.addf %169, %172 : vector<8x1xf32>
    %174 = math.rsqrt %173 : vector<8x1xf32>
    %175 = vector.broadcast %174 : vector<8x1xf32> to vector<8x32xf32>
    %176 = arith.mulf %171, %175 : vector<8x32xf32>
    %177 = vector.broadcast %157 : vector<1x32xf32> to vector<8x32xf32>
    %178 = arith.mulf %176, %177 : vector<8x32xf32>
    %179 = vector.broadcast %158 : vector<1x32xf32> to vector<8x32xf32>
    %180 = arith.addf %178, %179 : vector<8x32xf32>
    %c0_80 = arith.constant 0 : index
    %c0_81 = arith.constant 0 : index
    %c0_82 = arith.constant 0 : index
    %181 = vector.load %arg19[%c0_80, %c0_81, %c0_82] : memref<1x8x32xf32, #tpu.memory_space<vmem>>, vector<1x8x32xf32>
    %182 = vector.shape_cast %181 : vector<1x8x32xf32> to vector<8x32xf32>
    %183 = vector.shape_cast %180 : vector<8x32xf32> to vector<1x8x32xf32>
    tpu.vector_store %arg19[%c0_80, %c0_81, %c0_82], %183 {strides = array<i32>} : memref<1x8x32xf32, #tpu.memory_space<vmem>>, vector<1x8x32xf32>,
    return
  }
  func.func @transform_0(%arg0: i32, %arg1: i32) -> (i32, i32, i32) {
    %c0_i32 = arith.constant 0 : i32
    %c0_i32_0 = arith.constant 0 : i32
    return %arg0, %arg1, %c0_i32 : i32, i32, i32
  }
  func.func @transform_1(%arg0: i32, %arg1: i32) -> (i32, i32, i32) {
    %c0_i32 = arith.constant 0 : i32
    %c0_i32_0 = arith.constant 0 : i32
    %c0_i32_1 = arith.constant 0 : i32
    return %arg0, %c0_i32, %c0_i32_0 : i32, i32, i32
  }
  func.func @transform_2(%arg0: i32, %arg1: i32) -> (i32, i32, i32) {
    %c0_i32 = arith.constant 0 : i32
    %c0_i32_0 = arith.constant 0 : i32
    return %arg0, %arg1, %c0_i32 : i32, i32, i32
  }
  func.func @transform_3(%arg0: i32, %arg1: i32) -> (i32, i32) {
    %c0_i32 = arith.constant 0 : i32
    %c0_i32_0 = arith.constant 0 : i32
    %c0_i32_1 = arith.constant 0 : i32
    return %c0_i32, %c0_i32_0 : i32, i32
  }
  func.func @transform_4(%arg0: i32, %arg1: i32) -> (i32, i32) {
    %c0_i32 = arith.constant 0 : i32
    %c0_i32_0 = arith.constant 0 : i32
    %c0_i32_1 = arith.constant 0 : i32
    return %c0_i32, %c0_i32_0 : i32, i32
  }
  func.func @transform_5(%arg0: i32, %arg1: i32) -> (i32, i32) {
    %c0_i32 = arith.constant 0 : i32
    %c0_i32_0 = arith.constant 0 : i32
    %c0_i32_1 = arith.constant 0 : i32
    return %c0_i32, %c0_i32_0 : i32, i32
  }
  func.func @transform_6(%arg0: i32, %arg1: i32) -> (i32, i32) {
    %c0_i32 = arith.constant 0 : i32
    %c0_i32_0 = arith.constant 0 : i32
    %c0_i32_1 = arith.constant 0 : i32
    return %c0_i32, %c0_i32_0 : i32, i32
  }
  func.func @transform_7(%arg0: i32, %arg1: i32) -> (i32, i32, i32) {
    %c0_i32 = arith.constant 0 : i32
    %c0_i32_0 = arith.constant 0 : i32
    %c0_i32_1 = arith.constant 0 : i32
    %c0_i32_2 = arith.constant 0 : i32
    return %c0_i32, %c0_i32_0, %c0_i32_1 : i32, i32, i32
  }
  func.func @transform_8(%arg0: i32, %arg1: i32) -> (i32, i32) {
    %c0_i32 = arith.constant 0 : i32
    %c0_i32_0 = arith.constant 0 : i32
    %c0_i32_1 = arith.constant 0 : i32
    return %c0_i32, %c0_i32_0 : i32, i32
  }
  func.func @transform_9(%arg0: i32, %arg1: i32) -> (i32, i32) {
    %c0_i32 = arith.constant 0 : i32
    %c0_i32_0 = arith.constant 0 : i32
    %c0_i32_1 = arith.constant 0 : i32
    return %c0_i32, %c0_i32_0 : i32, i32
  }
  func.func @transform_10(%arg0: i32, %arg1: i32) -> (i32, i32) {
    %c0_i32 = arith.constant 0 : i32
    %c0_i32_0 = arith.constant 0 : i32
    %c0_i32_1 = arith.constant 0 : i32
    return %c0_i32, %c0_i32_0 : i32, i32
  }
  func.func @transform_11(%arg0: i32, %arg1: i32) -> (i32, i32) {
    %c0_i32 = arith.constant 0 : i32
    %c0_i32_0 = arith.constant 0 : i32
    %c0_i32_1 = arith.constant 0 : i32
    return %c0_i32, %c0_i32_0 : i32, i32
  }
  func.func @transform_12(%arg0: i32, %arg1: i32) -> (i32, i32) {
    %c0_i32 = arith.constant 0 : i32
    %c0_i32_0 = arith.constant 0 : i32
    %c0_i32_1 = arith.constant 0 : i32
    return %c0_i32, %c0_i32_0 : i32, i32
  }
  func.func @transform_13(%arg0: i32, %arg1: i32) -> (i32, i32) {
    %c0_i32 = arith.constant 0 : i32
    %c0_i32_0 = arith.constant 0 : i32
    %c0_i32_1 = arith.constant 0 : i32
    return %c0_i32, %c0_i32_0 : i32, i32
  }
  func.func @transform_14(%arg0: i32, %arg1: i32) -> (i32, i32) {
    %c0_i32 = arith.constant 0 : i32
    %c0_i32_0 = arith.constant 0 : i32
    %c0_i32_1 = arith.constant 0 : i32
    return %c0_i32, %c0_i32_0 : i32, i32
  }
  func.func @transform_15(%arg0: i32, %arg1: i32) -> (i32, i32) {
    %c0_i32 = arith.constant 0 : i32
    %c0_i32_0 = arith.constant 0 : i32
    %c0_i32_1 = arith.constant 0 : i32
    return %c0_i32, %c0_i32_0 : i32, i32
  }
  func.func @transform_16(%arg0: i32, %arg1: i32) -> (i32, i32) {
    %c0_i32 = arith.constant 0 : i32
    %c0_i32_0 = arith.constant 0 : i32
    %c0_i32_1 = arith.constant 0 : i32
    return %c0_i32, %c0_i32_0 : i32, i32
  }
  func.func @transform_17(%arg0: i32, %arg1: i32) -> (i32, i32, i32) {
    %c0_i32 = arith.constant 0 : i32
    %c0_i32_0 = arith.constant 0 : i32
    return %arg0, %arg1, %c0_i32 : i32, i32, i32
  }
}

</mosaic_0001>

<llo_original>
// kernel: tpu_custom_call.1
$region0: #{tpu_custom_call.1}
  #allocation0 [shape = 'u32[]', space=smem, size = 0x4, offset = 0x4, fixed_abs, tag = 'smem constant byte address 0x4 - core index']
  #allocation1 [shape = 'u32[144,128]{1,0:T(1,128)}', space=vmem, size = 0x12000, scoped, tag = 'internal scratch']
  %s0 = inlined_call_operand.hbm [shape: f32[2,8,32], index: 0, kind: input, shape index: {}]
  %s1 = inlined_call_operand.hbm [shape: f32[2,8,32], index: 1, kind: input, shape index: {}]
  %s2 = inlined_call_operand.hbm [shape: bf16[2,8,8], index: 2, kind: input, shape index: {}]
  %s3 = inlined_call_operand.hbm [shape: bf16[32,32], index: 3, kind: input, shape index: {}]
  %s4 = inlined_call_operand.hbm [shape: f32[1,32], index: 4, kind: input, shape index: {}]
  %s5 = inlined_call_operand.hbm [shape: bf16[32,64], index: 5, kind: input, shape index: {}]
  %s6 = inlined_call_operand.hbm [shape: f32[1,64], index: 6, kind: input, shape index: {}]
  %s7 = inlined_call_operand.hbm [shape: bf16[4,8,32], index: 7, kind: input, shape index: {}]
  %s8 = inlined_call_operand.hbm [shape: f32[1,32], index: 8, kind: input, shape index: {}]
  %s9 = inlined_call_operand.hbm [shape: f32[1,32], index: 9, kind: input, shape index: {}]
  %s10 = inlined_call_operand.hbm [shape: f32[1,32], index: 10, kind: input, shape index: {}]
  %s11 = inlined_call_operand.hbm [shape: bf16[32,64], index: 11, kind: input, shape index: {}]
  %s12 = inlined_call_operand.hbm [shape: f32[1,64], index: 12, kind: input, shape index: {}]
  %s13 = inlined_call_operand.hbm [shape: bf16[64,32], index: 13, kind: input, shape index: {}]
  %s14 = inlined_call_operand.hbm [shape: f32[1,32], index: 14, kind: input, shape index: {}]
  %s15 = inlined_call_operand.hbm [shape: f32[1,32], index: 15, kind: input, shape index: {}]
  %s16 = inlined_call_operand.hbm [shape: f32[1,32], index: 16, kind: input, shape index: {}]
  %s17 = inlined_call_operand.hbm [shape: f32[2,8,32], index: 17, kind: output, shape index: {}]
  %s18 = sld [smem:[#allocation0]]
  $region169: #{tpu_custom_call.1} parent=0
    _
  %s20 = ssub.s32 1, %s18
  %s21 = scalar_select 0, %s20, %s18
  $region1: #{tpu_custom_call.1} parent=0
    #allocation2 [shape = 'u8[8192]{0}', space=vmem, size = 0x2000, scoped, tag = 'input window, operand 0']
    #allocation3 [shape = 's32[2]{0}', space=sflag, size = 0x8, scoped, tag = 'scoped memory for tpu_custom_call.1']
    #allocation4 [shape = 's32[2]{0}', space=sflag, size = 0x8, scoped, tag = 'scoped memory for tpu_custom_call.1']
    #allocation5 [shape = 'u8[8192]{0}', space=vmem, size = 0x2000, scoped, tag = 'input window, operand 1']
    #allocation6 [shape = 's32[2]{0}', space=sflag, size = 0x8, scoped, tag = 'scoped memory for tpu_custom_call.1']
    #allocation7 [shape = 'u8[4096]{0}', space=vmem, size = 0x1000, scoped, tag = 'input window, operand 2']
    #allocation8 [shape = 'u8[8192]{0}', space=vmem, size = 0x2000, scoped, tag = 'input window, operand 3, single buffered']
    #allocation9 [shape = 's32[1]{0}', space=sflag, size = 0x4, scoped, tag = 'scoped memory for tpu_custom_call.1']
    #allocation10 [shape = 'u8[512]{0}', space=vmem, size = 0x400, scoped, tag = 'input window, operand 4, single buffered']
    #allocation11 [shape = 'u8[8192]{0}', space=vmem, size = 0x2000, scoped, tag = 'input window, operand 5, single buffered']
    #allocation12 [shape = 's32[1]{0}', space=sflag, size = 0x4, scoped, tag = 'scoped memory for tpu_custom_call.1']
    #allocation13 [shape = 'u8[512]{0}', space=vmem, size = 0x400, scoped, tag = 'input window, operand 6, single buffered']
    #allocation14 [shape = 'u8[8192]{0}', space=vmem, size = 0x2000, scoped, tag = 'input window, operand 7, single buffered']
    #allocation15 [shape = 's32[1]{0}', space=sflag, size = 0x4, scoped, tag = 'scoped memory for tpu_custom_call.1']
    #allocation16 [shape = 'u8[512]{0}', space=vmem, size = 0x400, scoped, tag = 'input window, operand 8, single buffered']
    #allocation17 [shape = 'u8[512]{0}', space=vmem, size = 0x400, scoped, tag = 'input window, operand 9, single buffered']
    #allocation18 [shape = 's32[1]{0}', space=sflag, size = 0x4, scoped, tag = 'scoped memory for tpu_custom_call.1']
    #allocation19 [shape = 'u8[512]{0}', space=vmem, size = 0x400, scoped, tag = 'input window, operand 10, single buffered']
    #allocation20 [shape = 'u8[8192]{0}', space=vmem, size = 0x2000, scoped, tag = 'input window, operand 11, single buffered']
    #allocation21 [shape = 's32[1]{0}', space=sflag, size = 0x4, scoped, tag = 'scoped memory for tpu_custom_call.1']
    #allocation22 [shape = 'u8[512]{0}', space=vmem, size = 0x400, scoped, tag = 'input window, operand 12, single buffered']
    #allocation23 [shape = 'u8[16384]{0}', space=vmem, size = 0x4000, scoped, tag = 'input window, operand 13, single buffered']
    #allocation24 [shape = 's32[1]{0}', space=sflag, size = 0x4, scoped, tag = 'scoped memory for tpu_custom_call.1']
    #allocation25 [shape = 'u8[512]{0}', space=vmem, size = 0x400, scoped, tag = 'input window, operand 14, single buffered']
    #allocation26 [shape = 'u8[512]{0}', space=vmem, size = 0x400, scoped, tag = 'input window, operand 15, single buffered']
    #allocation27 [shape = 's32[1]{0}', space=sflag, size = 0x4, scoped, tag = 'scoped memory for tpu_custom_call.1']
    #allocation28 [shape = 'u8[512]{0}', space=vmem, size = 0x400, scoped, tag = 'input window, operand 16, single buffered']
    #allocation29 [shape = 'u8[8192]{0}', space=vmem, size = 0x2000, scoped, tag = 'output window, operand 0']
    %22 = vsyncpa [#allocation3], 0
    %s23 = scalar_lea.sflag [#allocation3], 1
    %24 = vsyncpa %s23, 0
    %25 = vsyncpa [#allocation6], 0
    %s26 = scalar_lea.sflag [#allocation6], 1
    %27 = vsyncpa %s26, 0
    %28 = vsyncpa [#allocation9], 0
    %29 = vsyncpa [#allocation12], 0
    %30 = vsyncpa [#allocation15], 0
    %31 = vsyncpa [#allocation18], 0
    %32 = vsyncpa [#allocation21], 0
    %33 = vsyncpa [#allocation24], 0
    %34 = vsyncpa [#allocation27], 0
    %35 = vsyncpa [#allocation4], 0
    %s36 = scalar_lea.sflag [#allocation4], 1
    %37 = vsyncpa %s36, 0
    loop: start=0, step=1, limit=4
    $region2: #{tpu_custom_call.1} parent=1 // loop_pre_header
      _
    $region3: #{tpu_custom_call.1} parent=1 // loop_header
      %s39 = sphi 0, %s43
      %p40 = scmp.ge.s32.totalorder %s39, 4
      %s46 = sphi 0, %s58
      %s47 = sphi 0, %s54
      %s48 = sphi 0, %s46
      %s49 = sphi 0, %s47
      %s50 = sphi 0, %s48
      %s51 = sphi 0, %s49
      %s63 = sphi 0, %s65
      %s66 = sphi 0, %s63
      %s67 = sphi 0, %s66
      %s83 = sphi 0, %s67
      %s89 = sphi 0, %s91
      %s92 = sphi 0, %s89
      %s93 = sphi 0, %s92
      %s109 = sphi 0, %s93
      %s117 = sphi 0, %s119
      %s120 = sphi 0, %s117
      %s121 = sphi 0, %s120
      %s137 = sphi 0, %s121
      %s141 = sphi 0, %s141
      %s143 = sphi 0, %s141
      %s144 = sphi 0, %s143
      %s158 = sphi 0, %s144
      %s162 = sphi 0, %s162
      %s164 = sphi 0, %s162
      %s165 = sphi 0, %s164
      %s179 = sphi 0, %s165
      %s183 = sphi 0, %s183
      %s185 = sphi 0, %s183
      %s186 = sphi 0, %s185
      %s200 = sphi 0, %s186
      %s204 = sphi 0, %s204
      %s206 = sphi 0, %s204
      %s207 = sphi 0, %s206
      %s221 = sphi 0, %s207
      %s225 = sphi 0, %s225
      %s227 = sphi 0, %s225
      %s228 = sphi 0, %s227
      %s242 = sphi 0, %s228
      %s246 = sphi 0, %s246
      %s248 = sphi 0, %s246
      %s249 = sphi 0, %s248
      %s263 = sphi 0, %s249
      %s267 = sphi 0, %s267
      %s269 = sphi 0, %s267
      %s270 = sphi 0, %s269
      %s284 = sphi 0, %s270
      %s288 = sphi 0, %s288
      %s290 = sphi 0, %s288
      %s291 = sphi 0, %s290
      %s305 = sphi 0, %s291
      %s309 = sphi 0, %s309
      %s311 = sphi 0, %s309
      %s312 = sphi 0, %s311
      %s326 = sphi 0, %s312
      %s330 = sphi 0, %s330
      %s332 = sphi 0, %s330
      %s333 = sphi 0, %s332
      %s347 = sphi 0, %s333
      %s351 = sphi 0, %s351
      %s353 = sphi 0, %s351
      %s354 = sphi 0, %s353
      %s368 = sphi 0, %s354
      %s372 = sphi 0, %s372
      %s374 = sphi 0, %s372
      %s375 = sphi 0, %s374
      %s389 = sphi 0, %s375
      %s393 = sphi 0, %s393
      %s395 = sphi 0, %s393
      %s396 = sphi 0, %s395
      %s410 = sphi 0, %s396
      %s414 = sphi 0, %s414
      %s416 = sphi 0, %s414
      %s417 = sphi 0, %s416
      %s431 = sphi 0, %s417
      %s439 = sphi 0, %s441
      %s442 = sphi 0, %s439
      %s443 = sphi 0, %s442
      %s459 = sphi 0, %s443
    $region4: #{tpu_custom_call.1} parent=1 // loop_header_branch
      %42 = sbr.rel (%p40) target = $region8
    $region5: #{tpu_custom_call.1} parent=1 // loop_body
      %s44 = ssub.s32 %s39, 1
      %s45 = ssub.s32 %s39, 2
      %s52 = sadd.s32 1, %s47
      %p53 = scmp.ge.s32.totalorder %s52, 1
      %s54 = scalar_select %p53, 0, %s52
      %s55 = sadd.s32 1, %s46
      %s56 = scalar_select %p53, %s55, %s46
      %p57 = scmp.ge.s32.totalorder %s56, 2
      %s58 = scalar_select %p57, 0, %s56
      %s59 = ssub.s32 %s46, %s58
      %s60 = ssub.s32 %s47, %s54
      %s61 = sor.u32 %s59, %s60
      %p62 = scmp.eq.s32.totalorder %s61, 0
      %s64 = sadd.s32 %s63, 1
      %s65 = scalar_select %p62, %s63, %s64
      %p68 = pneg %p62
      %p69 = scmp.eq.s32.totalorder %s39, 1
      %p70 = por %p68, %p69
      %p71 = scmp.ne.s32.totalorder %s63, %s66
      %p72 = scmp.eq.s32.totalorder %s39, 0
      %p73 = por %p71, %p72
      %p74 = scmp.ne.s32.totalorder %s63, %s66
      %p75 = scmp.eq.s32.totalorder %s44, 1
      %p76 = por %p74, %p75
      %p77 = scmp.ne.s32.totalorder %s66, %s67
      %p78 = scmp.eq.s32.totalorder %s44, 0
      %p79 = por %p77, %p78
      %p80 = scmp.ne.s32.totalorder %s66, %s67
      %p81 = scmp.eq.s32.totalorder %s45, 1
      %p82 = por %p80, %p81
      %p84 = scmp.ne.s32.totalorder %s67, %s83
      %p85 = scmp.eq.s32.totalorder %s45, 0
      %p86 = por %p84, %p85
      %s87 = ssub.s32 %s46, %s58
      %p88 = scmp.eq.s32.totalorder %s87, 0
      %s90 = sadd.s32 %s89, 1
      %s91 = scalar_select %p88, %s89, %s90
      %p94 = pneg %p88
      %p95 = scmp.eq.s32.totalorder %s39, 1
      %p96 = por %p94, %p95
      %p97 = scmp.ne.s32.totalorder %s89, %s92
      %p98 = scmp.eq.s32.totalorder %s39, 0
      %p99 = por %p97, %p98
      %p100 = scmp.ne.s32.totalorder %s89, %s92
      %p101 = scmp.eq.s32.totalorder %s44, 1
      %p102 = por %p100, %p101
      %p103 = scmp.ne.s32.totalorder %s92, %s93
      %p104 = scmp.eq.s32.totalorder %s44, 0
      %p105 = por %p103, %p104
      %p106 = scmp.ne.s32.totalorder %s92, %s93
      %p107 = scmp.eq.s32.totalorder %s45, 1
      %p108 = por %p106, %p107
      %p110 = scmp.ne.s32.totalorder %s93, %s109
      %p111 = scmp.eq.s32.totalorder %s45, 0
      %p112 = por %p110, %p111
      %s113 = ssub.s32 %s46, %s58
      %s114 = ssub.s32 %s47, %s54
      %s115 = sor.u32 %s113, %s114
      %p116 = scmp.eq.s32.totalorder %s115, 0
      %s118 = sadd.s32 %s117, 1
      %s119 = scalar_select %p116, %s117, %s118
      %p122 = pneg %p116
      %p123 = scmp.eq.s32.totalorder %s39, 1
      %p124 = por %p122, %p123
      %p125 = scmp.ne.s32.totalorder %s117, %s120
      %p126 = scmp.eq.s32.totalorder %s39, 0
      %p127 = por %p125, %p126
      %p128 = scmp.ne.s32.totalorder %s117, %s120
      %p129 = scmp.eq.s32.totalorder %s44, 1
      %p130 = por %p128, %p129
      %p131 = scmp.ne.s32.totalorder %s120, %s121
      %p132 = scmp.eq.s32.totalorder %s44, 0
      %p133 = por %p131, %p132
      %p134 = scmp.ne.s32.totalorder %s120, %s121
      %p135 = scmp.eq.s32.totalorder %s45, 1
      %p136 = por %p134, %p135
      %p138 = scmp.ne.s32.totalorder %s121, %s137
      %p139 = scmp.eq.s32.totalorder %s45, 0
      %p140 = por %p138, %p139
      %s142 = sadd.s32 %s141, 1
      %p145 = scmp.eq.s32.totalorder %s39, 1
      %p146 = scmp.ne.s32.totalorder %s141, %s143
      %p147 = scmp.eq.s32.totalorder %s39, 0
      %p148 = por %p146, %p147
      %p149 = scmp.ne.s32.totalorder %s141, %s143
      %p150 = scmp.eq.s32.totalorder %s44, 1
      %p151 = por %p149, %p150
      %p152 = scmp.ne.s32.totalorder %s143, %s144
      %p153 = scmp.eq.s32.totalorder %s44, 0
      %p154 = por %p152, %p153
      %p155 = scmp.ne.s32.totalorder %s143, %s144
      %p156 = scmp.eq.s32.totalorder %s45, 1
      %p157 = por %p155, %p156
      %p159 = scmp.ne.s32.totalorder %s144, %s158
      %p160 = scmp.eq.s32.totalorder %s45, 0
      %p161 = por %p159, %p160
      %s163 = sadd.s32 %s162, 1
      %p166 = scmp.eq.s32.totalorder %s39, 1
      %p167 = scmp.ne.s32.totalorder %s162, %s164
      %p168 = scmp.eq.s32.totalorder %s39, 0
      %p169 = por %p167, %p168
      %p170 = scmp.ne.s32.totalorder %s162, %s164
      %p171 = scmp.eq.s32.totalorder %s44, 1
      %p172 = por %p170, %p171
      %p173 = scmp.ne.s32.totalorder %s164, %s165
      %p174 = scmp.eq.s32.totalorder %s44, 0
      %p175 = por %p173, %p174
      %p176 = scmp.ne.s32.totalorder %s164, %s165
      %p177 = scmp.eq.s32.totalorder %s45, 1
      %p178 = por %p176, %p177
      %p180 = scmp.ne.s32.totalorder %s165, %s179
      %p181 = scmp.eq.s32.totalorder %s45, 0
      %p182 = por %p180, %p181
      %s184 = sadd.s32 %s183, 1
      %p187 = scmp.eq.s32.totalorder %s39, 1
      %p188 = scmp.ne.s32.totalorder %s183, %s185
      %p189 = scmp.eq.s32.totalorder %s39, 0
      %p190 = por %p188, %p189
      %p191 = scmp.ne.s32.totalorder %s183, %s185
      %p192 = scmp.eq.s32.totalorder %s44, 1
      %p193 = por %p191, %p192
      %p194 = scmp.ne.s32.totalorder %s185, %s186
      %p195 = scmp.eq.s32.totalorder %s44, 0
      %p196 = por %p194, %p195
      %p197 = scmp.ne.s32.totalorder %s185, %s186
      %p198 = scmp.eq.s32.totalorder %s45, 1
      %p199 = por %p197, %p198
      %p201 = scmp.ne.s32.totalorder %s186, %s200
      %p202 = scmp.eq.s32.totalorder %s45, 0
      %p203 = por %p201, %p202
      %s205 = sadd.s32 %s204, 1
      %p208 = scmp.eq.s32.totalorder %s39, 1
      %p209 = scmp.ne.s32.totalorder %s204, %s206
      %p210 = scmp.eq.s32.totalorder %s39, 0
      %p211 = por %p209, %p210
      %p212 = scmp.ne.s32.totalorder %s204, %s206
      %p213 = scmp.eq.s32.totalorder %s44, 1
      %p214 = por %p212, %p213
      %p215 = scmp.ne.s32.totalorder %s206, %s207
      %p216 = scmp.eq.s32.totalorder %s44, 0
      %p217 = por %p215, %p216
      %p218 = scmp.ne.s32.totalorder %s206, %s207
      %p219 = scmp.eq.s32.totalorder %s45, 1
      %p220 = por %p218, %p219
      %p222 = scmp.ne.s32.totalorder %s207, %s221
      %p223 = scmp.eq.s32.totalorder %s45, 0
      %p224 = por %p222, %p223
      %s226 = sadd.s32 %s225, 1
      %p229 = scmp.eq.s32.totalorder %s39, 1
      %p230 = scmp.ne.s32.totalorder %s225, %s227
      %p231 = scmp.eq.s32.totalorder %s39, 0
      %p232 = por %p230, %p231
      %p233 = scmp.ne.s32.totalorder %s225, %s227
      %p234 = scmp.eq.s32.totalorder %s44, 1
      %p235 = por %p233, %p234
      %p236 = scmp.ne.s32.totalorder %s227, %s228
      %p237 = scmp.eq.s32.totalorder %s44, 0
      %p238 = por %p236, %p237
      %p239 = scmp.ne.s32.totalorder %s227, %s228
      %p240 = scmp.eq.s32.totalorder %s45, 1
      %p241 = por %p239, %p240
      %p243 = scmp.ne.s32.totalorder %s228, %s242
      %p244 = scmp.eq.s32.totalorder %s45, 0
      %p245 = por %p243, %p244
      %s247 = sadd.s32 %s246, 1
      %p250 = scmp.eq.s32.totalorder %s39, 1
      %p251 = scmp.ne.s32.totalorder %s246, %s248
      %p252 = scmp.eq.s32.totalorder %s39, 0
      %p253 = por %p251, %p252
      %p254 = scmp.ne.s32.totalorder %s246, %s248
      %p255 = scmp.eq.s32.totalorder %s44, 1
      %p256 = por %p254, %p255
      %p257 = scmp.ne.s32.totalorder %s248, %s249
      %p258 = scmp.eq.s32.totalorder %s44, 0
      %p259 = por %p257, %p258
      %p260 = scmp.ne.s32.totalorder %s248, %s249
      %p261 = scmp.eq.s32.totalorder %s45, 1
      %p262 = por %p260, %p261
      %p264 = scmp.ne.s32.totalorder %s249, %s263
      %p265 = scmp.eq.s32.totalorder %s45, 0
      %p266 = por %p264, %p265
      %s268 = sadd.s32 %s267, 1
      %p271 = scmp.eq.s32.totalorder %s39, 1
      %p272 = scmp.ne.s32.totalorder %s267, %s269
      %p273 = scmp.eq.s32.totalorder %s39, 0
      %p274 = por %p272, %p273
      %p275 = scmp.ne.s32.totalorder %s267, %s269
      %p276 = scmp.eq.s32.totalorder %s44, 1
      %p277 = por %p275, %p276
      %p278 = scmp.ne.s32.totalorder %s269, %s270
      %p279 = scmp.eq.s32.totalorder %s44, 0
      %p280 = por %p278, %p279
      %p281 = scmp.ne.s32.totalorder %s269, %s270
      %p282 = scmp.eq.s32.totalorder %s45, 1
      %p283 = por %p281, %p282
      %p285 = scmp.ne.s32.totalorder %s270, %s284
      %p286 = scmp.eq.s32.totalorder %s45, 0
      %p287 = por %p285, %p286
      %s289 = sadd.s32 %s288, 1
      %p292 = scmp.eq.s32.totalorder %s39, 1
      %p293 = scmp.ne.s32.totalorder %s288, %s290
      %p294 = scmp.eq.s32.totalorder %s39, 0
      %p295 = por %p293, %p294
      %p296 = scmp.ne.s32.totalorder %s288, %s290
      %p297 = scmp.eq.s32.totalorder %s44, 1
      %p298 = por %p296, %p297
      %p299 = scmp.ne.s32.totalorder %s290, %s291
      %p300 = scmp.eq.s32.totalorder %s44, 0
      %p301 = por %p299, %p300
      %p302 = scmp.ne.s32.totalorder %s290, %s291
      %p303 = scmp.eq.s32.totalorder %s45, 1
      %p304 = por %p302, %p303
      %p306 = scmp.ne.s32.totalorder %s291, %s305
      %p307 = scmp.eq.s32.totalorder %s45, 0
      %p308 = por %p306, %p307
      %s310 = sadd.s32 %s309, 1
      %p313 = scmp.eq.s32.totalorder %s39, 1
      %p314 = scmp.ne.s32.totalorder %s309, %s311
      %p315 = scmp.eq.s32.totalorder %s39, 0
      %p316 = por %p314, %p315
      %p317 = scmp.ne.s32.totalorder %s309, %s311
      %p318 = scmp.eq.s32.totalorder %s44, 1
      %p319 = por %p317, %p318
      %p320 = scmp.ne.s32.totalorder %s311, %s312
      %p321 = scmp.eq.s32.totalorder %s44, 0
      %p322 = por %p320, %p321
      %p323 = scmp.ne.s32.totalorder %s311, %s312
      %p324 = scmp.eq.s32.totalorder %s45, 1
      %p325 = por %p323, %p324
      %p327 = scmp.ne.s32.totalorder %s312, %s326
      %p328 = scmp.eq.s32.totalorder %s45, 0
      %p329 = por %p327, %p328
      %s331 = sadd.s32 %s330, 1
      %p334 = scmp.eq.s32.totalorder %s39, 1
      %p335 = scmp.ne.s32.totalorder %s330, %s332
      %p336 = scmp.eq.s32.totalorder %s39, 0
      %p337 = por %p335, %p336
      %p338 = scmp.ne.s32.totalorder %s330, %s332
      %p339 = scmp.eq.s32.totalorder %s44, 1
      %p340 = por %p338, %p339
      %p341 = scmp.ne.s32.totalorder %s332, %s333
      %p342 = scmp.eq.s32.totalorder %s44, 0
      %p343 = por %p341, %p342
      %p344 = scmp.ne.s32.totalorder %s332, %s333
      %p345 = scmp.eq.s32.totalorder %s45, 1
      %p346 = por %p344, %p345
      %p348 = scmp.ne.s32.totalorder %s333, %s347
      %p349 = scmp.eq.s32.totalorder %s45, 0
      %p350 = por %p348, %p349
      %s352 = sadd.s32 %s351, 1
      %p355 = scmp.eq.s32.totalorder %s39, 1
      %p356 = scmp.ne.s32.totalorder %s351, %s353
      %p357 = scmp.eq.s32.totalorder %s39, 0
      %p358 = por %p356, %p357
      %p359 = scmp.ne.s32.totalorder %s351, %s353
      %p360 = scmp.eq.s32.totalorder %s44, 1
      %p361 = por %p359, %p360
      %p362 = scmp.ne.s32.totalorder %s353, %s354
      %p363 = scmp.eq.s32.totalorder %s44, 0
      %p364 = por %p362, %p363
      %p365 = scmp.ne.s32.totalorder %s353, %s354
      %p366 = scmp.eq.s32.totalorder %s45, 1
      %p367 = por %p365, %p366
      %p369 = scmp.ne.s32.totalorder %s354, %s368
      %p370 = scmp.eq.s32.totalorder %s45, 0
      %p371 = por %p369, %p370
      %s373 = sadd.s32 %s372, 1
      %p376 = scmp.eq.s32.totalorder %s39, 1
      %p377 = scmp.ne.s32.totalorder %s372, %s374
      %p378 = scmp.eq.s32.totalorder %s39, 0
      %p379 = por %p377, %p378
      %p380 = scmp.ne.s32.totalorder %s372, %s374
      %p381 = scmp.eq.s32.totalorder %s44, 1
      %p382 = por %p380, %p381
      %p383 = scmp.ne.s32.totalorder %s374, %s375
      %p384 = scmp.eq.s32.totalorder %s44, 0
      %p385 = por %p383, %p384
      %p386 = scmp.ne.s32.totalorder %s374, %s375
      %p387 = scmp.eq.s32.totalorder %s45, 1
      %p388 = por %p386, %p387
      %p390 = scmp.ne.s32.totalorder %s375, %s389
      %p391 = scmp.eq.s32.totalorder %s45, 0
      %p392 = por %p390, %p391
      %s394 = sadd.s32 %s393, 1
      %p397 = scmp.eq.s32.totalorder %s39, 1
      %p398 = scmp.ne.s32.totalorder %s393, %s395
      %p399 = scmp.eq.s32.totalorder %s39, 0
      %p400 = por %p398, %p399
      %p401 = scmp.ne.s32.totalorder %s393, %s395
      %p402 = scmp.eq.s32.totalorder %s44, 1
      %p403 = por %p401, %p402
      %p404 = scmp.ne.s32.totalorder %s395, %s396
      %p405 = scmp.eq.s32.totalorder %s44, 0
      %p406 = por %p404, %p405
      %p407 = scmp.ne.s32.totalorder %s395, %s396
      %p408 = scmp.eq.s32.totalorder %s45, 1
      %p409 = por %p407, %p408
      %p411 = scmp.ne.s32.totalorder %s396, %s410
      %p412 = scmp.eq.s32.totalorder %s45, 0
      %p413 = por %p411, %p412
      %s415 = sadd.s32 %s414, 1
      %p418 = scmp.eq.s32.totalorder %s39, 1
      %p419 = scmp.ne.s32.totalorder %s414, %s416
      %p420 = scmp.eq.s32.totalorder %s39, 0
      %p421 = por %p419, %p420
      %p422 = scmp.ne.s32.totalorder %s414, %s416
      %p423 = scmp.eq.s32.totalorder %s44, 1
      %p424 = por %p422, %p423
      %p425 = scmp.ne.s32.totalorder %s416, %s417
      %p426 = scmp.eq.s32.totalorder %s44, 0
      %p427 = por %p425, %p426
      %p428 = scmp.ne.s32.totalorder %s416, %s417
      %p429 = scmp.eq.s32.totalorder %s45, 1
      %p430 = por %p428, %p429
      %p432 = scmp.ne.s32.totalorder %s417, %s431
      %p433 = scmp.eq.s32.totalorder %s45, 0
      %p434 = por %p432, %p433
      %s435 = ssub.s32 %s46, %s58
      %s436 = ssub.s32 %s47, %s54
      %s437 = sor.u32 %s435, %s436
      %p438 = scmp.eq.s32.totalorder %s437, 0
      %s440 = sadd.s32 %s439, 1
      %s441 = scalar_select %p438, %s439, %s440
      %p444 = pneg %p438
      %p445 = scmp.eq.s32.totalorder %s39, 1
      %p446 = por %p444, %p445
      %p447 = scmp.ne.s32.totalorder %s439, %s442
      %p448 = scmp.eq.s32.totalorder %s39, 0
      %p449 = por %p447, %p448
      %p450 = scmp.ne.s32.totalorder %s439, %s442
      %p451 = scmp.eq.s32.totalorder %s44, 1
      %p452 = por %p450, %p451
      %p453 = scmp.ne.s32.totalorder %s442, %s443
      %p454 = scmp.eq.s32.totalorder %s44, 0
      %p455 = por %p453, %p454
      %p456 = scmp.ne.s32.totalorder %s442, %s443
      %p457 = scmp.eq.s32.totalorder %s45, 1
      %p458 = por %p456, %p457
      %p460 = scmp.ne.s32.totalorder %s443, %s459
      %p461 = scmp.eq.s32.totalorder %s45, 0
      %p462 = por %p460, %p461
      %p463 = scmp.le.s32.totalorder 1, %s39
      %p464 = scmp.lt.s32.totalorder %s39, 3
      %p465 = pnand %p463, %p464
      %p466 = pneg %p465
      // Predicated region
      $region9: #{tpu_custom_call.1} parent=5 // pred_check
        _
      $region10: #{tpu_custom_call.1} parent=5 // pred_check_branch
        %468 = sbr.rel (%p465) target = $region12
      $region11: #{tpu_custom_call.1} parent=5 // pred_region
        %s469 = ssub.s32 %s39, 1
        // Predicated region
        $region13: #{tpu_custom_call.1} parent=11 // pred_check
          %p470 = pneg %p154
        $region14: #{tpu_custom_call.1} parent=11 // pred_check_branch
          %472 = sbr.rel (%p470) target = $region16
        $region15: #{tpu_custom_call.1} parent=11 // pred_region
          %s474 = ssub.s32 256, 256
          %475 = vsyncadd [#allocation9], %s474
          %s476 = sshll.u32 [#allocation8], 4
          %s477 = int_to_ptr.vmem [resolvable:$true] %s476
          %482 = dma.hbm_to_vmem [thread:$0]  %s3, 256, %s477, [#allocation9], 64, 64, 4
        $region16: #{tpu_custom_call.1} parent=11 // pred_fallthru
          _
        // Predicated region
        $region17: #{tpu_custom_call.1} parent=11 // pred_check
          %p483 = pneg %p175
        $region18: #{tpu_custom_call.1} parent=11 // pred_check_branch
          %485 = sbr.rel (%p483) target = $region20
        $region19: #{tpu_custom_call.1} parent=11 // pred_region
          %s487 = ssub.s32 16, 16
          %488 = vsyncadd [#allocation9], %s487
          %s490 = sshll.u32 [#allocation10], 4
          %s491 = int_to_ptr.vmem [resolvable:$true] %s490
          %493 = dma.hbm_to_vmem [thread:$0]  %s4, 16, %s491, [#allocation9]
        $region20: #{tpu_custom_call.1} parent=11 // pred_fallthru
          _
        // Predicated region
        $region21: #{tpu_custom_call.1} parent=11 // pred_check
          %p494 = pneg %p196
        $region22: #{tpu_custom_call.1} parent=11 // pred_check_branch
          %496 = sbr.rel (%p494) target = $region24
        $region23: #{tpu_custom_call.1} parent=11 // pred_region
          %s498 = ssub.s32 256, 256
          %499 = vsyncadd [#allocation12], %s498
          %s500 = sshll.u32 [#allocation11], 4
          %s501 = int_to_ptr.vmem [resolvable:$true] %s500
          %506 = dma.hbm_to_vmem [thread:$0]  %s5, 256, %s501, [#allocation12], 64, 64, 4
        $region24: #{tpu_custom_call.1} parent=11 // pred_fallthru
          _
        // Predicated region
        $region25: #{tpu_custom_call.1} parent=11 // pred_check
          %p507 = pneg %p217
        $region26: #{tpu_custom_call.1} parent=11 // pred_check_branch
          %509 = sbr.rel (%p507) target = $region28
        $region27: #{tpu_custom_call.1} parent=11 // pred_region
          %s511 = ssub.s32 16, 16
          %512 = vsyncadd [#allocation12], %s511
          %s514 = sshll.u32 [#allocation13], 4
          %s515 = int_to_ptr.vmem [resolvable:$true] %s514
          %517 = dma.hbm_to_vmem [thread:$0]  %s6, 16, %s515, [#allocation12]
        $region28: #{tpu_custom_call.1} parent=11 // pred_fallthru
          _
        // Predicated region
        $region29: #{tpu_custom_call.1} parent=11 // pred_check
          %p518 = pneg %p238
        $region30: #{tpu_custom_call.1} parent=11 // pred_check_branch
          %520 = sbr.rel (%p518) target = $region32
        $region31: #{tpu_custom_call.1} parent=11 // pred_region
          %s522 = ssub.s32 256, 256
          %523 = vsyncadd [#allocation15], %s522
          %s524 = sshll.u32 [#allocation14], 4
          %s525 = int_to_ptr.vmem [resolvable:$true] %s524
          %530 = dma.hbm_to_vmem [thread:$0]  %s7, 256, %s525, [#allocation15], 64, 64, 4
        $region32: #{tpu_custom_call.1} parent=11 // pred_fallthru
          _
        // Predicated region
        $region33: #{tpu_custom_call.1} parent=11 // pred_check
          %p531 = pneg %p259
        $region34: #{tpu_custom_call.1} parent=11 // pred_check_branch
          %533 = sbr.rel (%p531) target = $region36
        $region35: #{tpu_custom_call.1} parent=11 // pred_region
          %s535 = ssub.s32 16, 16
          %536 = vsyncadd [#allocation15], %s535
          %s538 = sshll.u32 [#allocation16], 4
          %s539 = int_to_ptr.vmem [resolvable:$true] %s538
          %541 = dma.hbm_to_vmem [thread:$0]  %s8, 16, %s539, [#allocation15]
        $region36: #{tpu_custom_call.1} parent=11 // pred_fallthru
          _
        // Predicated region
        $region37: #{tpu_custom_call.1} parent=11 // pred_check
          %p542 = pneg %p280
        $region38: #{tpu_custom_call.1} parent=11 // pred_check_branch
          %544 = sbr.rel (%p542) target = $region40
        $region39: #{tpu_custom_call.1} parent=11 // pred_region
          %s546 = ssub.s32 16, 16
          %547 = vsyncadd [#allocation18], %s546
          %s549 = sshll.u32 [#allocation17], 4
          %s550 = int_to_ptr.vmem [resolvable:$true] %s549
          %552 = dma.hbm_to_vmem [thread:$0]  %s9, 16, %s550, [#allocation18]
        $region40: #{tpu_custom_call.1} parent=11 // pred_fallthru
          _
        // Predicated region
        $region41: #{tpu_custom_call.1} parent=11 // pred_check
          %p553 = pneg %p301
        $region42: #{tpu_custom_call.1} parent=11 // pred_check_branch
          %555 = sbr.rel (%p553) target = $region44
        $region43: #{tpu_custom_call.1} parent=11 // pred_region
          %s557 = ssub.s32 16, 16
          %558 = vsyncadd [#allocation18], %s557
          %s560 = sshll.u32 [#allocation19], 4
          %s561 = int_to_ptr.vmem [resolvable:$true] %s560
          %563 = dma.hbm_to_vmem [thread:$0]  %s10, 16, %s561, [#allocation18]
        $region44: #{tpu_custom_call.1} parent=11 // pred_fallthru
          _
        // Predicated region
        $region45: #{tpu_custom_call.1} parent=11 // pred_check
          %p564 = pneg %p322
        $region46: #{tpu_custom_call.1} parent=11 // pred_check_branch
          %566 = sbr.rel (%p564) target = $region48
        $region47: #{tpu_custom_call.1} parent=11 // pred_region
          %s568 = ssub.s32 256, 256
          %569 = vsyncadd [#allocation21], %s568
          %s570 = sshll.u32 [#allocation20], 4
          %s571 = int_to_ptr.vmem [resolvable:$true] %s570
          %576 = dma.hbm_to_vmem [thread:$0]  %s11, 256, %s571, [#allocation21], 64, 64, 4
        $region48: #{tpu_custom_call.1} parent=11 // pred_fallthru
          _
        // Predicated region
        $region49: #{tpu_custom_call.1} parent=11 // pred_check
          %p577 = pneg %p343
        $region50: #{tpu_custom_call.1} parent=11 // pred_check_branch
          %579 = sbr.rel (%p577) target = $region52
        $region51: #{tpu_custom_call.1} parent=11 // pred_region
          %s581 = ssub.s32 16, 16
          %582 = vsyncadd [#allocation21], %s581
          %s584 = sshll.u32 [#allocation22], 4
          %s585 = int_to_ptr.vmem [resolvable:$true] %s584
          %587 = dma.hbm_to_vmem [thread:$0]  %s12, 16, %s585, [#allocation21]
        $region52: #{tpu_custom_call.1} parent=11 // pred_fallthru
          _
        // Predicated region
        $region53: #{tpu_custom_call.1} parent=11 // pred_check
          %p588 = pneg %p364
        $region54: #{tpu_custom_call.1} parent=11 // pred_check_branch
          %590 = sbr.rel (%p588) target = $region56
        $region55: #{tpu_custom_call.1} parent=11 // pred_region
          %s592 = ssub.s32 512, 512
          %593 = vsyncadd [#allocation24], %s592
          %s594 = sshll.u32 [#allocation23], 4
          %s595 = int_to_ptr.vmem [resolvable:$true] %s594
          %600 = dma.hbm_to_vmem [thread:$0]  %s13, 512, %s595, [#allocation24], 64, 64, 4
        $region56: #{tpu_custom_call.1} parent=11 // pred_fallthru
          _
        // Predicated region
        $region57: #{tpu_custom_call.1} parent=11 // pred_check
          %p601 = pneg %p385
        $region58: #{tpu_custom_call.1} parent=11 // pred_check_branch
          %603 = sbr.rel (%p601) target = $region60
        $region59: #{tpu_custom_call.1} parent=11 // pred_region
          %s605 = ssub.s32 16, 16
          %606 = vsyncadd [#allocation24], %s605
          %s608 = sshll.u32 [#allocation25], 4
          %s609 = int_to_ptr.vmem [resolvable:$true] %s608
          %611 = dma.hbm_to_vmem [thread:$0]  %s14, 16, %s609, [#allocation24]
        $region60: #{tpu_custom_call.1} parent=11 // pred_fallthru
          _
        // Predicated region
        $region61: #{tpu_custom_call.1} parent=11 // pred_check
          %p612 = pneg %p406
        $region62: #{tpu_custom_call.1} parent=11 // pred_check_branch
          %614 = sbr.rel (%p612) target = $region64
        $region63: #{tpu_custom_call.1} parent=11 // pred_region
          %s616 = ssub.s32 16, 16
          %617 = vsyncadd [#allocation27], %s616
          %s619 = sshll.u32 [#allocation26], 4
          %s620 = int_to_ptr.vmem [resolvable:$true] %s619
          %622 = dma.hbm_to_vmem [thread:$0]  %s15, 16, %s620, [#allocation27]
        $region64: #{tpu_custom_call.1} parent=11 // pred_fallthru
          _
        // Predicated region
        $region65: #{tpu_custom_call.1} parent=11 // pred_check
          %p623 = pneg %p427
        $region66: #{tpu_custom_call.1} parent=11 // pred_check_branch
          %625 = sbr.rel (%p623) target = $region68
        $region67: #{tpu_custom_call.1} parent=11 // pred_region
          %s627 = ssub.s32 16, 16
          %628 = vsyncadd [#allocation27], %s627
          %s630 = sshll.u32 [#allocation28], 4
          %s631 = int_to_ptr.vmem [resolvable:$true] %s630
          %633 = dma.hbm_to_vmem [thread:$0]  %s16, 16, %s631, [#allocation27]
        $region68: #{tpu_custom_call.1} parent=11 // pred_fallthru
          _
      $region12: #{tpu_custom_call.1} parent=5 // pred_fallthru
        _
      %p634 = scmp.lt.s32.totalorder %s39, 2
      // Predicated region
      $region69: #{tpu_custom_call.1} parent=5 // pred_check
        %p635 = pneg %p634
      $region70: #{tpu_custom_call.1} parent=5 // pred_check_branch
        %637 = sbr.rel (%p635) target = $region72
      $region71: #{tpu_custom_call.1} parent=5 // pred_region
        // Predicated region
        $region73: #{tpu_custom_call.1} parent=71 // pred_check
          %p638 = pneg %p73
        $region74: #{tpu_custom_call.1} parent=71 // pred_check_branch
          %640 = sbr.rel (%p638) target = $region76
        $region75: #{tpu_custom_call.1} parent=71 // pred_region
          %s641 = sand.u32 %s63, 1
          %s642 = scalar_lea.sflag [#allocation3], %s641
          %s643 = sand.u32 %s63, 1
          %s644 = smul.addr %s643, 8
          %s645 = scalar_lea.vmem [#allocation2], %s644
          %s647 = ssub.s32 128, 128
          %648 = vsyncadd %s642, %s647
          %s649 = sadd.s32 %s47, %s46
          %s650 = smul.addr %s649, 128
          %s651 = scalar_lea.hbm %s0, %s650
          %s653 = sshll.u32 %s645, 4
          %s654 = int_to_ptr.vmem [resolvable:$true] %s653
          %656 = dma.hbm_to_vmem [thread:$0]  %s651, 128, %s654, %s642
        $region76: #{tpu_custom_call.1} parent=71 // pred_fallthru
          _
        // Predicated region
        $region77: #{tpu_custom_call.1} parent=71 // pred_check
          %p657 = pneg %p99
        $region78: #{tpu_custom_call.1} parent=71 // pred_check_branch
          %659 = sbr.rel (%p657) target = $region80
        $region79: #{tpu_custom_call.1} parent=71 // pred_region
          %s660 = sand.u32 %s39, 1
          %s661 = scalar_lea.sflag [#allocation6], %s660
          %s662 = sand.u32 %s89, 1
          %s663 = smul.addr %s662, 8
          %s664 = scalar_lea.vmem [#allocation5], %s663
          %s666 = ssub.s32 128, 128
          %667 = vsyncadd %s661, %s666
          %s668 = smul.addr %s46, 128
          %s669 = scalar_lea.hbm %s1, %s668
          %s671 = sshll.u32 %s664, 4
          %s672 = int_to_ptr.vmem [resolvable:$true] %s671
          %674 = dma.hbm_to_vmem [thread:$0]  %s669, 128, %s672, %s661
        $region80: #{tpu_custom_call.1} parent=71 // pred_fallthru
          _
        // Predicated region
        $region81: #{tpu_custom_call.1} parent=71 // pred_check
          %p675 = pneg %p127
        $region82: #{tpu_custom_call.1} parent=71 // pred_check_branch
          %677 = sbr.rel (%p675) target = $region84
        $region83: #{tpu_custom_call.1} parent=71 // pred_region
          %s678 = sand.u32 %s39, 1
          %s679 = scalar_lea.sflag [#allocation6], %s678
          %s680 = sand.u32 %s117, 1
          %s681 = smul.addr %s680, 4
          %s682 = scalar_lea.vmem [#allocation7], %s681
          %s684 = ssub.s32 64, 64
          %685 = vsyncadd %s679, %s684
          %s686 = sadd.s32 %s47, %s46
          %s687 = smul.addr %s686, 64
          %s688 = scalar_lea.hbm %s2, %s687
          %s690 = sshll.u32 %s682, 4
          %s691 = int_to_ptr.vmem [resolvable:$true] %s690
          %693 = dma.hbm_to_vmem [thread:$0]  %s688, 64, %s691, %s679
        $region84: #{tpu_custom_call.1} parent=71 // pred_fallthru
          _
      $region72: #{tpu_custom_call.1} parent=5 // pred_fallthru
        _
      %p694 = scmp.le.s32.totalorder 1, %s39
      %p695 = scmp.lt.s32.totalorder %s39, 3
      %p696 = pnand %p694, %p695
      %p697 = pneg %p696
      // Predicated region
      $region85: #{tpu_custom_call.1} parent=5 // pred_check
        _
      $region86: #{tpu_custom_call.1} parent=5 // pred_check_branch
        %699 = sbr.rel (%p696) target = $region88
      $region87: #{tpu_custom_call.1} parent=5 // pred_region
        %s700 = ssub.s32 %s39, 1
        %s701 = sand.u32 %s66, 1
        %s702 = scalar_lea.sflag [#allocation3], %s701
        %s703 = sand.u32 %s66, 1
        %s704 = smul.addr %s703, 8
        %s705 = scalar_lea.vmem [#allocation2], %s704
        // Predicated region
        $region89: #{tpu_custom_call.1} parent=87 // pred_check
          %p706 = pneg %p79
        $region90: #{tpu_custom_call.1} parent=87 // pred_check_branch
          %708 = sbr.rel (%p706) target = $region92
        $region91: #{tpu_custom_call.1} parent=87 // pred_region
          %709 = dma.done %s702, 128
        $region92: #{tpu_custom_call.1} parent=87 // pred_fallthru
          _
        %s710 = sand.u32 %s44, 1
        %s711 = scalar_lea.sflag [#allocation6], %s710
        %s712 = sand.u32 %s92, 1
        %s713 = smul.addr %s712, 8
        %s714 = scalar_lea.vmem [#allocation5], %s713
        // Predicated region
        $region93: #{tpu_custom_call.1} parent=87 // pred_check
          %p715 = pneg %p105
        $region94: #{tpu_custom_call.1} parent=87 // pred_check_branch
          %717 = sbr.rel (%p715) target = $region96
        $region95: #{tpu_custom_call.1} parent=87 // pred_region
          %718 = dma.done %s711, 128
        $region96: #{tpu_custom_call.1} parent=87 // pred_fallthru
          _
        %s719 = sand.u32 %s44, 1
        %s720 = scalar_lea.sflag [#allocation6], %s719
        %s721 = sand.u32 %s120, 1
        %s722 = smul.addr %s721, 4
        %s723 = scalar_lea.vmem [#allocation7], %s722
        // Predicated region
        $region97: #{tpu_custom_call.1} parent=87 // pred_check
          %p724 = pneg %p133
        $region98: #{tpu_custom_call.1} parent=87 // pred_check_branch
          %726 = sbr.rel (%p724) target = $region100
        $region99: #{tpu_custom_call.1} parent=87 // pred_region
          %727 = dma.done %s720, 64
        $region100: #{tpu_custom_call.1} parent=87 // pred_fallthru
          _
        // Predicated region
        $region101: #{tpu_custom_call.1} parent=87 // pred_check
          %p728 = pneg %p154
        $region102: #{tpu_custom_call.1} parent=87 // pred_check_branch
          %730 = sbr.rel (%p728) target = $region104
        $region103: #{tpu_custom_call.1} parent=87 // pred_region
          %731 = dma.done [#allocation9], 256
        $region104: #{tpu_custom_call.1} parent=87 // pred_fallthru
          _
        // Predicated region
        $region105: #{tpu_custom_call.1} parent=87 // pred_check
          %p732 = pneg %p175
        $region106: #{tpu_custom_call.1} parent=87 // pred_check_branch
          %734 = sbr.rel (%p732) target = $region108
        $region107: #{tpu_custom_call.1} parent=87 // pred_region
          %735 = dma.done [#allocation9], 16
        $region108: #{tpu_custom_call.1} parent=87 // pred_fallthru
          _
        // Predicated region
        $region109: #{tpu_custom_call.1} parent=87 // pred_check
          %p736 = pneg %p196
        $region110: #{tpu_custom_call.1} parent=87 // pred_check_branch
          %738 = sbr.rel (%p736) target = $region112
        $region111: #{tpu_custom_call.1} parent=87 // pred_region
          %739 = dma.done [#allocation12], 256
        $region112: #{tpu_custom_call.1} parent=87 // pred_fallthru
          _
        // Predicated region
        $region113: #{tpu_custom_call.1} parent=87 // pred_check
          %p740 = pneg %p217
        $region114: #{tpu_custom_call.1} parent=87 // pred_check_branch
          %742 = sbr.rel (%p740) target = $region116
        $region115: #{tpu_custom_call.1} parent=87 // pred_region
          %743 = dma.done [#allocation12], 16
        $region116: #{tpu_custom_call.1} parent=87 // pred_fallthru
          _
        // Predicated region
        $region117: #{tpu_custom_call.1} parent=87 // pred_check
          %p744 = pneg %p238
        $region118: #{tpu_custom_call.1} parent=87 // pred_check_branch
          %746 = sbr.rel (%p744) target = $region120
        $region119: #{tpu_custom_call.1} parent=87 // pred_region
          %747 = dma.done [#allocation15], 256
        $region120: #{tpu_custom_call.1} parent=87 // pred_fallthru
          _
        // Predicated region
        $region121: #{tpu_custom_call.1} parent=87 // pred_check
          %p748 = pneg %p259
        $region122: #{tpu_custom_call.1} parent=87 // pred_check_branch
          %750 = sbr.rel (%p748) target = $region124
        $region123: #{tpu_custom_call.1} parent=87 // pred_region
          %751 = dma.done [#allocation15], 16
        $region124: #{tpu_custom_call.1} parent=87 // pred_fallthru
          _
        // Predicated region
        $region125: #{tpu_custom_call.1} parent=87 // pred_check
          %p752 = pneg %p280
        $region126: #{tpu_custom_call.1} parent=87 // pred_check_branch
          %754 = sbr.rel (%p752) target = $region128
        $region127: #{tpu_custom_call.1} parent=87 // pred_region
          %755 = dma.done [#allocation18], 16
        $region128: #{tpu_custom_call.1} parent=87 // pred_fallthru
          _
        // Predicated region
        $region129: #{tpu_custom_call.1} parent=87 // pred_check
          %p756 = pneg %p301
        $region130: #{tpu_custom_call.1} parent=87 // pred_check_branch
          %758 = sbr.rel (%p756) target = $region132
        $region131: #{tpu_custom_call.1} parent=87 // pred_region
          %759 = dma.done [#allocation18], 16
        $region132: #{tpu_custom_call.1} parent=87 // pred_fallthru
          _
        // Predicated region
        $region133: #{tpu_custom_call.1} parent=87 // pred_check
          %p760 = pneg %p322
        $region134: #{tpu_custom_call.1} parent=87 // pred_check_branch
          %762 = sbr.rel (%p760) target = $region136
        $region135: #{tpu_custom_call.1} parent=87 // pred_region
          %763 = dma.done [#allocation21], 256
        $region136: #{tpu_custom_call.1} parent=87 // pred_fallthru
          _
        // Predicated region
        $region137: #{tpu_custom_call.1} parent=87 // pred_check
          %p764 = pneg %p343
        $region138: #{tpu_custom_call.1} parent=87 // pred_check_branch
          %766 = sbr.rel (%p764) target = $region140
        $region139: #{tpu_custom_call.1} parent=87 // pred_region
          %767 = dma.done [#allocation21], 16
        $region140: #{tpu_custom_call.1} parent=87 // pred_fallthru
          _
        // Predicated region
        $region141: #{tpu_custom_call.1} parent=87 // pred_check
          %p768 = pneg %p364
        $region142: #{tpu_custom_call.1} parent=87 // pred_check_branch
          %770 = sbr.rel (%p768) target = $region144
        $region143: #{tpu_custom_call.1} parent=87 // pred_region
          %771 = dma.done [#allocation24], 512
        $region144: #{tpu_custom_call.1} parent=87 // pred_fallthru
          _
        // Predicated region
        $region145: #{tpu_custom_call.1} parent=87 // pred_check
          %p772 = pneg %p385
        $region146: #{tpu_custom_call.1} parent=87 // pred_check_branch
          %774 = sbr.rel (%p772) target = $region148
        $region147: #{tpu_custom_call.1} parent=87 // pred_region
          %775 = dma.done [#allocation24], 16
        $region148: #{tpu_custom_call.1} parent=87 // pred_fallthru
          _
        // Predicated region
        $region149: #{tpu_custom_call.1} parent=87 // pred_check
          %p776 = pneg %p406
        $region150: #{tpu_custom_call.1} parent=87 // pred_check_branch
          %778 = sbr.rel (%p776) target = $region152
        $region151: #{tpu_custom_call.1} parent=87 // pred_region
          %779 = dma.done [#allocation27], 16
        $region152: #{tpu_custom_call.1} parent=87 // pred_fallthru
          _
        // Predicated region
        $region153: #{tpu_custom_call.1} parent=87 // pred_check
          %p780 = pneg %p427
        $region154: #{tpu_custom_call.1} parent=87 // pred_check_branch
          %782 = sbr.rel (%p780) target = $region156
        $region155: #{tpu_custom_call.1} parent=87 // pred_region
          %783 = dma.done [#allocation27], 16
        $region156: #{tpu_custom_call.1} parent=87 // pred_fallthru
          _
        %s784 = sand.u32 %s66, 1
        %s785 = scalar_lea.sflag [#allocation3], %s784
        %s786 = sand.u32 %s66, 1
        %s787 = smul.addr %s786, 8
        %s788 = scalar_lea.vmem [#allocation2], %s787
        %p789 = pneg %p79
        %p790 = pneg %p76
        %s791 = sand.u32 %s44, 1
        %s792 = scalar_lea.sflag [#allocation6], %s791
        %s793 = sand.u32 %s92, 1
        %s794 = smul.addr %s793, 8
        %s795 = scalar_lea.vmem [#allocation5], %s794
        %p796 = pneg %p105
        %p797 = pneg %p102
        %s798 = sand.u32 %s44, 1
        %s799 = scalar_lea.sflag [#allocation6], %s798
        %s800 = sand.u32 %s120, 1
        %s801 = smul.addr %s800, 4
        %s802 = scalar_lea.vmem [#allocation7], %s801
        %p803 = pneg %p133
        %p804 = pneg %p130
        %p805 = pneg %p154
        %p806 = pneg %p151
        %p807 = pneg %p175
        %p808 = pneg %p172
        %p809 = pneg %p196
        %p810 = pneg %p193
        %p811 = pneg %p217
        %p812 = pneg %p214
        %p813 = pneg %p238
        %p814 = pneg %p235
        %p815 = pneg %p259
        %p816 = pneg %p256
        %p817 = pneg %p280
        %p818 = pneg %p277
        %p819 = pneg %p301
        %p820 = pneg %p298
        %p821 = pneg %p322
        %p822 = pneg %p319
        %p823 = pneg %p343
        %p824 = pneg %p340
        %p825 = pneg %p364
        %p826 = pneg %p361
        %p827 = pneg %p385
        %p828 = pneg %p382
        %p829 = pneg %p406
        %p830 = pneg %p403
        %p831 = pneg %p427
        %p832 = pneg %p424
        %p833 = pneg %p455
        %p834 = pneg %p452
        %s835 = sand.u32 %s442, 1
        %s836 = scalar_lea.sflag [#allocation4], %s835
        %s837 = sand.u32 %s442, 1
        %s838 = smul.addr %s837, 8
        %s839 = scalar_lea.vmem [#allocation29], %s838
        %v841 = vld [vmem:[%s705] sm:$0xff]
        %v842 = vpack.c.bf16 %v841, %v841
        %v843 = vld [vmem:[#allocation8] sm:$0xf]
        %v844 = vld [vmem:[#allocation8 + $0x4] sm:$0xf]
        %v845 = vld [vmem:[#allocation8 + $0x8] sm:$0xf]
        %v846 = vld [vmem:[#allocation8 + $0xc] sm:$0xf]
        %v847 = vld [vmem:[#allocation10] sm:$0x1]
        %v849 = vlaneseq
        %v850 = vshrl.u32 %v849, 7
        %v851 = vsub.s32 0, %v850
        %v852 = vrot.slane %v847, %v851
        %v858 = vunpack.c.l.b16 %v843
        %v859 = vunpack.c.l.b16 %v844
        %v860 = vunpack.c.l.b16 %v845
        %v861 = vunpack.c.l.b16 %v846
        %v862 = vpack.c.b16 %v859, %v858
        %v863 = vpack.c.b16 %v861, %v860
        %vm866 = vcmask 261120
        %v868 = vsel %vm866, %v842, 0
        %870 = vmatprep.subr.bf16.mxu0 0
        %871 = vmatpush1.bf16.msra.mxu0 %v862
        %872 = vmatprep.subr.bf16.mxu0 0
        %873 = vmatpush1.bf16.msra.mxu0 %v863
        %874 = vmatprep.subr.bf16.mxu0 0
        %875 = vmatpush1.bf16.msra.mxu0 0
        %876 = vmatprep.subr.bf16.mxu0 0
        %877 = vmatpush1.bf16.msra.mxu0 0
        %878 = vmatprep.subr.bf16.mxu0 0
        %879 = vmatpush1.bf16.msra.mxu0 0
        %880 = vmatprep.subr.bf16.mxu0 0
        %881 = vmatpush1.bf16.msra.mxu0 0
        %882 = vmatprep.subr.bf16.mxu0 0
        %883 = vmatpush1.bf16.msra.mxu0 0
        %884 = vmatprep.subr.bf16.mxu0 0
        %885 = vmatpush1.bf16.msra.mxu0 0
        %886 = vmatprep.subr.bf16.mxu0 0
        %887 = vmatpush1.bf16.msra.mxu0 0
        %888 = vmatprep.subr.bf16.mxu0 0
        %889 = vmatpush1.bf16.msra.mxu0 0
        %890 = vmatprep.subr.bf16.mxu0 0
        %891 = vmatpush1.bf16.msra.mxu0 0
        %892 = vmatprep.subr.bf16.mxu0 0
        %893 = vmatpush1.bf16.msra.mxu0 0
        %894 = vmatprep.subr.bf16.mxu0 0
        %895 = vmatpush1.bf16.msra.mxu0 0
        %896 = vmatprep.subr.bf16.mxu0 0
        %897 = vmatpush1.bf16.msra.mxu0 0
        %898 = vmatprep.subr.bf16.mxu0 0
        %899 = vmatpush1.bf16.msra.mxu0 0
        %900 = vmatprep.subr.bf16.mxu0 0
        %901 = vmatpush1.bf16.msra.mxu0 0
        %902 = vmatprep.mubr.bf16.mxu0 0
        %903 = vmatmul.mubr.bf16.gmra.mrb[0].mxu0 %v868
        %v904 = vpop.f32.mrb[0].mxu0
        %v905 = vadd.f32 %v852, %v904
        %v906 = vpop.f32.mrb[0].mxu0
        %v907 = vpop.f32.mrb[0].mxu0
        %v908 = vpop.f32.mrb[0].mxu0
        %909 = vdwg.mxu0
        %v910 = vpack.c.bf16 %v905, %v905
        %v911 = vld [vmem:[%s714] sm:$0xff]
        %v912 = vpack.c.bf16 %v911, %v911
        %v913 = vld [vmem:[#allocation11] sm:$0xf]
        %v914 = vld [vmem:[#allocation11 + $0x4] sm:$0xf]
        %v915 = vld [vmem:[#allocation11 + $0x8] sm:$0xf]
        %v916 = vld [vmem:[#allocation11 + $0xc] sm:$0xf]
        %v917 = vld [vmem:[#allocation13] sm:$0x1]
        %v919 = vlaneseq
        %v920 = vshrl.u32 %v919, 7
        %v921 = vsub.s32 0, %v920
        %v922 = vrot.slane %v917, %v921
        %v928 = vunpack.c.l.b16 %v913
        %v929 = vunpack.c.l.b16 %v914
        %v930 = vunpack.c.l.b16 %v915
        %v931 = vunpack.c.l.b16 %v916
        %v932 = vpack.c.b16 %v929, %v928
        %v933 = vpack.c.b16 %v931, %v930
        %v937 = vsel %vm866, %v912, 0
        %939 = vmatprep.subr.bf16.mxu0 0
        %940 = vmatpush1.bf16.msra.mxu0 %v932
        %941 = vmatprep.subr.bf16.mxu0 0
        %942 = vmatpush1.bf16.msra.mxu0 %v933
        %943 = vmatprep.subr.bf16.mxu0 0
        %944 = vmatpush1.bf16.msra.mxu0 0
        %945 = vmatprep.subr.bf16.mxu0 0
        %946 = vmatpush1.bf16.msra.mxu0 0
        %947 = vmatprep.subr.bf16.mxu0 0
        %948 = vmatpush1.bf16.msra.mxu0 0
        %949 = vmatprep.subr.bf16.mxu0 0
        %950 = vmatpush1.bf16.msra.mxu0 0
        %951 = vmatprep.subr.bf16.mxu0 0
        %952 = vmatpush1.bf16.msra.mxu0 0
        %953 = vmatprep.subr.bf16.mxu0 0
        %954 = vmatpush1.bf16.msra.mxu0 0
        %955 = vmatprep.subr.bf16.mxu0 0
        %956 = vmatpush1.bf16.msra.mxu0 0
        %957 = vmatprep.subr.bf16.mxu0 0
        %958 = vmatpush1.bf16.msra.mxu0 0
        %959 = vmatprep.subr.bf16.mxu0 0
        %960 = vmatpush1.bf16.msra.mxu0 0
        %961 = vmatprep.subr.bf16.mxu0 0
        %962 = vmatpush1.bf16.msra.mxu0 0
        %963 = vmatprep.subr.bf16.mxu0 0
        %964 = vmatpush1.bf16.msra.mxu0 0
        %965 = vmatprep.subr.bf16.mxu0 0
        %966 = vmatpush1.bf16.msra.mxu0 0
        %967 = vmatprep.subr.bf16.mxu0 0
        %968 = vmatpush1.bf16.msra.mxu0 0
        %969 = vmatprep.subr.bf16.mxu0 0
        %970 = vmatpush1.bf16.msra.mxu0 0
        %971 = vmatprep.mubr.bf16.mxu0 0
        %972 = vmatmul.mubr.bf16.gmra.mrb[0].mxu0 %v937
        %v973 = vpop.f32.mrb[0].mxu0
        %v974 = vadd.f32 %v922, %v973
        %v975 = vpop.f32.mrb[0].mxu0
        %v976 = vpop.f32.mrb[0].mxu0
        %v977 = vpop.f32.mrb[0].mxu0
        %978 = vdwg.mxu0
        %v979 = vpack.c.bf16 %v974, %v974
        %v980 = vld [vmem:[%s723] sm:$0xf]
        %v981 = vunpack.c.l.bf16 %v980
        %v982 = vmul.f32 %v981, -1e+09
        %vm983 = vcmask 64512
        %v985 = vsel %vm983, %v910, 0
        %v988 = vsel %vm983, %v979, 0
        %990 = vmatprep.subr.bf16.mxu0 0
        %991 = vmatpush1.bf16.xpose.msra.mxu0 %v988
        %992 = vmatprep.subr.bf16.mxu0 0
        %993 = vmatpush1.bf16.xpose.msra.mxu0 0
        %994 = vmatprep.subr.bf16.mxu0 0
        %995 = vmatpush1.bf16.xpose.msra.mxu0 0
        %996 = vmatprep.subr.bf16.mxu0 0
        %997 = vmatpush1.bf16.xpose.msra.mxu0 0
        %998 = vmatprep.subr.bf16.mxu0 0
        %999 = vmatpush1.bf16.xpose.msra.mxu0 0
        %1000 = vmatprep.subr.bf16.mxu0 0
        %1001 = vmatpush1.bf16.xpose.msra.mxu0 0
        %1002 = vmatprep.subr.bf16.mxu0 0
        %1003 = vmatpush1.bf16.xpose.msra.mxu0 0
        %1004 = vmatprep.subr.bf16.mxu0 0
        %1005 = vmatpush1.bf16.xpose.msra.mxu0 0
        %1006 = vmatprep.subr.bf16.mxu0 0
        %1007 = vmatpush1.bf16.xpose.msra.mxu0 0
        %1008 = vmatprep.subr.bf16.mxu0 0
        %1009 = vmatpush1.bf16.xpose.msra.mxu0 0
        %1010 = vmatprep.subr.bf16.mxu0 0
        %1011 = vmatpush1.bf16.xpose.msra.mxu0 0
        %1012 = vmatprep.subr.bf16.mxu0 0
        %1013 = vmatpush1.bf16.xpose.msra.mxu0 0
        %1014 = vmatprep.subr.bf16.mxu0 0
        %1015 = vmatpush1.bf16.xpose.msra.mxu0 0
        %1016 = vmatprep.subr.bf16.mxu0 0
        %1017 = vmatpush1.bf16.xpose.msra.mxu0 0
        %1018 = vmatprep.subr.bf16.mxu0 0
        %1019 = vmatpush1.bf16.xpose.msra.mxu0 0
        %1020 = vmatprep.subr.bf16.mxu0 0
        %1021 = vmatpush1.bf16.xpose.msra.mxu0 0
        %1022 = vmatprep.mubr.bf16.mxu0 0
        %1023 = vmatmul.mubr.bf16.gmra.mrb[0].mxu0 %v985
        %v1024 = vpop.f32.mrb[0].mxu0
        %v1025 = vadd.f32 %v982, %v1024
        %v1026 = vpop.f32.mrb[0].mxu0
        %v1027 = vpop.f32.mrb[0].mxu0
        %v1028 = vpop.f32.mrb[0].mxu0
        %1029 = vdwg.mxu0
        %v1030 = vsel %vm983, %v1025, -inf
        %1031 = vmax.xlane.f32.xlu0 %v1030
        %v1032 = vpop.xlane.xlu0 %1031
        %v1033 = vsub.f32 %v1025, %v1032
        %v1034 = vmul.f32 %v1033, 1.442695
        %v1035 = vpow.pop %v1034
        %v1036 = vsel %vm983, %v1035, 0.0
        %1037 = vadd.xlane.f32.xlu0 %v1036
        %v1038 = vpop.xlane.xlu0 %1037
        %v1039 = vpack.c.bf16 %v1035, %v1035
        %1041 = vrot.lane.b32.xlu0 %v979, 96
        %v1042 = vpop.permute.xlu0 %1041
        %v1044 = vsel %vm983, %v1039, 0
        %vm1046 = vcmask 1043456
        %v1048 = vsel %vm1046, %v1042, 0
        %1050 = vmatprep.subr.bf16.mxu0 0
        %1051 = vmatpush1.bf16.msra.mxu0 %v1048
        %1052 = vmatprep.subr.bf16.mxu0 0
        %1053 = vmatpush1.bf16.msra.mxu0 0
        %1054 = vmatprep.subr.bf16.mxu0 0
        %1055 = vmatpush1.bf16.msra.mxu0 0
        %1056 = vmatprep.subr.bf16.mxu0 0
        %1057 = vmatpush1.bf16.msra.mxu0 0
        %1058 = vmatprep.subr.bf16.mxu0 0
        %1059 = vmatpush1.bf16.msra.mxu0 0
        %1060 = vmatprep.subr.bf16.mxu0 0
        %1061 = vmatpush1.bf16.msra.mxu0 0
        %1062 = vmatprep.subr.bf16.mxu0 0
        %1063 = vmatpush1.bf16.msra.mxu0 0
        %1064 = vmatprep.subr.bf16.mxu0 0
        %1065 = vmatpush1.bf16.msra.mxu0 0
        %1066 = vmatprep.subr.bf16.mxu0 0
        %1067 = vmatpush1.bf16.msra.mxu0 0
        %1068 = vmatprep.subr.bf16.mxu0 0
        %1069 = vmatpush1.bf16.msra.mxu0 0
        %1070 = vmatprep.subr.bf16.mxu0 0
        %1071 = vmatpush1.bf16.msra.mxu0 0
        %1072 = vmatprep.subr.bf16.mxu0 0
        %1073 = vmatpush1.bf16.msra.mxu0 0
        %1074 = vmatprep.subr.bf16.mxu0 0
        %1075 = vmatpush1.bf16.msra.mxu0 0
        %1076 = vmatprep.subr.bf16.mxu0 0
        %1077 = vmatpush1.bf16.msra.mxu0 0
        %1078 = vmatprep.subr.bf16.mxu0 0
        %1079 = vmatpush1.bf16.msra.mxu0 0
        %1080 = vmatprep.subr.bf16.mxu0 0
        %1081 = vmatpush1.bf16.msra.mxu0 0
        %1082 = vmatprep.mubr.bf16.mxu0 0
        %1083 = vmatmul.mubr.bf16.gmra.mrb[0].mxu0 %v1044
        %v1084 = vpop.f32.mrb[0].mxu0
        %v1085 = vadd.f32 0.0, %v1084
        %v1086 = vpop.f32.mrb[0].mxu0
        %v1087 = vpop.f32.mrb[0].mxu0
        %v1088 = vpop.f32.mrb[0].mxu0
        %1089 = vdwg.mxu0
        %v1090 = vrcp.pop %v1038
        %v1091 = vmul.f32 %v1085, %v1090
        %v1092 = vpack.c.bf16 %v1091, %v1091
        %v1093 = vld [vmem:[#allocation14] sm:$0xf]
        %1095 = vrot.lane.b32.xlu0 %v910, 120
        %v1096 = vpop.permute.xlu0 %1095
        %1097 = vrot.lane.b32.xlu0 %v979, 120
        %v1098 = vpop.permute.xlu0 %1097
        %v1100 = vsel %vm983, %v1096, 0
        %v1103 = vsel %vm983, %v1098, 0
        %1105 = vmatprep.subr.bf16.mxu0 0
        %1106 = vmatpush1.bf16.xpose.msra.mxu0 %v1103
        %1107 = vmatprep.subr.bf16.mxu0 0
        %1108 = vmatpush1.bf16.xpose.msra.mxu0 0
        %1109 = vmatprep.subr.bf16.mxu0 0
        %1110 = vmatpush1.bf16.xpose.msra.mxu0 0
        %1111 = vmatprep.subr.bf16.mxu0 0
        %1112 = vmatpush1.bf16.xpose.msra.mxu0 0
        %1113 = vmatprep.subr.bf16.mxu0 0
        %1114 = vmatpush1.bf16.xpose.msra.mxu0 0
        %1115 = vmatprep.subr.bf16.mxu0 0
        %1116 = vmatpush1.bf16.xpose.msra.mxu0 0
        %1117 = vmatprep.subr.bf16.mxu0 0
        %1118 = vmatpush1.bf16.xpose.msra.mxu0 0
        %1119 = vmatprep.subr.bf16.mxu0 0
        %1120 = vmatpush1.bf16.xpose.msra.mxu0 0
        %1121 = vmatprep.subr.bf16.mxu0 0
        %1122 = vmatpush1.bf16.xpose.msra.mxu0 0
        %1123 = vmatprep.subr.bf16.mxu0 0
        %1124 = vmatpush1.bf16.xpose.msra.mxu0 0
        %1125 = vmatprep.subr.bf16.mxu0 0
        %1126 = vmatpush1.bf16.xpose.msra.mxu0 0
        %1127 = vmatprep.subr.bf16.mxu0 0
        %1128 = vmatpush1.bf16.xpose.msra.mxu0 0
        %1129 = vmatprep.subr.bf16.mxu0 0
        %1130 = vmatpush1.bf16.xpose.msra.mxu0 0
        %1131 = vmatprep.subr.bf16.mxu0 0
        %1132 = vmatpush1.bf16.xpose.msra.mxu0 0
        %1133 = vmatprep.subr.bf16.mxu0 0
        %1134 = vmatpush1.bf16.xpose.msra.mxu0 0
        %1135 = vmatprep.subr.bf16.mxu0 0
        %1136 = vmatpush1.bf16.xpose.msra.mxu0 0
        %1137 = vmatprep.mubr.bf16.mxu0 0
        %1138 = vmatmul.mubr.bf16.gmra.mrb[0].mxu0 %v1100
        %v1139 = vpop.f32.mrb[0].mxu0
        %v1140 = vadd.f32 %v982, %v1139
        %v1141 = vpop.f32.mrb[0].mxu0
        %v1142 = vpop.f32.mrb[0].mxu0
        %v1143 = vpop.f32.mrb[0].mxu0
        %1144 = vdwg.mxu0
        %v1145 = vsel %vm983, %v1140, -inf
        %1146 = vmax.xlane.f32.xlu0 %v1145
        %v1147 = vpop.xlane.xlu0 %1146
        %v1148 = vsub.f32 %v1140, %v1147
        %v1149 = vmul.f32 %v1148, 1.442695
        %v1150 = vpow.pop %v1149
        %v1151 = vsel %vm983, %v1150, 0.0
        %1152 = vadd.xlane.f32.xlu0 %v1151
        %v1153 = vpop.xlane.xlu0 %1152
        %v1154 = vpack.c.bf16 %v1150, %v1150
        %1155 = vrot.lane.b32.xlu0 %v979, 88
        %v1156 = vpop.permute.xlu0 %1155
        %v1158 = vsel %vm983, %v1154, 0
        %v1161 = vsel %vm1046, %v1156, 0
        %1163 = vmatprep.subr.bf16.mxu0 0
        %1164 = vmatpush1.bf16.msra.mxu0 %v1161
        %1165 = vmatprep.subr.bf16.mxu0 0
        %1166 = vmatpush1.bf16.msra.mxu0 0
        %1167 = vmatprep.subr.bf16.mxu0 0
        %1168 = vmatpush1.bf16.msra.mxu0 0
        %1169 = vmatprep.subr.bf16.mxu0 0
        %1170 = vmatpush1.bf16.msra.mxu0 0
        %1171 = vmatprep.subr.bf16.mxu0 0
        %1172 = vmatpush1.bf16.msra.mxu0 0
        %1173 = vmatprep.subr.bf16.mxu0 0
        %1174 = vmatpush1.bf16.msra.mxu0 0
        %1175 = vmatprep.subr.bf16.mxu0 0
        %1176 = vmatpush1.bf16.msra.mxu0 0
        %1177 = vmatprep.subr.bf16.mxu0 0
        %1178 = vmatpush1.bf16.msra.mxu0 0
        %1179 = vmatprep.subr.bf16.mxu0 0
        %1180 = vmatpush1.bf16.msra.mxu0 0
        %1181 = vmatprep.subr.bf16.mxu0 0
        %1182 = vmatpush1.bf16.msra.mxu0 0
        %1183 = vmatprep.subr.bf16.mxu0 0
        %1184 = vmatpush1.bf16.msra.mxu0 0
        %1185 = vmatprep.subr.bf16.mxu0 0
        %1186 = vmatpush1.bf16.msra.mxu0 0
        %1187 = vmatprep.subr.bf16.mxu0 0
        %1188 = vmatpush1.bf16.msra.mxu0 0
        %1189 = vmatprep.subr.bf16.mxu0 0
        %1190 = vmatpush1.bf16.msra.mxu0 0
        %1191 = vmatprep.subr.bf16.mxu0 0
        %1192 = vmatpush1.bf16.msra.mxu0 0
        %1193 = vmatprep.subr.bf16.mxu0 0
        %1194 = vmatpush1.bf16.msra.mxu0 0
        %1195 = vmatprep.mubr.bf16.mxu0 0
        %1196 = vmatmul.mubr.bf16.gmra.mrb[0].mxu0 %v1158
        %v1197 = vpop.f32.mrb[0].mxu0
        %v1198 = vadd.f32 0.0, %v1197
        %v1199 = vpop.f32.mrb[0].mxu0
        %v1200 = vpop.f32.mrb[0].mxu0
        %v1201 = vpop.f32.mrb[0].mxu0
        %1202 = vdwg.mxu0
        %v1203 = vrcp.pop %v1153
        %v1204 = vmul.f32 %v1198, %v1203
        %v1205 = vpack.c.bf16 %v1204, %v1204
        %s1206 = scalar_lea.vmem [#allocation14], 4
        %v1207 = vld [vmem:[%s1206] sm:$0xf]
        %v1209 = vsel %vm983, %v1205, 0
        %v1212 = vsel %vm1046, %v1207, 0
        %1214 = vmatprep.subr.bf16.mxu0 0
        %1215 = vmatpush1.bf16.msra.mxu0 %v1212
        %1216 = vmatprep.subr.bf16.mxu0 0
        %1217 = vmatpush1.bf16.msra.mxu0 0
        %1218 = vmatprep.subr.bf16.mxu0 0
        %1219 = vmatpush1.bf16.msra.mxu0 0
        %1220 = vmatprep.subr.bf16.mxu0 0
        %1221 = vmatpush1.bf16.msra.mxu0 0
        %1222 = vmatprep.subr.bf16.mxu0 0
        %1223 = vmatpush1.bf16.msra.mxu0 0
        %1224 = vmatprep.subr.bf16.mxu0 0
        %1225 = vmatpush1.bf16.msra.mxu0 0
        %1226 = vmatprep.subr.bf16.mxu0 0
        %1227 = vmatpush1.bf16.msra.mxu0 0
        %1228 = vmatprep.subr.bf16.mxu0 0
        %1229 = vmatpush1.bf16.msra.mxu0 0
        %1230 = vmatprep.subr.bf16.mxu0 0
        %1231 = vmatpush1.bf16.msra.mxu0 0
        %1232 = vmatprep.subr.bf16.mxu0 0
        %1233 = vmatpush1.bf16.msra.mxu0 0
        %1234 = vmatprep.subr.bf16.mxu0 0
        %1235 = vmatpush1.bf16.msra.mxu0 0
        %1236 = vmatprep.subr.bf16.mxu0 0
        %1237 = vmatpush1.bf16.msra.mxu0 0
        %1238 = vmatprep.subr.bf16.mxu0 0
        %1239 = vmatpush1.bf16.msra.mxu0 0
        %1240 = vmatprep.subr.bf16.mxu0 0
        %1241 = vmatpush1.bf16.msra.mxu0 0
        %1242 = vmatprep.subr.bf16.mxu0 0
        %1243 = vmatpush1.bf16.msra.mxu0 0
        %1244 = vmatprep.subr.bf16.mxu0 0
        %1245 = vmatpush1.bf16.msra.mxu0 0
        %1246 = vmatprep.mubr.bf16.mxu0 0
        %1247 = vmatmul.mubr.bf16.gmra.mrb[0].mxu0 %v1209
        %v1248 = vpop.f32.mrb[0].mxu0
        %v1249 = vadd.f32 0.0, %v1248
        %v1250 = vpop.f32.mrb[0].mxu0
        %v1251 = vpop.f32.mrb[0].mxu0
        %v1252 = vpop.f32.mrb[0].mxu0
        %1253 = vdwg.mxu0
        %v1255 = vsel %vm983, %v1092, 0
        %v1258 = vsel %vm1046, %v1093, 0
        %1260 = vmatprep.subr.bf16.mxu0 0
        %1261 = vmatpush1.bf16.msra.mxu0 %v1258
        %1262 = vmatprep.subr.bf16.mxu0 0
        %1263 = vmatpush1.bf16.msra.mxu0 0
        %1264 = vmatprep.subr.bf16.mxu0 0
        %1265 = vmatpush1.bf16.msra.mxu0 0
        %1266 = vmatprep.subr.bf16.mxu0 0
        %1267 = vmatpush1.bf16.msra.mxu0 0
        %1268 = vmatprep.subr.bf16.mxu0 0
        %1269 = vmatpush1.bf16.msra.mxu0 0
        %1270 = vmatprep.subr.bf16.mxu0 0
        %1271 = vmatpush1.bf16.msra.mxu0 0
        %1272 = vmatprep.subr.bf16.mxu0 0
        %1273 = vmatpush1.bf16.msra.mxu0 0
        %1274 = vmatprep.subr.bf16.mxu0 0
        %1275 = vmatpush1.bf16.msra.mxu0 0
        %1276 = vmatprep.subr.bf16.mxu0 0
        %1277 = vmatpush1.bf16.msra.mxu0 0
        %1278 = vmatprep.subr.bf16.mxu0 0
        %1279 = vmatpush1.bf16.msra.mxu0 0
        %1280 = vmatprep.subr.bf16.mxu0 0
        %1281 = vmatpush1.bf16.msra.mxu0 0
        %1282 = vmatprep.subr.bf16.mxu0 0
        %1283 = vmatpush1.bf16.msra.mxu0 0
        %1284 = vmatprep.subr.bf16.mxu0 0
        %1285 = vmatpush1.bf16.msra.mxu0 0
        %1286 = vmatprep.subr.bf16.mxu0 0
        %1287 = vmatpush1.bf16.msra.mxu0 0
        %1288 = vmatprep.subr.bf16.mxu0 0
        %1289 = vmatpush1.bf16.msra.mxu0 0
        %1290 = vmatprep.subr.bf16.mxu0 0
        %1291 = vmatpush1.bf16.msra.mxu0 0
        %1292 = vmatprep.mubr.bf16.mxu0 0
        %1293 = vmatmul.mubr.bf16.gmra.mrb[0].mxu0 %v1255
        %v1294 = vpop.f32.mrb[0].mxu0
        %v1295 = vadd.f32 %v1249, %v1294
        %v1296 = vpop.f32.mrb[0].mxu0
        %v1297 = vpop.f32.mrb[0].mxu0
        %v1298 = vpop.f32.mrb[0].mxu0
        %1299 = vdwg.mxu0
        %1300 = vrot.lane.b32.xlu0 %v910, 112
        %v1301 = vpop.permute.xlu0 %1300
        %1302 = vrot.lane.b32.xlu0 %v979, 112
        %v1303 = vpop.permute.xlu0 %1302
        %v1305 = vsel %vm983, %v1301, 0
        %v1308 = vsel %vm983, %v1303, 0
        %1310 = vmatprep.subr.bf16.mxu0 0
        %1311 = vmatpush1.bf16.xpose.msra.mxu0 %v1308
        %1312 = vmatprep.subr.bf16.mxu0 0
        %1313 = vmatpush1.bf16.xpose.msra.mxu0 0
        %1314 = vmatprep.subr.bf16.mxu0 0
        %1315 = vmatpush1.bf16.xpose.msra.mxu0 0
        %1316 = vmatprep.subr.bf16.mxu0 0
        %1317 = vmatpush1.bf16.xpose.msra.mxu0 0
        %1318 = vmatprep.subr.bf16.mxu0 0
        %1319 = vmatpush1.bf16.xpose.msra.mxu0 0
        %1320 = vmatprep.subr.bf16.mxu0 0
        %1321 = vmatpush1.bf16.xpose.msra.mxu0 0
        %1322 = vmatprep.subr.bf16.mxu0 0
        %1323 = vmatpush1.bf16.xpose.msra.mxu0 0
        %1324 = vmatprep.subr.bf16.mxu0 0
        %1325 = vmatpush1.bf16.xpose.msra.mxu0 0
        %1326 = vmatprep.subr.bf16.mxu0 0
        %1327 = vmatpush1.bf16.xpose.msra.mxu0 0
        %1328 = vmatprep.subr.bf16.mxu0 0
        %1329 = vmatpush1.bf16.xpose.msra.mxu0 0
        %1330 = vmatprep.subr.bf16.mxu0 0
        %1331 = vmatpush1.bf16.xpose.msra.mxu0 0
        %1332 = vmatprep.subr.bf16.mxu0 0
        %1333 = vmatpush1.bf16.xpose.msra.mxu0 0
        %1334 = vmatprep.subr.bf16.mxu0 0
        %1335 = vmatpush1.bf16.xpose.msra.mxu0 0
        %1336 = vmatprep.subr.bf16.mxu0 0
        %1337 = vmatpush1.bf16.xpose.msra.mxu0 0
        %1338 = vmatprep.subr.bf16.mxu0 0
        %1339 = vmatpush1.bf16.xpose.msra.mxu0 0
        %1340 = vmatprep.subr.bf16.mxu0 0
        %1341 = vmatpush1.bf16.xpose.msra.mxu0 0
        %1342 = vmatprep.mubr.bf16.mxu0 0
        %1343 = vmatmul.mubr.bf16.gmra.mrb[0].mxu0 %v1305
        %v1344 = vpop.f32.mrb[0].mxu0
        %v1345 = vadd.f32 %v982, %v1344
        %v1346 = vpop.f32.mrb[0].mxu0
        %v1347 = vpop.f32.mrb[0].mxu0
        %v1348 = vpop.f32.mrb[0].mxu0
        %1349 = vdwg.mxu0
        %v1350 = vsel %vm983, %v1345, -inf
        %1351 = vmax.xlane.f32.xlu0 %v1350
        %v1352 = vpop.xlane.xlu0 %1351
        %v1353 = vsub.f32 %v1345, %v1352
        %v1354 = vmul.f32 %v1353, 1.442695
        %v1355 = vpow.pop %v1354
        %v1356 = vsel %vm983, %v1355, 0.0
        %1357 = vadd.xlane.f32.xlu0 %v1356
        %v1358 = vpop.xlane.xlu0 %1357
        %v1359 = vpack.c.bf16 %v1355, %v1355
        %1360 = vrot.lane.b32.xlu0 %v979, 80
        %v1361 = vpop.permute.xlu0 %1360
        %v1363 = vsel %vm983, %v1359, 0
        %v1366 = vsel %vm1046, %v1361, 0
        %1368 = vmatprep.subr.bf16.mxu0 0
        %1369 = vmatpush1.bf16.msra.mxu0 %v1366
        %1370 = vmatprep.subr.bf16.mxu0 0
        %1371 = vmatpush1.bf16.msra.mxu0 0
        %1372 = vmatprep.subr.bf16.mxu0 0
        %1373 = vmatpush1.bf16.msra.mxu0 0
        %1374 = vmatprep.subr.bf16.mxu0 0
        %1375 = vmatpush1.bf16.msra.mxu0 0
        %1376 = vmatprep.subr.bf16.mxu0 0
        %1377 = vmatpush1.bf16.msra.mxu0 0
        %1378 = vmatprep.subr.bf16.mxu0 0
        %1379 = vmatpush1.bf16.msra.mxu0 0
        %1380 = vmatprep.subr.bf16.mxu0 0
        %1381 = vmatpush1.bf16.msra.mxu0 0
        %1382 = vmatprep.subr.bf16.mxu0 0
        %1383 = vmatpush1.bf16.msra.mxu0 0
        %1384 = vmatprep.subr.bf16.mxu0 0
        %1385 = vmatpush1.bf16.msra.mxu0 0
        %1386 = vmatprep.subr.bf16.mxu0 0
        %1387 = vmatpush1.bf16.msra.mxu0 0
        %1388 = vmatprep.subr.bf16.mxu0 0
        %1389 = vmatpush1.bf16.msra.mxu0 0
        %1390 = vmatprep.subr.bf16.mxu0 0
        %1391 = vmatpush1.bf16.msra.mxu0 0
        %1392 = vmatprep.subr.bf16.mxu0 0
        %1393 = vmatpush1.bf16.msra.mxu0 0
        %1394 = vmatprep.subr.bf16.mxu0 0
        %1395 = vmatpush1.bf16.msra.mxu0 0
        %1396 = vmatprep.subr.bf16.mxu0 0
        %1397 = vmatpush1.bf16.msra.mxu0 0
        %1398 = vmatprep.subr.bf16.mxu0 0
        %1399 = vmatpush1.bf16.msra.mxu0 0
        %1400 = vmatprep.mubr.bf16.mxu0 0
        %1401 = vmatmul.mubr.bf16.gmra.mrb[0].mxu0 %v1363
        %v1402 = vpop.f32.mrb[0].mxu0
        %v1403 = vadd.f32 0.0, %v1402
        %v1404 = vpop.f32.mrb[0].mxu0
        %v1405 = vpop.f32.mrb[0].mxu0
        %v1406 = vpop.f32.mrb[0].mxu0
        %1407 = vdwg.mxu0
        %v1408 = vrcp.pop %v1358
        %v1409 = vmul.f32 %v1403, %v1408
        %v1410 = vpack.c.bf16 %v1409, %v1409
        %s1411 = scalar_lea.vmem [#allocation14], 8
        %v1412 = vld [vmem:[%s1411] sm:$0xf]
        %v1414 = vsel %vm983, %v1410, 0
        %v1417 = vsel %vm1046, %v1412, 0
        %1419 = vmatprep.subr.bf16.mxu0 0
        %1420 = vmatpush1.bf16.msra.mxu0 %v1417
        %1421 = vmatprep.subr.bf16.mxu0 0
        %1422 = vmatpush1.bf16.msra.mxu0 0
        %1423 = vmatprep.subr.bf16.mxu0 0
        %1424 = vmatpush1.bf16.msra.mxu0 0
        %1425 = vmatprep.subr.bf16.mxu0 0
        %1426 = vmatpush1.bf16.msra.mxu0 0
        %1427 = vmatprep.subr.bf16.mxu0 0
        %1428 = vmatpush1.bf16.msra.mxu0 0
        %1429 = vmatprep.subr.bf16.mxu0 0
        %1430 = vmatpush1.bf16.msra.mxu0 0
        %1431 = vmatprep.subr.bf16.mxu0 0
        %1432 = vmatpush1.bf16.msra.mxu0 0
        %1433 = vmatprep.subr.bf16.mxu0 0
        %1434 = vmatpush1.bf16.msra.mxu0 0
        %1435 = vmatprep.subr.bf16.mxu0 0
        %1436 = vmatpush1.bf16.msra.mxu0 0
        %1437 = vmatprep.subr.bf16.mxu0 0
        %1438 = vmatpush1.bf16.msra.mxu0 0
        %1439 = vmatprep.subr.bf16.mxu0 0
        %1440 = vmatpush1.bf16.msra.mxu0 0
        %1441 = vmatprep.subr.bf16.mxu0 0
        %1442 = vmatpush1.bf16.msra.mxu0 0
        %1443 = vmatprep.subr.bf16.mxu0 0
        %1444 = vmatpush1.bf16.msra.mxu0 0
        %1445 = vmatprep.subr.bf16.mxu0 0
        %1446 = vmatpush1.bf16.msra.mxu0 0
        %1447 = vmatprep.subr.bf16.mxu0 0
        %1448 = vmatpush1.bf16.msra.mxu0 0
        %1449 = vmatprep.subr.bf16.mxu0 0
        %1450 = vmatpush1.bf16.msra.mxu0 0
        %1451 = vmatprep.mubr.bf16.mxu0 0
        %1452 = vmatmul.mubr.bf16.gmra.mrb[0].mxu0 %v1414
        %v1453 = vpop.f32.mrb[0].mxu0
        %v1454 = vadd.f32 0.0, %v1453
        %v1455 = vpop.f32.mrb[0].mxu0
        %v1456 = vpop.f32.mrb[0].mxu0
        %v1457 = vpop.f32.mrb[0].mxu0
        %1458 = vdwg.mxu0
        %v1459 = vadd.f32 %v1295, %v1454
        %1460 = vrot.lane.b32.xlu0 %v910, 104
        %v1461 = vpop.permute.xlu0 %1460
        %1462 = vrot.lane.b32.xlu0 %v979, 104
        %v1463 = vpop.permute.xlu0 %1462
        %v1465 = vsel %vm983, %v1461, 0
        %v1468 = vsel %vm983, %v1463, 0
        %1470 = vmatprep.subr.bf16.mxu0 0
        %1471 = vmatpush1.bf16.xpose.msra.mxu0 %v1468
        %1472 = vmatprep.subr.bf16.mxu0 0
        %1473 = vmatpush1.bf16.xpose.msra.mxu0 0
        %1474 = vmatprep.subr.bf16.mxu0 0
        %1475 = vmatpush1.bf16.xpose.msra.mxu0 0
        %1476 = vmatprep.subr.bf16.mxu0 0
        %1477 = vmatpush1.bf16.xpose.msra.mxu0 0
        %1478 = vmatprep.subr.bf16.mxu0 0
        %1479 = vmatpush1.bf16.xpose.msra.mxu0 0
        %1480 = vmatprep.subr.bf16.mxu0 0
        %1481 = vmatpush1.bf16.xpose.msra.mxu0 0
        %1482 = vmatprep.subr.bf16.mxu0 0
        %1483 = vmatpush1.bf16.xpose.msra.mxu0 0
        %1484 = vmatprep.subr.bf16.mxu0 0
        %1485 = vmatpush1.bf16.xpose.msra.mxu0 0
        %1486 = vmatprep.subr.bf16.mxu0 0
        %1487 = vmatpush1.bf16.xpose.msra.mxu0 0
        %1488 = vmatprep.subr.bf16.mxu0 0
        %1489 = vmatpush1.bf16.xpose.msra.mxu0 0
        %1490 = vmatprep.subr.bf16.mxu0 0
        %1491 = vmatpush1.bf16.xpose.msra.mxu0 0
        %1492 = vmatprep.subr.bf16.mxu0 0
        %1493 = vmatpush1.bf16.xpose.msra.mxu0 0
        %1494 = vmatprep.subr.bf16.mxu0 0
        %1495 = vmatpush1.bf16.xpose.msra.mxu0 0
        %1496 = vmatprep.subr.bf16.mxu0 0
        %1497 = vmatpush1.bf16.xpose.msra.mxu0 0
        %1498 = vmatprep.subr.bf16.mxu0 0
        %1499 = vmatpush1.bf16.xpose.msra.mxu0 0
        %1500 = vmatprep.subr.bf16.mxu0 0
        %1501 = vmatpush1.bf16.xpose.msra.mxu0 0
        %1502 = vmatprep.mubr.bf16.mxu0 0
        %1503 = vmatmul.mubr.bf16.gmra.mrb[0].mxu0 %v1465
        %v1504 = vpop.f32.mrb[0].mxu0
        %v1505 = vadd.f32 %v982, %v1504
        %v1506 = vpop.f32.mrb[0].mxu0
        %v1507 = vpop.f32.mrb[0].mxu0
        %v1508 = vpop.f32.mrb[0].mxu0
        %1509 = vdwg.mxu0
        %v1510 = vsel %vm983, %v1505, -inf
        %1511 = vmax.xlane.f32.xlu0 %v1510
        %v1512 = vpop.xlane.xlu0 %1511
        %v1513 = vsub.f32 %v1505, %v1512
        %v1514 = vmul.f32 %v1513, 1.442695
        %v1515 = vpow.pop %v1514
        %v1516 = vsel %vm983, %v1515, 0.0
        %1517 = vadd.xlane.f32.xlu0 %v1516
        %v1518 = vpop.xlane.xlu0 %1517
        %v1519 = vpack.c.bf16 %v1515, %v1515
        %1520 = vrot.lane.b32.xlu0 %v979, 72
        %v1521 = vpop.permute.xlu0 %1520
        %v1523 = vsel %vm983, %v1519, 0
        %v1526 = vsel %vm1046, %v1521, 0
        %1528 = vmatprep.subr.bf16.mxu0 0
        %1529 = vmatpush1.bf16.msra.mxu0 %v1526
        %1530 = vmatprep.subr.bf16.mxu0 0
        %1531 = vmatpush1.bf16.msra.mxu0 0
        %1532 = vmatprep.subr.bf16.mxu0 0
        %1533 = vmatpush1.bf16.msra.mxu0 0
        %1534 = vmatprep.subr.bf16.mxu0 0
        %1535 = vmatpush1.bf16.msra.mxu0 0
        %1536 = vmatprep.subr.bf16.mxu0 0
        %1537 = vmatpush1.bf16.msra.mxu0 0
        %1538 = vmatprep.subr.bf16.mxu0 0
        %1539 = vmatpush1.bf16.msra.mxu0 0
        %1540 = vmatprep.subr.bf16.mxu0 0
        %1541 = vmatpush1.bf16.msra.mxu0 0
        %1542 = vmatprep.subr.bf16.mxu0 0
        %1543 = vmatpush1.bf16.msra.mxu0 0
        %1544 = vmatprep.subr.bf16.mxu0 0
        %1545 = vmatpush1.bf16.msra.mxu0 0
        %1546 = vmatprep.subr.bf16.mxu0 0
        %1547 = vmatpush1.bf16.msra.mxu0 0
        %1548 = vmatprep.subr.bf16.mxu0 0
        %1549 = vmatpush1.bf16.msra.mxu0 0
        %1550 = vmatprep.subr.bf16.mxu0 0
        %1551 = vmatpush1.bf16.msra.mxu0 0
        %1552 = vmatprep.subr.bf16.mxu0 0
        %1553 = vmatpush1.bf16.msra.mxu0 0
        %1554 = vmatprep.subr.bf16.mxu0 0
        %1555 = vmatpush1.bf16.msra.mxu0 0
        %1556 = vmatprep.subr.bf16.mxu0 0
        %1557 = vmatpush1.bf16.msra.mxu0 0
        %1558 = vmatprep.subr.bf16.mxu0 0
        %1559 = vmatpush1.bf16.msra.mxu0 0
        %1560 = vmatprep.mubr.bf16.mxu0 0
        %1561 = vmatmul.mubr.bf16.gmra.mrb[0].mxu0 %v1523
        %v1562 = vpop.f32.mrb[0].mxu0
        %v1563 = vadd.f32 0.0, %v1562
        %v1564 = vpop.f32.mrb[0].mxu0
        %v1565 = vpop.f32.mrb[0].mxu0
        %v1566 = vpop.f32.mrb[0].mxu0
        %1567 = vdwg.mxu0
        %v1568 = vrcp.pop %v1518
        %v1569 = vmul.f32 %v1563, %v1568
        %v1570 = vpack.c.bf16 %v1569, %v1569
        %s1571 = scalar_lea.vmem [#allocation14], 12
        %v1572 = vld [vmem:[%s1571] sm:$0xf]
        %v1574 = vsel %vm983, %v1570, 0
        %v1577 = vsel %vm1046, %v1572, 0
        %1579 = vmatprep.subr.bf16.mxu0 0
        %1580 = vmatpush1.bf16.msra.mxu0 %v1577
        %1581 = vmatprep.subr.bf16.mxu0 0
        %1582 = vmatpush1.bf16.msra.mxu0 0
        %1583 = vmatprep.subr.bf16.mxu0 0
        %1584 = vmatpush1.bf16.msra.mxu0 0
        %1585 = vmatprep.subr.bf16.mxu0 0
        %1586 = vmatpush1.bf16.msra.mxu0 0
        %1587 = vmatprep.subr.bf16.mxu0 0
        %1588 = vmatpush1.bf16.msra.mxu0 0
        %1589 = vmatprep.subr.bf16.mxu0 0
        %1590 = vmatpush1.bf16.msra.mxu0 0
        %1591 = vmatprep.subr.bf16.mxu0 0
        %1592 = vmatpush1.bf16.msra.mxu0 0
        %1593 = vmatprep.subr.bf16.mxu0 0
        %1594 = vmatpush1.bf16.msra.mxu0 0
        %1595 = vmatprep.subr.bf16.mxu0 0
        %1596 = vmatpush1.bf16.msra.mxu0 0
        %1597 = vmatprep.subr.bf16.mxu0 0
        %1598 = vmatpush1.bf16.msra.mxu0 0
        %1599 = vmatprep.subr.bf16.mxu0 0
        %1600 = vmatpush1.bf16.msra.mxu0 0
        %1601 = vmatprep.subr.bf16.mxu0 0
        %1602 = vmatpush1.bf16.msra.mxu0 0
        %1603 = vmatprep.subr.bf16.mxu0 0
        %1604 = vmatpush1.bf16.msra.mxu0 0
        %1605 = vmatprep.subr.bf16.mxu0 0
        %1606 = vmatpush1.bf16.msra.mxu0 0
        %1607 = vmatprep.subr.bf16.mxu0 0
        %1608 = vmatpush1.bf16.msra.mxu0 0
        %1609 = vmatprep.subr.bf16.mxu0 0
        %1610 = vmatpush1.bf16.msra.mxu0 0
        %1611 = vmatprep.mubr.bf16.mxu0 0
        %1612 = vmatmul.mubr.bf16.gmra.mrb[0].mxu0 %v1574
        %v1613 = vpop.f32.mrb[0].mxu0
        %v1614 = vadd.f32 0.0, %v1613
        %v1615 = vpop.f32.mrb[0].mxu0
        %v1616 = vpop.f32.mrb[0].mxu0
        %v1617 = vpop.f32.mrb[0].mxu0
        %1618 = vdwg.mxu0
        %v1619 = vadd.f32 %v1459, %v1614
        %v1620 = vld [vmem:[#allocation16] sm:$0x1]
        %v1622 = vlaneseq
        %v1623 = vshrl.u32 %v1622, 7
        %v1624 = vsub.s32 0, %v1623
        %v1625 = vrot.slane %v1620, %v1624
        %v1627 = vadd.f32 %v1619, %v1625
        %v1628 = vadd.f32 %v841, %v1627
        %v1629 = vld [vmem:[#allocation17] sm:$0x1]
        %v1630 = vld [vmem:[#allocation19] sm:$0x1]
        %v1631 = vsel %vm866, %v1628, 0.0
        %1632 = vadd.xlane.f32.xlu0 %v1631
        %v1633 = vpop.xlane.xlu0 %1632
        %v1634 = vrcp.pop 32.0
        %v1635 = vmul.f32 %v1633, %v1634
        %v1636 = vsub.f32 %v1628, %v1635
        %v1637 = vmul.f32 %v1636, %v1636
        %v1638 = vsel %vm866, %v1637, 0.0
        %1639 = vadd.xlane.f32.xlu0 %v1638
        %v1640 = vpop.xlane.xlu0 %1639
        %v1641 = vmul.f32 %v1640, %v1634
        %v1642 = vadd.f32 %v1641, 1e-05
        %v1643 = vrsqrt.pop %v1642
        %v1644 = vmul.f32 %v1636, %v1643
        %v1646 = vlaneseq
        %v1647 = vshrl.u32 %v1646, 7
        %v1648 = vsub.s32 0, %v1647
        %v1649 = vrot.slane %v1629, %v1648
        %v1651 = vmul.f32 %v1644, %v1649
        %v1653 = vlaneseq
        %v1654 = vshrl.u32 %v1653, 7
        %v1655 = vsub.s32 0, %v1654
        %v1656 = vrot.slane %v1630, %v1655
        %v1658 = vadd.f32 %v1651, %v1656
        %v1659 = vpack.c.bf16 %v1658, %v1658
        %v1660 = vld [vmem:[#allocation20] sm:$0xf]
        %v1661 = vld [vmem:[#allocation20 + $0x4] sm:$0xf]
        %v1662 = vld [vmem:[#allocation20 + $0x8] sm:$0xf]
        %v1663 = vld [vmem:[#allocation20 + $0xc] sm:$0xf]
        %v1664 = vld [vmem:[#allocation22] sm:$0x1]
        %v1666 = vlaneseq
        %v1667 = vshrl.u32 %v1666, 7
        %v1668 = vsub.s32 0, %v1667
        %v1669 = vrot.slane %v1664, %v1668
        %v1675 = vunpack.c.l.b16 %v1660
        %v1676 = vunpack.c.l.b16 %v1661
        %v1677 = vunpack.c.l.b16 %v1662
        %v1678 = vunpack.c.l.b16 %v1663
        %v1679 = vpack.c.b16 %v1676, %v1675
        %v1680 = vpack.c.b16 %v1678, %v1677
        %v1684 = vsel %vm866, %v1659, 0
        %1686 = vmatprep.subr.bf16.mxu0 0
        %1687 = vmatpush1.bf16.msra.mxu0 %v1679
        %1688 = vmatprep.subr.bf16.mxu0 0
        %1689 = vmatpush1.bf16.msra.mxu0 %v1680
        %1690 = vmatprep.subr.bf16.mxu0 0
        %1691 = vmatpush1.bf16.msra.mxu0 0
        %1692 = vmatprep.subr.bf16.mxu0 0
        %1693 = vmatpush1.bf16.msra.mxu0 0
        %1694 = vmatprep.subr.bf16.mxu0 0
        %1695 = vmatpush1.bf16.msra.mxu0 0
        %1696 = vmatprep.subr.bf16.mxu0 0
        %1697 = vmatpush1.bf16.msra.mxu0 0
        %1698 = vmatprep.subr.bf16.mxu0 0
        %1699 = vmatpush1.bf16.msra.mxu0 0
        %1700 = vmatprep.subr.bf16.mxu0 0
        %1701 = vmatpush1.bf16.msra.mxu0 0
        %1702 = vmatprep.subr.bf16.mxu0 0
        %1703 = vmatpush1.bf16.msra.mxu0 0
        %1704 = vmatprep.subr.bf16.mxu0 0
        %1705 = vmatpush1.bf16.msra.mxu0 0
        %1706 = vmatprep.subr.bf16.mxu0 0
        %1707 = vmatpush1.bf16.msra.mxu0 0
        %1708 = vmatprep.subr.bf16.mxu0 0
        %1709 = vmatpush1.bf16.msra.mxu0 0
        %1710 = vmatprep.subr.bf16.mxu0 0
        %1711 = vmatpush1.bf16.msra.mxu0 0
        %1712 = vmatprep.subr.bf16.mxu0 0
        %1713 = vmatpush1.bf16.msra.mxu0 0
        %1714 = vmatprep.subr.bf16.mxu0 0
        %1715 = vmatpush1.bf16.msra.mxu0 0
        %1716 = vmatprep.subr.bf16.mxu0 0
        %1717 = vmatpush1.bf16.msra.mxu0 0
        %1718 = vmatprep.mubr.bf16.mxu0 0
        %1719 = vmatmul.mubr.bf16.gmra.mrb[0].mxu0 %v1684
        %v1720 = vpop.f32.mrb[0].mxu0
        %v1721 = vadd.f32 %v1669, %v1720
        %v1722 = vpop.f32.mrb[0].mxu0
        %v1723 = vpop.f32.mrb[0].mxu0
        %v1724 = vpop.f32.mrb[0].mxu0
        %1725 = vdwg.mxu0
        %v1726 = vmax.f32 %v1721, 0.0
        %v1727 = vpack.c.bf16 %v1726, %v1726
        %v1728 = vld [vmem:[#allocation23] sm:$0xf]
        %v1729 = vld [vmem:[#allocation23 + $0x4] sm:$0xf]
        %v1730 = vld [vmem:[#allocation23 + $0x8] sm:$0xf]
        %v1731 = vld [vmem:[#allocation23 + $0xc] sm:$0xf]
        %v1732 = vld [vmem:[#allocation23 + $0x10] sm:$0xf]
        %v1733 = vld [vmem:[#allocation23 + $0x14] sm:$0xf]
        %v1734 = vld [vmem:[#allocation23 + $0x18] sm:$0xf]
        %v1735 = vld [vmem:[#allocation23 + $0x1c] sm:$0xf]
        %v1736 = vld [vmem:[#allocation25] sm:$0x1]
        %v1738 = vlaneseq
        %v1739 = vshrl.u32 %v1738, 7
        %v1740 = vsub.s32 0, %v1739
        %v1741 = vrot.slane %v1736, %v1740
        %v1751 = vunpack.c.l.b16 %v1728
        %v1752 = vunpack.c.l.b16 %v1729
        %v1753 = vunpack.c.l.b16 %v1730
        %v1754 = vunpack.c.l.b16 %v1731
        %v1755 = vunpack.c.l.b16 %v1732
        %v1756 = vunpack.c.l.b16 %v1733
        %v1757 = vunpack.c.l.b16 %v1734
        %v1758 = vunpack.c.l.b16 %v1735
        %v1759 = vpack.c.b16 %v1752, %v1751
        %v1760 = vpack.c.b16 %v1754, %v1753
        %v1761 = vpack.c.b16 %v1756, %v1755
        %v1762 = vpack.c.b16 %v1758, %v1757
        %vm1767 = vcmask 523264
        %v1769 = vsel %vm1767, %v1727, 0
        %1771 = vmatprep.subr.bf16.mxu0 0
        %1772 = vmatpush1.bf16.msra.mxu0 %v1759
        %1773 = vmatprep.subr.bf16.mxu0 0
        %1774 = vmatpush1.bf16.msra.mxu0 %v1760
        %1775 = vmatprep.subr.bf16.mxu0 0
        %1776 = vmatpush1.bf16.msra.mxu0 %v1761
        %1777 = vmatprep.subr.bf16.mxu0 0
        %1778 = vmatpush1.bf16.msra.mxu0 %v1762
        %1779 = vmatprep.subr.bf16.mxu0 0
        %1780 = vmatpush1.bf16.msra.mxu0 0
        %1781 = vmatprep.subr.bf16.mxu0 0
        %1782 = vmatpush1.bf16.msra.mxu0 0
        %1783 = vmatprep.subr.bf16.mxu0 0
        %1784 = vmatpush1.bf16.msra.mxu0 0
        %1785 = vmatprep.subr.bf16.mxu0 0
        %1786 = vmatpush1.bf16.msra.mxu0 0
        %1787 = vmatprep.subr.bf16.mxu0 0
        %1788 = vmatpush1.bf16.msra.mxu0 0
        %1789 = vmatprep.subr.bf16.mxu0 0
        %1790 = vmatpush1.bf16.msra.mxu0 0
        %1791 = vmatprep.subr.bf16.mxu0 0
        %1792 = vmatpush1.bf16.msra.mxu0 0
        %1793 = vmatprep.subr.bf16.mxu0 0
        %1794 = vmatpush1.bf16.msra.mxu0 0
        %1795 = vmatprep.subr.bf16.mxu0 0
        %1796 = vmatpush1.bf16.msra.mxu0 0
        %1797 = vmatprep.subr.bf16.mxu0 0
        %1798 = vmatpush1.bf16.msra.mxu0 0
        %1799 = vmatprep.subr.bf16.mxu0 0
        %1800 = vmatpush1.bf16.msra.mxu0 0
        %1801 = vmatprep.subr.bf16.mxu0 0
        %1802 = vmatpush1.bf16.msra.mxu0 0
        %1803 = vmatprep.mubr.bf16.mxu0 0
        %1804 = vmatmul.mubr.bf16.gmra.mrb[0].mxu0 %v1769
        %v1805 = vpop.f32.mrb[0].mxu0
        %v1806 = vadd.f32 %v1741, %v1805
        %v1807 = vpop.f32.mrb[0].mxu0
        %v1808 = vpop.f32.mrb[0].mxu0
        %v1809 = vpop.f32.mrb[0].mxu0
        %1810 = vdwg.mxu0
        %v1811 = vadd.f32 %v1658, %v1806
        %v1812 = vld [vmem:[#allocation26] sm:$0x1]
        %v1813 = vld [vmem:[#allocation28] sm:$0x1]
        %v1814 = vsel %vm866, %v1811, 0.0
        %1815 = vadd.xlane.f32.xlu0 %v1814
        %v1816 = vpop.xlane.xlu0 %1815
        %v1817 = vmul.f32 %v1816, %v1634
        %v1818 = vsub.f32 %v1811, %v1817
        %v1819 = vmul.f32 %v1818, %v1818
        %v1820 = vsel %vm866, %v1819, 0.0
        %1821 = vadd.xlane.f32.xlu0 %v1820
        %v1822 = vpop.xlane.xlu0 %1821
        %v1823 = vmul.f32 %v1822, %v1634
        %v1824 = vadd.f32 %v1823, 1e-05
        %v1825 = vrsqrt.pop %v1824
        %v1826 = vmul.f32 %v1818, %v1825
        %v1828 = vlaneseq
        %v1829 = vshrl.u32 %v1828, 7
        %v1830 = vsub.s32 0, %v1829
        %v1831 = vrot.slane %v1812, %v1830
        %v1833 = vmul.f32 %v1826, %v1831
        %v1835 = vlaneseq
        %v1836 = vshrl.u32 %v1835, 7
        %v1837 = vsub.s32 0, %v1836
        %v1838 = vrot.slane %v1813, %v1837
        %v1840 = vadd.f32 %v1833, %v1838
        %1841 = vst.msk [vmem:[%s839] sm:$0xff] %vm866, %v1840
        %s1842 = sand.u32 %s442, 1
        %s1843 = scalar_lea.sflag [#allocation4], %s1842
        %s1844 = sand.u32 %s442, 1
        %s1845 = smul.addr %s1844, 8
        %s1846 = scalar_lea.vmem [#allocation29], %s1845
        // Predicated region
        $region157: #{tpu_custom_call.1} parent=87 // pred_check
          %p1847 = pneg %p452
        $region158: #{tpu_custom_call.1} parent=87 // pred_check_branch
          %1849 = sbr.rel (%p1847) target = $region160
        $region159: #{tpu_custom_call.1} parent=87 // pred_region
          %s1851 = ssub.s32 128, 128
          %1852 = vsyncadd %s1843, %s1851
          %s1853 = sadd.s32 %s49, %s48
          %s1854 = smul.addr %s1853, 128
          %s1855 = scalar_lea.hbm %s17, %s1854
          %s1857 = sshll.u32 %s1846, 4
          %s1858 = int_to_ptr.vmem [resolvable:$true] %s1857
          %1860 = dma.vmem_to_hbm [thread:$0]  %s1858, 128, %s1855, %s1843
        $region160: #{tpu_custom_call.1} parent=87 // pred_fallthru
          _
      $region88: #{tpu_custom_call.1} parent=5 // pred_fallthru
        _
      %p1861 = scmp.le.s32.totalorder 2, %s39
      // Predicated region
      $region161: #{tpu_custom_call.1} parent=5 // pred_check
        %p1862 = pneg %p1861
      $region162: #{tpu_custom_call.1} parent=5 // pred_check_branch
        %1864 = sbr.rel (%p1862) target = $region164
      $region163: #{tpu_custom_call.1} parent=5 // pred_region
        %s1865 = ssub.s32 %s39, 2
        // Predicated region
        $region165: #{tpu_custom_call.1} parent=163 // pred_check
          %p1866 = pneg %p458
        $region166: #{tpu_custom_call.1} parent=163 // pred_check_branch
          %1868 = sbr.rel (%p1866) target = $region168
        $region167: #{tpu_custom_call.1} parent=163 // pred_region
          %s1869 = sand.u32 %s443, 1
          %s1870 = scalar_lea.sflag [#allocation4], %s1869
          %s1871 = sand.u32 %s443, 1
          %s1872 = smul.addr %s1871, 8
          %s1873 = scalar_lea.vmem [#allocation29], %s1872
          %1874 = dma.done %s1870, 128
        $region168: #{tpu_custom_call.1} parent=163 // pred_fallthru
          _
      $region164: #{tpu_custom_call.1} parent=5 // pred_fallthru
        _
    $region6: #{tpu_custom_call.1} parent=1 // loop_footer
      %s43 = sadd.s32 1, %s39
    $region7: #{tpu_custom_call.1} parent=1 // loop_footer_branch
      %38 = sbr.rel target = $region3
    $region8: #{tpu_custom_call.1} parent=1 // loop_exit
      _
    %1875 = vsyncpa [#allocation3], 1
    %s1876 = scalar_lea.sflag [#allocation3], 1
    %1877 = vsyncpa %s1876, 1
    %1878 = vsyncpa [#allocation6], 1
    %s1879 = scalar_lea.sflag [#allocation6], 1
    %1880 = vsyncpa %s1879, 1
    %1881 = vsyncpa [#allocation9], 1
    %1882 = vsyncpa [#allocation12], 1
    %1883 = vsyncpa [#allocation15], 1
    %1884 = vsyncpa [#allocation18], 1
    %1885 = vsyncpa [#allocation21], 1
    %1886 = vsyncpa [#allocation24], 1
    %1887 = vsyncpa [#allocation27], 1
    %1888 = vsyncpa [#allocation4], 1
    %s1889 = scalar_lea.sflag [#allocation4], 1
    %1890 = vsyncpa %s1889, 1

// kernel: tpu_custom_call.1
$region0: #{tpu_custom_call.1}
  #allocation0 [shape = 'u32[]', space=smem, size = 0x4, offset = 0x4, fixed_abs, tag = 'smem constant byte address 0x4 - core index']
  #allocation1 [shape = 'u32[144,128]{1,0:T(1,128)}', space=vmem, size = 0x12000, scoped, tag = 'internal scratch']
  %s0 = inlined_call_operand.hbm [shape: f32[2,8,32], index: 0, kind: input, shape index: {}]
  %s1 = inlined_call_operand.hbm [shape: f32[2,8,32], index: 1, kind: input, shape index: {}]
  %s2 = inlined_call_operand.hbm [shape: bf16[2,8,8], index: 2, kind: input, shape index: {}]
  %s3 = inlined_call_operand.hbm [shape: bf16[32,32], index: 3, kind: input, shape index: {}]
  %s4 = inlined_call_operand.hbm [shape: f32[1,32], index: 4, kind: input, shape index: {}]
  %s5 = inlined_call_operand.hbm [shape: bf16[32,64], index: 5, kind: input, shape index: {}]
  %s6 = inlined_call_operand.hbm [shape: f32[1,64], index: 6, kind: input, shape index: {}]
  %s7 = inlined_call_operand.hbm [shape: bf16[4,8,32], index: 7, kind: input, shape index: {}]
  %s8 = inlined_call_operand.hbm [shape: f32[1,32], index: 8, kind: input, shape index: {}]
  %s9 = inlined_call_operand.hbm [shape: f32[1,32], index: 9, kind: input, shape index: {}]
  %s10 = inlined_call_operand.hbm [shape: f32[1,32], index: 10, kind: input, shape index: {}]
  %s11 = inlined_call_operand.hbm [shape: bf16[32,64], index: 11, kind: input, shape index: {}]
  %s12 = inlined_call_operand.hbm [shape: f32[1,64], index: 12, kind: input, shape index: {}]
  %s13 = inlined_call_operand.hbm [shape: bf16[64,32], index: 13, kind: input, shape index: {}]
  %s14 = inlined_call_operand.hbm [shape: f32[1,32], index: 14, kind: input, shape index: {}]
  %s15 = inlined_call_operand.hbm [shape: f32[1,32], index: 15, kind: input, shape index: {}]
  %s16 = inlined_call_operand.hbm [shape: f32[1,32], index: 16, kind: input, shape index: {}]
  %s17 = inlined_call_operand.hbm [shape: f32[2,8,32], index: 17, kind: output, shape index: {}]
  %s18 = sld [smem:[#allocation0]]
  $region169: #{tpu_custom_call.1} parent=0
    _
  %s20 = ssub.s32 1, %s18
  %s21 = scalar_select 0, %s20, %s18
  $region1: #{tpu_custom_call.1} parent=0
    #allocation2 [shape = 'u8[8192]{0}', space=vmem, size = 0x2000, scoped, tag = 'input window, operand 0']
    #allocation3 [shape = 's32[2]{0}', space=sflag, size = 0x8, scoped, tag = 'scoped memory for tpu_custom_call.1']
    #allocation4 [shape = 's32[2]{0}', space=sflag, size = 0x8, scoped, tag = 'scoped memory for tpu_custom_call.1']
    #allocation5 [shape = 'u8[8192]{0}', space=vmem, size = 0x2000, scoped, tag = 'input window, operand 1']
    #allocation6 [shape = 's32[2]{0}', space=sflag, size = 0x8, scoped, tag = 'scoped memory for tpu_custom_call.1']
    #allocation7 [shape = 'u8[4096]{0}', space=vmem, size = 0x1000, scoped, tag = 'input window, operand 2']
    #allocation8 [shape = 'u8[8192]{0}', space=vmem, size = 0x2000, scoped, tag = 'input window, operand 3, single buffered']
    #allocation9 [shape = 's32[1]{0}', space=sflag, size = 0x4, scoped, tag = 'scoped memory for tpu_custom_call.1']
    #allocation10 [shape = 'u8[512]{0}', space=vmem, size = 0x400, scoped, tag = 'input window, operand 4, single buffered']
    #allocation11 [shape = 'u8[8192]{0}', space=vmem, size = 0x2000, scoped, tag = 'input window, operand 5, single buffered']
    #allocation12 [shape = 's32[1]{0}', space=sflag, size = 0x4, scoped, tag = 'scoped memory for tpu_custom_call.1']
    #allocation13 [shape = 'u8[512]{0}', space=vmem, size = 0x400, scoped, tag = 'input window, operand 6, single buffered']
    #allocation14 [shape = 'u8[8192]{0}', space=vmem, size = 0x2000, scoped, tag = 'input window, operand 7, single buffered']
    #allocation15 [shape = 's32[1]{0}', space=sflag, size = 0x4, scoped, tag = 'scoped memory for tpu_custom_call.1']
    #allocation16 [shape = 'u8[512]{0}', space=vmem, size = 0x400, scoped, tag = 'input window, operand 8, single buffered']
    #allocation17 [shape = 'u8[512]{0}', space=vmem, size = 0x400, scoped, tag = 'input window, operand 9, single buffered']
    #allocation18 [shape = 's32[1]{0}', space=sflag, size = 0x4, scoped, tag = 'scoped memory for tpu_custom_call.1']
    #allocation19 [shape = 'u8[512]{0}', space=vmem, size = 0x400, scoped, tag = 'input window, operand 10, single buffered']
    #allocation20 [shape = 'u8[8192]{0}', space=vmem, size = 0x2000, scoped, tag = 'input window, operand 11, single buffered']
    #allocation21 [shape = 's32[1]{0}', space=sflag, size = 0x4, scoped, tag = 'scoped memory for tpu_custom_call.1']
    #allocation22 [shape = 'u8[512]{0}', space=vmem, size = 0x400, scoped, tag = 'input window, operand 12, single buffered']
    #allocation23 [shape = 'u8[16384]{0}', space=vmem, size = 0x4000, scoped, tag = 'input window, operand 13, single buffered']
    #allocation24 [shape = 's32[1]{0}', space=sflag, size = 0x4, scoped, tag = 'scoped memory for tpu_custom_call.1']
    #allocation25 [shape = 'u8[512]{0}', space=vmem, size = 0x400, scoped, tag = 'input window, operand 14, single buffered']
    #allocation26 [shape = 'u8[512]{0}', space=vmem, size = 0x400, scoped, tag = 'input window, operand 15, single buffered']
    #allocation27 [shape = 's32[1]{0}', space=sflag, size = 0x4, scoped, tag = 'scoped memory for tpu_custom_call.1']
    #allocation28 [shape = 'u8[512]{0}', space=vmem, size = 0x400, scoped, tag = 'input window, operand 16, single buffered']
    #allocation29 [shape = 'u8[8192]{0}', space=vmem, size = 0x2000, scoped, tag = 'output window, operand 0']
    %22 = vsyncpa [#allocation3], 0
    %s23 = scalar_lea.sflag [#allocation3], 1
    %24 = vsyncpa %s23, 0
    %25 = vsyncpa [#allocation6], 0
    %s26 = scalar_lea.sflag [#allocation6], 1
    %27 = vsyncpa %s26, 0
    %28 = vsyncpa [#allocation9], 0
    %29 = vsyncpa [#allocation12], 0
    %30 = vsyncpa [#allocation15], 0
    %31 = vsyncpa [#allocation18], 0
    %32 = vsyncpa [#allocation21], 0
    %33 = vsyncpa [#allocation24], 0
    %34 = vsyncpa [#allocation27], 0
    %35 = vsyncpa [#allocation4], 0
    %s36 = scalar_lea.sflag [#allocation4], 1
    %37 = vsyncpa %s36, 0
    loop: start=0, step=1, limit=4
    $region2: #{tpu_custom_call.1} parent=1 // loop_pre_header
      _
    $region3: #{tpu_custom_call.1} parent=1 // loop_header
      %s39 = sphi 0, %s43
      %p40 = scmp.ge.s32.totalorder %s39, 4
      %s46 = sphi 0, %s58
      %s47 = sphi 0, %s54
      %s48 = sphi 0, %s46
      %s49 = sphi 0, %s47
      %s50 = sphi 0, %s48
      %s51 = sphi 0, %s49
      %s63 = sphi 0, %s65
      %s66 = sphi 0, %s63
      %s67 = sphi 0, %s66
      %s83 = sphi 0, %s67
      %s89 = sphi 0, %s91
      %s92 = sphi 0, %s89
      %s93 = sphi 0, %s92
      %s109 = sphi 0, %s93
      %s117 = sphi 0, %s119
      %s120 = sphi 0, %s117
      %s121 = sphi 0, %s120
      %s137 = sphi 0, %s121
      %s141 = sphi 0, %s141
      %s143 = sphi 0, %s141
      %s144 = sphi 0, %s143
      %s158 = sphi 0, %s144
      %s162 = sphi 0, %s162
      %s164 = sphi 0, %s162
      %s165 = sphi 0, %s164
      %s179 = sphi 0, %s165
      %s183 = sphi 0, %s183
      %s185 = sphi 0, %s183
      %s186 = sphi 0, %s185
      %s200 = sphi 0, %s186
      %s204 = sphi 0, %s204
      %s206 = sphi 0, %s204
      %s207 = sphi 0, %s206
      %s221 = sphi 0, %s207
      %s225 = sphi 0, %s225
      %s227 = sphi 0, %s225
      %s228 = sphi 0, %s227
      %s242 = sphi 0, %s228
      %s246 = sphi 0, %s246
      %s248 = sphi 0, %s246
      %s249 = sphi 0, %s248
      %s263 = sphi 0, %s249
      %s267 = sphi 0, %s267
      %s269 = sphi 0, %s267
      %s270 = sphi 0, %s269
      %s284 = sphi 0, %s270
      %s288 = sphi 0, %s288
      %s290 = sphi 0, %s288
      %s291 = sphi 0, %s290
      %s305 = sphi 0, %s291
      %s309 = sphi 0, %s309
      %s311 = sphi 0, %s309
      %s312 = sphi 0, %s311
      %s326 = sphi 0, %s312
      %s330 = sphi 0, %s330
      %s332 = sphi 0, %s330
      %s333 = sphi 0, %s332
      %s347 = sphi 0, %s333
      %s351 = sphi 0, %s351
      %s353 = sphi 0, %s351
      %s354 = sphi 0, %s353
      %s368 = sphi 0, %s354
      %s372 = sphi 0, %s372
      %s374 = sphi 0, %s372
      %s375 = sphi 0, %s374
      %s389 = sphi 0, %s375
      %s393 = sphi 0, %s393
      %s395 = sphi 0, %s393
      %s396 = sphi 0, %s395
      %s410 = sphi 0, %s396
      %s414 = sphi 0, %s414
      %s416 = sphi 0, %s414
      %s417 = sphi 0, %s416
      %s431 = sphi 0, %s417
      %s439 = sphi 0, %s441
      %s442 = sphi 0, %s439
      %s443 = sphi 0, %s442
      %s459 = sphi 0, %s443
    $region4: #{tpu_custom_call.1} parent=1 // loop_header_branch
      %42 = sbr.rel (%p40) target = $region8
    $region5: #{tpu_custom_call.1} parent=1 // loop_body
      %s44 = ssub.s32 %s39, 1
      %s45 = ssub.s32 %s39, 2
      %s52 = sadd.s32 1, %s47
      %p53 = scmp.ge.s32.totalorder %s52, 1
      %s54 = scalar_select %p53, 0, %s52
      %s55 = sadd.s32 1, %s46
      %s56 = scalar_select %p53, %s55, %s46
      %p57 = scmp.ge.s32.totalorder %s56, 2
      %s58 = scalar_select %p57, 0, %s56
      %s59 = ssub.s32 %s46, %s58
      %s60 = ssub.s32 %s47, %s54
      %s61 = sor.u32 %s59, %s60
      %p62 = scmp.eq.s32.totalorder %s61, 0
      %s64 = sadd.s32 %s63, 1
      %s65 = scalar_select %p62, %s63, %s64
      %p68 = pneg %p62
      %p69 = scmp.eq.s32.totalorder %s39, 1
      %p70 = por %p68, %p69
      %p71 = scmp.ne.s32.totalorder %s63, %s66
      %p72 = scmp.eq.s32.totalorder %s39, 0
      %p73 = por %p71, %p72
      %p74 = scmp.ne.s32.totalorder %s63, %s66
      %p75 = scmp.eq.s32.totalorder %s44, 1
      %p76 = por %p74, %p75
      %p77 = scmp.ne.s32.totalorder %s66, %s67
      %p78 = scmp.eq.s32.totalorder %s44, 0
      %p79 = por %p77, %p78
      %p80 = scmp.ne.s32.totalorder %s66, %s67
      %p81 = scmp.eq.s32.totalorder %s45, 1
      %p82 = por %p80, %p81
      %p84 = scmp.ne.s32.totalorder %s67, %s83
      %p85 = scmp.eq.s32.totalorder %s45, 0
      %p86 = por %p84, %p85
      %s87 = ssub.s32 %s46, %s58
      %p88 = scmp.eq.s32.totalorder %s87, 0
      %s90 = sadd.s32 %s89, 1
      %s91 = scalar_select %p88, %s89, %s90
      %p94 = pneg %p88
      %p95 = scmp.eq.s32.totalorder %s39, 1
      %p96 = por %p94, %p95
      %p97 = scmp.ne.s32.totalorder %s89, %s92
      %p98 = scmp.eq.s32.totalorder %s39, 0
      %p99 = por %p97, %p98
      %p100 = scmp.ne.s32.totalorder %s89, %s92
      %p101 = scmp.eq.s32.totalorder %s44, 1
      %p102 = por %p100, %p101
      %p103 = scmp.ne.s32.totalorder %s92, %s93
      %p104 = scmp.eq.s32.totalorder %s44, 0
      %p105 = por %p103, %p104
      %p106 = scmp.ne.s32.totalorder %s92, %s93
      %p107 = scmp.eq.s32.totalorder %s45, 1
      %p108 = por %p106, %p107
      %p110 = scmp.ne.s32.totalorder %s93, %s109
      %p111 = scmp.eq.s32.totalorder %s45, 0
      %p112 = por %p110, %p111
      %s113 = ssub.s32 %s46, %s58
      %s114 = ssub.s32 %s47, %s54
      %s115 = sor.u32 %s113, %s114
      %p116 = scmp.eq.s32.totalorder %s115, 0
      %s118 = sadd.s32 %s117, 1
      %s119 = scalar_select %p116, %s117, %s118
      %p122 = pneg %p116
      %p123 = scmp.eq.s32.totalorder %s39, 1
      %p124 = por %p122, %p123
      %p125 = scmp.ne.s32.totalorder %s117, %s120
      %p126 = scmp.eq.s32.totalorder %s39, 0
      %p127 = por %p125, %p126
      %p128 = scmp.ne.s32.totalorder %s117, %s120
      %p129 = scmp.eq.s32.totalorder %s44, 1
      %p130 = por %p128, %p129
      %p131 = scmp.ne.s32.totalorder %s120, %s121
      %p132 = scmp.eq.s32.totalorder %s44, 0
      %p133 = por %p131, %p132
      %p134 = scmp.ne.s32.totalorder %s120, %s121
      %p135 = scmp.eq.s32.totalorder %s45, 1
      %p136 = por %p134, %p135
      %p138 = scmp.ne.s32.totalorder %s121, %s137
      %p139 = scmp.eq.s32.totalorder %s45, 0
      %p140 = por %p138, %p139
      %s142 = sadd.s32 %s141, 1
      %p145 = scmp.eq.s32.totalorder %s39, 1
      %p146 = scmp.ne.s32.totalorder %s141, %s143
      %p147 = scmp.eq.s32.totalorder %s39, 0
      %p148 = por %p146, %p147
      %p149 = scmp.ne.s32.totalorder %s141, %s143
      %p150 = scmp.eq.s32.totalorder %s44, 1
      %p151 = por %p149, %p150
      %p152 = scmp.ne.s32.totalorder %s143, %s144
      %p153 = scmp.eq.s32.totalorder %s44, 0
      %p154 = por %p152, %p153
      %p155 = scmp.ne.s32.totalorder %s143, %s144
      %p156 = scmp.eq.s32.totalorder %s45, 1
      %p157 = por %p155, %p156
      %p159 = scmp.ne.s32.totalorder %s144, %s158
      %p160 = scmp.eq.s32.totalorder %s45, 0
      %p161 = por %p159, %p160
      %s163 = sadd.s32 %s162, 1
      %p166 = scmp.eq.s32.totalorder %s39, 1
      %p167 = scmp.ne.s32.totalorder %s162, %s164
      %p168 = scmp.eq.s32.totalorder %s39, 0
      %p169 = por %p167, %p168
      %p170 = scmp.ne.s32.totalorder %s162, %s164
      %p171 = scmp.eq.s32.totalorder %s44, 1
      %p172 = por %p170, %p171
      %p173 = scmp.ne.s32.totalorder %s164, %s165
      %p174 = scmp.eq.s32.totalorder %s44, 0
      %p175 = por %p173, %p174
      %p176 = scmp.ne.s32.totalorder %s164, %s165
      %p177 = scmp.eq.s32.totalorder %s45, 1
      %p178 = por %p176, %p177
      %p180 = scmp.ne.s32.totalorder %s165, %s179
      %p181 = scmp.eq.s32.totalorder %s45, 0
      %p182 = por %p180, %p181
      %s184 = sadd.s32 %s183, 1
      %p187 = scmp.eq.s32.totalorder %s39, 1
      %p188 = scmp.ne.s32.totalorder %s183, %s185
      %p189 = scmp.eq.s32.totalorder %s39, 0
      %p190 = por %p188, %p189
      %p191 = scmp.ne.s32.totalorder %s183, %s185
      %p192 = scmp.eq.s32.totalorder %s44, 1
      %p193 = por %p191, %p192
      %p194 = scmp.ne.s32.totalorder %s185, %s186
      %p195 = scmp.eq.s32.totalorder %s44, 0
      %p196 = por %p194, %p195
      %p197 = scmp.ne.s32.totalorder %s185, %s186
      %p198 = scmp.eq.s32.totalorder %s45, 1
      %p199 = por %p197, %p198
      %p201 = scmp.ne.s32.totalorder %s186, %s200
      %p202 = scmp.eq.s32.totalorder %s45, 0
      %p203 = por %p201, %p202
      %s205 = sadd.s32 %s204, 1
      %p208 = scmp.eq.s32.totalorder %s39, 1
      %p209 = scmp.ne.s32.totalorder %s204, %s206
      %p210 = scmp.eq.s32.totalorder %s39, 0
      %p211 = por %p209, %p210
      %p212 = scmp.ne.s32.totalorder %s204, %s206
      %p213 = scmp.eq.s32.totalorder %s44, 1
      %p214 = por %p212, %p213
      %p215 = scmp.ne.s32.totalorder %s206, %s207
      %p216 = scmp.eq.s32.totalorder %s44, 0
      %p217 = por %p215, %p216
      %p218 = scmp.ne.s32.totalorder %s206, %s207
      %p219 = scmp.eq.s32.totalorder %s45, 1
      %p220 = por %p218, %p219
      %p222 = scmp.ne.s32.totalorder %s207, %s221
      %p223 = scmp.eq.s32.totalorder %s45, 0
      %p224 = por %p222, %p223
      %s226 = sadd.s32 %s225, 1
      %p229 = scmp.eq.s32.totalorder %s39, 1
      %p230 = scmp.ne.s32.totalorder %s225, %s227
      %p231 = scmp.eq.s32.totalorder %s39, 0
      %p232 = por %p230, %p231
      %p233 = scmp.ne.s32.totalorder %s225, %s227
      %p234 = scmp.eq.s32.totalorder %s44, 1
      %p235 = por %p233, %p234
      %p236 = scmp.ne.s32.totalorder %s227, %s228
      %p237 = scmp.eq.s32.totalorder %s44, 0
      %p238 = por %p236, %p237
      %p239 = scmp.ne.s32.totalorder %s227, %s228
      %p240 = scmp.eq.s32.totalorder %s45, 1
      %p241 = por %p239, %p240
      %p243 = scmp.ne.s32.totalorder %s228, %s242
      %p244 = scmp.eq.s32.totalorder %s45, 0
      %p245 = por %p243, %p244
      %s247 = sadd.s32 %s246, 1
      %p250 = scmp.eq.s32.totalorder %s39, 1
      %p251 = scmp.ne.s32.totalorder %s246, %s248
      %p252 = scmp.eq.s32.totalorder %s39, 0
      %p253 = por %p251, %p252
      %p254 = scmp.ne.s32.totalorder %s246, %s248
      %p255 = scmp.eq.s32.totalorder %s44, 1
      %p256 = por %p254, %p255
      %p257 = scmp.ne.s32.totalorder %s248, %s249
      %p258 = scmp.eq.s32.totalorder %s44, 0
      %p259 = por %p257, %p258
      %p260 = scmp.ne.s32.totalorder %s248, %s249
      %p261 = scmp.eq.s32.totalorder %s45, 1
      %p262 = por %p260, %p261
      %p264 = scmp.ne.s32.totalorder %s249, %s263
      %p265 = scmp.eq.s32.totalorder %s45, 0
      %p266 = por %p264, %p265
      %s268 = sadd.s32 %s267, 1
      %p271 = scmp.eq.s32.totalorder %s39, 1
      %p272 = scmp.ne.s32.totalorder %s267, %s269
      %p273 = scmp.eq.s32.totalorder %s39, 0
      %p274 = por %p272, %p273
      %p275 = scmp.ne.s32.totalorder %s267, %s269
      %p276 = scmp.eq.s32.totalorder %s44, 1
      %p277 = por %p275, %p276
      %p278 = scmp.ne.s32.totalorder %s269, %s270
      %p279 = scmp.eq.s32.totalorder %s44, 0
      %p280 = por %p278, %p279
      %p281 = scmp.ne.s32.totalorder %s269, %s270
      %p282 = scmp.eq.s32.totalorder %s45, 1
      %p283 = por %p281, %p282
      %p285 = scmp.ne.s32.totalorder %s270, %s284
      %p286 = scmp.eq.s32.totalorder %s45, 0
      %p287 = por %p285, %p286
      %s289 = sadd.s32 %s288, 1
      %p292 = scmp.eq.s32.totalorder %s39, 1
      %p293 = scmp.ne.s32.totalorder %s288, %s290
      %p294 = scmp.eq.s32.totalorder %s39, 0
      %p295 = por %p293, %p294
      %p296 = scmp.ne.s32.totalorder %s288, %s290
      %p297 = scmp.eq.s32.totalorder %s44, 1
      %p298 = por %p296, %p297
      %p299 = scmp.ne.s32.totalorder %s290, %s291
      %p300 = scmp.eq.s32.totalorder %s44, 0
      %p301 = por %p299, %p300
      %p302 = scmp.ne.s32.totalorder %s290, %s291
      %p303 = scmp.eq.s32.totalorder %s45, 1
      %p304 = por %p302, %p303
      %p306 = scmp.ne.s32.totalorder %s291, %s305
      %p307 = scmp.eq.s32.totalorder %s45, 0
      %p308 = por %p306, %p307
      %s310 = sadd.s32 %s309, 1
      %p313 = scmp.eq.s32.totalorder %s39, 1
      %p314 = scmp.ne.s32.totalorder %s309, %s311
      %p315 = scmp.eq.s32.totalorder %s39, 0
      %p316 = por %p314, %p315
      %p317 = scmp.ne.s32.totalorder %s309, %s311
      %p318 = scmp.eq.s32.totalorder %s44, 1
      %p319 = por %p317, %p318
      %p320 = scmp.ne.s32.totalorder %s311, %s312
      %p321 = scmp.eq.s32.totalorder %s44, 0
      %p322 = por %p320, %p321
      %p323 = scmp.ne.s32.totalorder %s311, %s312
      %p324 = scmp.eq.s32.totalorder %s45, 1
      %p325 = por %p323, %p324
      %p327 = scmp.ne.s32.totalorder %s312, %s326
      %p328 = scmp.eq.s32.totalorder %s45, 0
      %p329 = por %p327, %p328
      %s331 = sadd.s32 %s330, 1
      %p334 = scmp.eq.s32.totalorder %s39, 1
      %p335 = scmp.ne.s32.totalorder %s330, %s332
      %p336 = scmp.eq.s32.totalorder %s39, 0
      %p337 = por %p335, %p336
      %p338 = scmp.ne.s32.totalorder %s330, %s332
      %p339 = scmp.eq.s32.totalorder %s44, 1
      %p340 = por %p338, %p339
      %p341 = scmp.ne.s32.totalorder %s332, %s333
      %p342 = scmp.eq.s32.totalorder %s44, 0
      %p343 = por %p341, %p342
      %p344 = scmp.ne.s32.totalorder %s332, %s333
      %p345 = scmp.eq.s32.totalorder %s45, 1
      %p346 = por %p344, %p345
      %p348 = scmp.ne.s32.totalorder %s333, %s347
      %p349 = scmp.eq.s32.totalorder %s45, 0
      %p350 = por %p348, %p349
      %s352 = sadd.s32 %s351, 1
      %p355 = scmp.eq.s32.totalorder %s39, 1
      %p356 = scmp.ne.s32.totalorder %s351, %s353
      %p357 = scmp.eq.s32.totalorder %s39, 0
      %p358 = por %p356, %p357
      %p359 = scmp.ne.s32.totalorder %s351, %s353
      %p360 = scmp.eq.s32.totalorder %s44, 1
      %p361 = por %p359, %p360
      %p362 = scmp.ne.s32.totalorder %s353, %s354
      %p363 = scmp.eq.s32.totalorder %s44, 0
      %p364 = por %p362, %p363
      %p365 = scmp.ne.s32.totalorder %s353, %s354
      %p366 = scmp.eq.s32.totalorder %s45, 1
      %p367 = por %p365, %p366
      %p369 = scmp.ne.s32.totalorder %s354, %s368
      %p370 = scmp.eq.s32.totalorder %s45, 0
      %p371 = por %p369, %p370
      %s373 = sadd.s32 %s372, 1
      %p376 = scmp.eq.s32.totalorder %s39, 1
      %p377 = scmp.ne.s32.totalorder %s372, %s374
      %p378 = scmp.eq.s32.totalorder %s39, 0
      %p379 = por %p377, %p378
      %p380 = scmp.ne.s32.totalorder %s372, %s374
      %p381 = scmp.eq.s32.totalorder %s44, 1
      %p382 = por %p380, %p381
      %p383 = scmp.ne.s32.totalorder %s374, %s375
      %p384 = scmp.eq.s32.totalorder %s44, 0
      %p385 = por %p383, %p384
      %p386 = scmp.ne.s32.totalorder %s374, %s375
      %p387 = scmp.eq.s32.totalorder %s45, 1
      %p388 = por %p386, %p387
      %p390 = scmp.ne.s32.totalorder %s375, %s389
      %p391 = scmp.eq.s32.totalorder %s45, 0
      %p392 = por %p390, %p391
      %s394 = sadd.s32 %s393, 1
      %p397 = scmp.eq.s32.totalorder %s39, 1
      %p398 = scmp.ne.s32.totalorder %s393, %s395
      %p399 = scmp.eq.s32.totalorder %s39, 0
      %p400 = por %p398, %p399
      %p401 = scmp.ne.s32.totalorder %s393, %s395
      %p402 = scmp.eq.s32.totalorder %s44, 1
      %p403 = por %p401, %p402
      %p404 = scmp.ne.s32.totalorder %s395, %s396
      %p405 = scmp.eq.s32.totalorder %s44, 0
      %p406 = por %p404, %p405
      %p407 = scmp.ne.s32.totalorder %s395, %s396
      %p408 = scmp.eq.s32.totalorder %s45, 1
      %p409 = por %p407, %p408
      %p411 = scmp.ne.s32.totalorder %s396, %s410
      %p412 = scmp.eq.s32.totalorder %s45, 0
      %p413 = por %p411, %p412
      %s415 = sadd.s32 %s414, 1
      %p418 = scmp.eq.s32.totalorder %s39, 1
      %p419 = scmp.ne.s32.totalorder %s414, %s416
      %p420 = scmp.eq.s32.totalorder %s39, 0
      %p421 = por %p419, %p420
      %p422 = scmp.ne.s32.totalorder %s414, %s416
      %p423 = scmp.eq.s32.totalorder %s44, 1
      %p424 = por %p422, %p423
      %p425 = scmp.ne.s32.totalorder %s416, %s417
      %p426 = scmp.eq.s32.totalorder %s44, 0
      %p427 = por %p425, %p426
      %p428 = scmp.ne.s32.totalorder %s416, %s417
      %p429 = scmp.eq.s32.totalorder %s45, 1
      %p430 = por %p428, %p429
      %p432 = scmp.ne.s32.totalorder %s417, %s431
      %p433 = scmp.eq.s32.totalorder %s45, 0
      %p434 = por %p432, %p433
      %s435 = ssub.s32 %s46, %s58
      %s436 = ssub.s32 %s47, %s54
      %s437 = sor.u32 %s435, %s436
      %p438 = scmp.eq.s32.totalorder %s437, 0
      %s440 = sadd.s32 %s439, 1
      %s441 = scalar_select %p438, %s439, %s440
      %p444 = pneg %p438
      %p445 = scmp.eq.s32.totalorder %s39, 1
      %p446 = por %p444, %p445
      %p447 = scmp.ne.s32.totalorder %s439, %s442
      %p448 = scmp.eq.s32.totalorder %s39, 0
      %p449 = por %p447, %p448
      %p450 = scmp.ne.s32.totalorder %s439, %s442
      %p451 = scmp.eq.s32.totalorder %s44, 1
      %p452 = por %p450, %p451
      %p453 = scmp.ne.s32.totalorder %s442, %s443
      %p454 = scmp.eq.s32.totalorder %s44, 0
      %p455 = por %p453, %p454
      %p456 = scmp.ne.s32.totalorder %s442, %s443
      %p457 = scmp.eq.s32.totalorder %s45, 1
      %p458 = por %p456, %p457
      %p460 = scmp.ne.s32.totalorder %s443, %s459
      %p461 = scmp.eq.s32.totalorder %s45, 0
      %p462 = por %p460, %p461
      %p463 = scmp.le.s32.totalorder 1, %s39
      %p464 = scmp.lt.s32.totalorder %s39, 3
      %p465 = pnand %p463, %p464
      %p466 = pneg %p465
      // Predicated region
      $region9: #{tpu_custom_call.1} parent=5 // pred_check
        _
      $region10: #{tpu_custom_call.1} parent=5 // pred_check_branch
        %468 = sbr.rel (%p465) target = $region12
      $region11: #{tpu_custom_call.1} parent=5 // pred_region
        %s469 = ssub.s32 %s39, 1
        // Predicated region
        $region13: #{tpu_custom_call.1} parent=11 // pred_check
          %p470 = pneg %p154
        $region14: #{tpu_custom_call.1} parent=11 // pred_check_branch
          %472 = sbr.rel (%p470) target = $region16
        $region15: #{tpu_custom_call.1} parent=11 // pred_region
          %s474 = ssub.s32 256, 256
          %475 = vsyncadd [#allocation9], %s474
          %s476 = sshll.u32 [#allocation8], 4
          %s477 = int_to_ptr.vmem [resolvable:$true] %s476
          %482 = dma.hbm_to_vmem [thread:$0]  %s3, 256, %s477, [#allocation9], 64, 64, 4
        $region16: #{tpu_custom_call.1} parent=11 // pred_fallthru
          _
        // Predicated region
        $region17: #{tpu_custom_call.1} parent=11 // pred_check
          %p483 = pneg %p175
        $region18: #{tpu_custom_call.1} parent=11 // pred_check_branch
          %485 = sbr.rel (%p483) target = $region20
        $region19: #{tpu_custom_call.1} parent=11 // pred_region
          %s487 = ssub.s32 16, 16
          %488 = vsyncadd [#allocation9], %s487
          %s490 = sshll.u32 [#allocation10], 4
          %s491 = int_to_ptr.vmem [resolvable:$true] %s490
          %493 = dma.hbm_to_vmem [thread:$0]  %s4, 16, %s491, [#allocation9]
        $region20: #{tpu_custom_call.1} parent=11 // pred_fallthru
          _
        // Predicated region
        $region21: #{tpu_custom_call.1} parent=11 // pred_check
          %p494 = pneg %p196
        $region22: #{tpu_custom_call.1} parent=11 // pred_check_branch
          %496 = sbr.rel (%p494) target = $region24
        $region23: #{tpu_custom_call.1} parent=11 // pred_region
          %s498 = ssub.s32 256, 256
          %499 = vsyncadd [#allocation12], %s498
          %s500 = sshll.u32 [#allocation11], 4
          %s501 = int_to_ptr.vmem [resolvable:$true] %s500
          %506 = dma.hbm_to_vmem [thread:$0]  %s5, 256, %s501, [#allocation12], 64, 64, 4
        $region24: #{tpu_custom_call.1} parent=11 // pred_fallthru
          _
        // Predicated region
        $region25: #{tpu_custom_call.1} parent=11 // pred_check
          %p507 = pneg %p217
        $region26: #{tpu_custom_call.1} parent=11 // pred_check_branch
          %509 = sbr.rel (%p507) target = $region28
        $region27: #{tpu_custom_call.1} parent=11 // pred_region
          %s511 = ssub.s32 16, 16
          %512 = vsyncadd [#allocation12], %s511
          %s514 = sshll.u32 [#allocation13], 4
          %s515 = int_to_ptr.vmem [resolvable:$true] %s514
          %517 = dma.hbm_to_vmem [thread:$0]  %s6, 16, %s515, [#allocation12]
        $region28: #{tpu_custom_call.1} parent=11 // pred_fallthru
          _
        // Predicated region
        $region29: #{tpu_custom_call.1} parent=11 // pred_check
          %p518 = pneg %p238
        $region30: #{tpu_custom_call.1} parent=11 // pred_check_branch
          %520 = sbr.rel (%p518) target = $region32
        $region31: #{tpu_custom_call.1} parent=11 // pred_region
          %s522 = ssub.s32 256, 256
          %523 = vsyncadd [#allocation15], %s522
          %s524 = sshll.u32 [#allocation14], 4
          %s525 = int_to_ptr.vmem [resolvable:$true] %s524
          %530 = dma.hbm_to_vmem [thread:$0]  %s7, 256, %s525, [#allocation15], 64, 64, 4
        $region32: #{tpu_custom_call.1} parent=11 // pred_fallthru
          _
        // Predicated region
        $region33: #{tpu_custom_call.1} parent=11 // pred_check
          %p531 = pneg %p259
        $region34: #{tpu_custom_call.1} parent=11 // pred_check_branch
          %533 = sbr.rel (%p531) target = $region36
        $region35: #{tpu_custom_call.1} parent=11 // pred_region
          %s535 = ssub.s32 16, 16
          %536 = vsyncadd [#allocation15], %s535
          %s538 = sshll.u32 [#allocation16], 4
          %s539 = int_to_ptr.vmem [resolvable:$true] %s538
          %541 = dma.hbm_to_vmem [thread:$0]  %s8, 16, %s539, [#allocation15]
        $region36: #{tpu_custom_call.1} parent=11 // pred_fallthru
          _
        // Predicated region
        $region37: #{tpu_custom_call.1} parent=11 // pred_check
          %p542 = pneg %p280
        $region38: #{tpu_custom_call.1} parent=11 // pred_check_branch
          %544 = sbr.rel (%p542) target = $region40
        $region39: #{tpu_custom_call.1} parent=11 // pred_region
          %s546 = ssub.s32 16, 16
          %547 = vsyncadd [#allocation18], %s546
          %s549 = sshll.u32 [#allocation17], 4
          %s550 = int_to_ptr.vmem [resolvable:$true] %s549
          %552 = dma.hbm_to_vmem [thread:$0]  %s9, 16, %s550, [#allocation18]
        $region40: #{tpu_custom_call.1} parent=11 // pred_fallthru
          _
        // Predicated region
        $region41: #{tpu_custom_call.1} parent=11 // pred_check
          %p553 = pneg %p301
        $region42: #{tpu_custom_call.1} parent=11 // pred_check_branch
          %555 = sbr.rel (%p553) target = $region44
        $region43: #{tpu_custom_call.1} parent=11 // pred_region
          %s557 = ssub.s32 16, 16
          %558 = vsyncadd [#allocation18], %s557
          %s560 = sshll.u32 [#allocation19], 4
          %s561 = int_to_ptr.vmem [resolvable:$true] %s560
          %563 = dma.hbm_to_vmem [thread:$0]  %s10, 16, %s561, [#allocation18]
        $region44: #{tpu_custom_call.1} parent=11 // pred_fallthru
          _
        // Predicated region
        $region45: #{tpu_custom_call.1} parent=11 // pred_check
          %p564 = pneg %p322
        $region46: #{tpu_custom_call.1} parent=11 // pred_check_branch
          %566 = sbr.rel (%p564) target = $region48
        $region47: #{tpu_custom_call.1} parent=11 // pred_region
          %s568 = ssub.s32 256, 256
          %569 = vsyncadd [#allocation21], %s568
          %s570 = sshll.u32 [#allocation20], 4
          %s571 = int_to_ptr.vmem [resolvable:$true] %s570
          %576 = dma.hbm_to_vmem [thread:$0]  %s11, 256, %s571, [#allocation21], 64, 64, 4
        $region48: #{tpu_custom_call.1} parent=11 // pred_fallthru
          _
        // Predicated region
        $region49: #{tpu_custom_call.1} parent=11 // pred_check
          %p577 = pneg %p343
        $region50: #{tpu_custom_call.1} parent=11 // pred_check_branch
          %579 = sbr.rel (%p577) target = $region52
        $region51: #{tpu_custom_call.1} parent=11 // pred_region
          %s581 = ssub.s32 16, 16
          %582 = vsyncadd [#allocation21], %s581
          %s584 = sshll.u32 [#allocation22], 4
          %s585 = int_to_ptr.vmem [resolvable:$true] %s584
          %587 = dma.hbm_to_vmem [thread:$0]  %s12, 16, %s585, [#allocation21]
        $region52: #{tpu_custom_call.1} parent=11 // pred_fallthru
          _
        // Predicated region
        $region53: #{tpu_custom_call.1} parent=11 // pred_check
          %p588 = pneg %p364
        $region54: #{tpu_custom_call.1} parent=11 // pred_check_branch
          %590 = sbr.rel (%p588) target = $region56
        $region55: #{tpu_custom_call.1} parent=11 // pred_region
          %s592 = ssub.s32 512, 512
          %593 = vsyncadd [#allocation24], %s592
          %s594 = sshll.u32 [#allocation23], 4
          %s595 = int_to_ptr.vmem [resolvable:$true] %s594
          %600 = dma.hbm_to_vmem [thread:$0]  %s13, 512, %s595, [#allocation24], 64, 64, 4
        $region56: #{tpu_custom_call.1} parent=11 // pred_fallthru
          _
        // Predicated region
        $region57: #{tpu_custom_call.1} parent=11 // pred_check
          %p601 = pneg %p385
        $region58: #{tpu_custom_call.1} parent=11 // pred_check_branch
          %603 = sbr.rel (%p601) target = $region60
        $region59: #{tpu_custom_call.1} parent=11 // pred_region
          %s605 = ssub.s32 16, 16
          %606 = vsyncadd [#allocation24], %s605
          %s608 = sshll.u32 [#allocation25], 4
          %s609 = int_to_ptr.vmem [resolvable:$true] %s608
          %611 = dma.hbm_to_vmem [thread:$0]  %s14, 16, %s609, [#allocation24]
        $region60: #{tpu_custom_call.1} parent=11 // pred_fallthru
          _
        // Predicated region
        $region61: #{tpu_custom_call.1} parent=11 // pred_check
          %p612 = pneg %p406
        $region62: #{tpu_custom_call.1} parent=11 // pred_check_branch
          %614 = sbr.rel (%p612) target = $region64
        $region63: #{tpu_custom_call.1} parent=11 // pred_region
          %s616 = ssub.s32 16, 16
          %617 = vsyncadd [#allocation27], %s616
          %s619 = sshll.u32 [#allocation26], 4
          %s620 = int_to_ptr.vmem [resolvable:$true] %s619
          %622 = dma.hbm_to_vmem [thread:$0]  %s15, 16, %s620, [#allocation27]
        $region64: #{tpu_custom_call.1} parent=11 // pred_fallthru
          _
        // Predicated region
        $region65: #{tpu_custom_call.1} parent=11 // pred_check
          %p623 = pneg %p427
        $region66: #{tpu_custom_call.1} parent=11 // pred_check_branch
          %625 = sbr.rel (%p623) target = $region68
        $region67: #{tpu_custom_call.1} parent=11 // pred_region
          %s627 = ssub.s32 16, 16
          %628 = vsyncadd [#allocation27], %s627
          %s630 = sshll.u32 [#allocation28], 4
          %s631 = int_to_ptr.vmem [resolvable:$true] %s630
          %633 = dma.hbm_to_vmem [thread:$0]  %s16, 16, %s631, [#allocation27]
        $region68: #{tpu_custom_call.1} parent=11 // pred_fallthru
          _
      $region12: #{tpu_custom_call.1} parent=5 // pred_fallthru
        _
      %p634 = scmp.lt.s32.totalorder %s39, 2
      // Predicated region
      $region69: #{tpu_custom_call.1} parent=5 // pred_check
        %p635 = pneg %p634
      $region70: #{tpu_custom_call.1} parent=5 // pred_check_branch
        %637 = sbr.rel (%p635) target = $region72
      $region71: #{tpu_custom_call.1} parent=5 // pred_region
        // Predicated region
        $region73: #{tpu_custom_call.1} parent=71 // pred_check
          %p638 = pneg %p73
        $region74: #{tpu_custom_call.1} parent=71 // pred_check_branch
          %640 = sbr.rel (%p638) target = $region76
        $region75: #{tpu_custom_call.1} parent=71 // pred_region
          %s641 = sand.u32 %s63, 1
          %s642 = scalar_lea.sflag [#allocation3], %s641
          %s643 = sand.u32 %s63, 1
          %s644 = smul.addr %s643, 8
          %s645 = scalar_lea.vmem [#allocation2], %s644
          %s647 = ssub.s32 128, 128
          %648 = vsyncadd %s642, %s647
          %s649 = sadd.s32 %s47, %s46
          %s650 = smul.addr %s649, 128
          %s651 = scalar_lea.hbm %s0, %s650
          %s653 = sshll.u32 %s645, 4
          %s654 = int_to_ptr.vmem [resolvable:$true] %s653
          %656 = dma.hbm_to_vmem [thread:$0]  %s651, 128, %s654, %s642
        $region76: #{tpu_custom_call.1} parent=71 // pred_fallthru
          _
        // Predicated region
        $region77: #{tpu_custom_call.1} parent=71 // pred_check
          %p657 = pneg %p99
        $region78: #{tpu_custom_call.1} parent=71 // pred_check_branch
          %659 = sbr.rel (%p657) target = $region80
        $region79: #{tpu_custom_call.1} parent=71 // pred_region
          %s660 = sand.u32 %s39, 1
          %s661 = scalar_lea.sflag [#allocation6], %s660
          %s662 = sand.u32 %s89, 1
          %s663 = smul.addr %s662, 8
          %s664 = scalar_lea.vmem [#allocation5], %s663
          %s666 = ssub.s32 128, 128
          %667 = vsyncadd %s661, %s666
          %s668 = smul.addr %s46, 128
          %s669 = scalar_lea.hbm %s1, %s668
          %s671 = sshll.u32 %s664, 4
          %s672 = int_to_ptr.vmem [resolvable:$true] %s671
          %674 = dma.hbm_to_vmem [thread:$0]  %s669, 128, %s672, %s661
        $region80: #{tpu_custom_call.1} parent=71 // pred_fallthru
          _
        // Predicated region
        $region81: #{tpu_custom_call.1} parent=71 // pred_check
          %p675 = pneg %p127
        $region82: #{tpu_custom_call.1} parent=71 // pred_check_branch
          %677 = sbr.rel (%p675) target = $region84
        $region83: #{tpu_custom_call.1} parent=71 // pred_region
          %s678 = sand.u32 %s39, 1
          %s679 = scalar_lea.sflag [#allocation6], %s678
          %s680 = sand.u32 %s117, 1
          %s681 = smul.addr %s680, 4
          %s682 = scalar_lea.vmem [#allocation7], %s681
          %s684 = ssub.s32 64, 64
          %685 = vsyncadd %s679, %s684
          %s686 = sadd.s32 %s47, %s46
          %s687 = smul.addr %s686, 64
          %s688 = scalar_lea.hbm %s2, %s687
          %s690 = sshll.u32 %s682, 4
          %s691 = int_to_ptr.vmem [resolvable:$true] %s690
          %693 = dma.hbm_to_vmem [thread:$0]  %s688, 64, %s691, %s679
        $region84: #{tpu_custom_call.1} parent=71 // pred_fallthru
          _
      $region72: #{tpu_custom_call.1} parent=5 // pred_fallthru
        _
      %p694 = scmp.le.s32.totalorder 1, %s39
      %p695 = scmp.lt.s32.totalorder %s39, 3
      %p696 = pnand %p694, %p695
      %p697 = pneg %p696
      // Predicated region
      $region85: #{tpu_custom_call.1} parent=5 // pred_check
        _
      $region86: #{tpu_custom_call.1} parent=5 // pred_check_branch
        %699 = sbr.rel (%p696) target = $region88
      $region87: #{tpu_custom_call.1} parent=5 // pred_region
        %s700 = ssub.s32 %s39, 1
        %s701 = sand.u32 %s66, 1
        %s702 = scalar_lea.sflag [#allocation3], %s701
        %s703 = sand.u32 %s66, 1
        %s704 = smul.addr %s703, 8
        %s705 = scalar_lea.vmem [#allocation2], %s704
        // Predicated region
        $region89: #{tpu_custom_call.1} parent=87 // pred_check
          %p706 = pneg %p79
        $region90: #{tpu_custom_call.1} parent=87 // pred_check_branch
          %708 = sbr.rel (%p706) target = $region92
        $region91: #{tpu_custom_call.1} parent=87 // pred_region
          %709 = dma.done %s702, 128
        $region92: #{tpu_custom_call.1} parent=87 // pred_fallthru
          _
        %s710 = sand.u32 %s44, 1
        %s711 = scalar_lea.sflag [#allocation6], %s710
        %s712 = sand.u32 %s92, 1
        %s713 = smul.addr %s712, 8
        %s714 = scalar_lea.vmem [#allocation5], %s713
        // Predicated region
        $region93: #{tpu_custom_call.1} parent=87 // pred_check
          %p715 = pneg %p105
        $region94: #{tpu_custom_call.1} parent=87 // pred_check_branch
          %717 = sbr.rel (%p715) target = $region96
        $region95: #{tpu_custom_call.1} parent=87 // pred_region
          %718 = dma.done %s711, 128
        $region96: #{tpu_custom_call.1} parent=87 // pred_fallthru
          _
        %s719 = sand.u32 %s44, 1
        %s720 = scalar_lea.sflag [#allocation6], %s719
        %s721 = sand.u32 %s120, 1
        %s722 = smul.addr %s721, 4
        %s723 = scalar_lea.vmem [#allocation7], %s722
        // Predicated region
        $region97: #{tpu_custom_call.1} parent=87 // pred_check
          %p724 = pneg %p133
        $region98: #{tpu_custom_call.1} parent=87 // pred_check_branch
          %726 = sbr.rel (%p724) target = $region100
        $region99: #{tpu_custom_call.1} parent=87 // pred_region
          %727 = dma.done %s720, 64
        $region100: #{tpu_custom_call.1} parent=87 // pred_fallthru
          _
        // Predicated region
        $region101: #{tpu_custom_call.1} parent=87 // pred_check
          %p728 = pneg %p154
        $region102: #{tpu_custom_call.1} parent=87 // pred_check_branch
          %730 = sbr.rel (%p728) target = $region104
        $region103: #{tpu_custom_call.1} parent=87 // pred_region
          %731 = dma.done [#allocation9], 256
        $region104: #{tpu_custom_call.1} parent=87 // pred_fallthru
          _
        // Predicated region
        $region105: #{tpu_custom_call.1} parent=87 // pred_check
          %p732 = pneg %p175
        $region106: #{tpu_custom_call.1} parent=87 // pred_check_branch
          %734 = sbr.rel (%p732) target = $region108
        $region107: #{tpu_custom_call.1} parent=87 // pred_region
          %735 = dma.done [#allocation9], 16
        $region108: #{tpu_custom_call.1} parent=87 // pred_fallthru
          _
        // Predicated region
        $region109: #{tpu_custom_call.1} parent=87 // pred_check
          %p736 = pneg %p196
        $region110: #{tpu_custom_call.1} parent=87 // pred_check_branch
          %738 = sbr.rel (%p736) target = $region112
        $region111: #{tpu_custom_call.1} parent=87 // pred_region
          %739 = dma.done [#allocation12], 256
        $region112: #{tpu_custom_call.1} parent=87 // pred_fallthru
          _
        // Predicated region
        $region113: #{tpu_custom_call.1} parent=87 // pred_check
          %p740 = pneg %p217
        $region114: #{tpu_custom_call.1} parent=87 // pred_check_branch
          %742 = sbr.rel (%p740) target = $region116
        $region115: #{tpu_custom_call.1} parent=87 // pred_region
          %743 = dma.done [#allocation12], 16
        $region116: #{tpu_custom_call.1} parent=87 // pred_fallthru
          _
        // Predicated region
        $region117: #{tpu_custom_call.1} parent=87 // pred_check
          %p744 = pneg %p238
        $region118: #{tpu_custom_call.1} parent=87 // pred_check_branch
          %746 = sbr.rel (%p744) target = $region120
        $region119: #{tpu_custom_call.1} parent=87 // pred_region
          %747 = dma.done [#allocation15], 256
        $region120: #{tpu_custom_call.1} parent=87 // pred_fallthru
          _
        // Predicated region
        $region121: #{tpu_custom_call.1} parent=87 // pred_check
          %p748 = pneg %p259
        $region122: #{tpu_custom_call.1} parent=87 // pred_check_branch
          %750 = sbr.rel (%p748) target = $region124
        $region123: #{tpu_custom_call.1} parent=87 // pred_region
          %751 = dma.done [#allocation15], 16
        $region124: #{tpu_custom_call.1} parent=87 // pred_fallthru
          _
        // Predicated region
        $region125: #{tpu_custom_call.1} parent=87 // pred_check
          %p752 = pneg %p280
        $region126: #{tpu_custom_call.1} parent=87 // pred_check_branch
          %754 = sbr.rel (%p752) target = $region128
        $region127: #{tpu_custom_call.1} parent=87 // pred_region
          %755 = dma.done [#allocation18], 16
        $region128: #{tpu_custom_call.1} parent=87 // pred_fallthru
          _
        // Predicated region
        $region129: #{tpu_custom_call.1} parent=87 // pred_check
          %p756 = pneg %p301
        $region130: #{tpu_custom_call.1} parent=87 // pred_check_branch
          %758 = sbr.rel (%p756) target = $region132
        $region131: #{tpu_custom_call.1} parent=87 // pred_region
          %759 = dma.done [#allocation18], 16
        $region132: #{tpu_custom_call.1} parent=87 // pred_fallthru
          _
        // Predicated region
        $region133: #{tpu_custom_call.1} parent=87 // pred_check
          %p760 = pneg %p322
        $region134: #{tpu_custom_call.1} parent=87 // pred_check_branch
          %762 = sbr.rel (%p760) target = $region136
        $region135: #{tpu_custom_call.1} parent=87 // pred_region
          %763 = dma.done [#allocation21], 256
        $region136: #{tpu_custom_call.1} parent=87 // pred_fallthru
          _
        // Predicated region
        $region137: #{tpu_custom_call.1} parent=87 // pred_check
          %p764 = pneg %p343
        $region138: #{tpu_custom_call.1} parent=87 // pred_check_branch
          %766 = sbr.rel (%p764) target = $region140
        $region139: #{tpu_custom_call.1} parent=87 // pred_region
          %767 = dma.done [#allocation21], 16
        $region140: #{tpu_custom_call.1} parent=87 // pred_fallthru
          _
        // Predicated region
        $region141: #{tpu_custom_call.1} parent=87 // pred_check
          %p768 = pneg %p364
        $region142: #{tpu_custom_call.1} parent=87 // pred_check_branch
          %770 = sbr.rel (%p768) target = $region144
        $region143: #{tpu_custom_call.1} parent=87 // pred_region
          %771 = dma.done [#allocation24], 512
        $region144: #{tpu_custom_call.1} parent=87 // pred_fallthru
          _
        // Predicated region
        $region145: #{tpu_custom_call.1} parent=87 // pred_check
          %p772 = pneg %p385
        $region146: #{tpu_custom_call.1} parent=87 // pred_check_branch
          %774 = sbr.rel (%p772) target = $region148
        $region147: #{tpu_custom_call.1} parent=87 // pred_region
          %775 = dma.done [#allocation24], 16
        $region148: #{tpu_custom_call.1} parent=87 // pred_fallthru
          _
        // Predicated region
        $region149: #{tpu_custom_call.1} parent=87 // pred_check
          %p776 = pneg %p406
        $region150: #{tpu_custom_call.1} parent=87 // pred_check_branch
          %778 = sbr.rel (%p776) target = $region152
        $region151: #{tpu_custom_call.1} parent=87 // pred_region
          %779 = dma.done [#allocation27], 16
        $region152: #{tpu_custom_call.1} parent=87 // pred_fallthru
          _
        // Predicated region
        $region153: #{tpu_custom_call.1} parent=87 // pred_check
          %p780 = pneg %p427
        $region154: #{tpu_custom_call.1} parent=87 // pred_check_branch
          %782 = sbr.rel (%p780) target = $region156
        $region155: #{tpu_custom_call.1} parent=87 // pred_region
          %783 = dma.done [#allocation27], 16
        $region156: #{tpu_custom_call.1} parent=87 // pred_fallthru
          _
        %s784 = sand.u32 %s66, 1
        %s785 = scalar_lea.sflag [#allocation3], %s784
        %s786 = sand.u32 %s66, 1
        %s787 = smul.addr %s786, 8
        %s788 = scalar_lea.vmem [#allocation2], %s787
        %p789 = pneg %p79
        %p790 = pneg %p76
        %s791 = sand.u32 %s44, 1
        %s792 = scalar_lea.sflag [#allocation6], %s791
        %s793 = sand.u32 %s92, 1
        %s794 = smul.addr %s793, 8
        %s795 = scalar_lea.vmem [#allocation5], %s794
        %p796 = pneg %p105
        %p797 = pneg %p102
        %s798 = sand.u32 %s44, 1
        %s799 = scalar_lea.sflag [#allocation6], %s798
        %s800 = sand.u32 %s120, 1
        %s801 = smul.addr %s800, 4
        %s802 = scalar_lea.vmem [#allocation7], %s801
        %p803 = pneg %p133
        %p804 = pneg %p130
        %p805 = pneg %p154
        %p806 = pneg %p151
        %p807 = pneg %p175
        %p808 = pneg %p172
        %p809 = pneg %p196
        %p810 = pneg %p193
        %p811 = pneg %p217
        %p812 = pneg %p214
        %p813 = pneg %p238
        %p814 = pneg %p235
        %p815 = pneg %p259
        %p816 = pneg %p256
        %p817 = pneg %p280
        %p818 = pneg %p277
        %p819 = pneg %p301
        %p820 = pneg %p298
        %p821 = pneg %p322
        %p822 = pneg %p319
        %p823 = pneg %p343
        %p824 = pneg %p340
        %p825 = pneg %p364
        %p826 = pneg %p361
        %p827 = pneg %p385
        %p828 = pneg %p382
        %p829 = pneg %p406
        %p830 = pneg %p403
        %p831 = pneg %p427
        %p832 = pneg %p424
        %p833 = pneg %p455
        %p834 = pneg %p452
        %s835 = sand.u32 %s442, 1
        %s836 = scalar_lea.sflag [#allocation4], %s835
        %s837 = sand.u32 %s442, 1
        %s838 = smul.addr %s837, 8
        %s839 = scalar_lea.vmem [#allocation29], %s838
        %v841 = vld [vmem:[%s705] sm:$0xff]
        %v842 = vpack.c.bf16 %v841, %v841
        %v843 = vld [vmem:[#allocation8] sm:$0xf]
        %v844 = vld [vmem:[#allocation8 + $0x4] sm:$0xf]
        %v845 = vld [vmem:[#allocation8 + $0x8] sm:$0xf]
        %v846 = vld [vmem:[#allocation8 + $0xc] sm:$0xf]
        %v847 = vld [vmem:[#allocation10] sm:$0x1]
        %v849 = vlaneseq
        %v850 = vshrl.u32 %v849, 7
        %v851 = vsub.s32 0, %v850
        %v852 = vrot.slane %v847, %v851
        %v858 = vunpack.c.l.b16 %v843
        %v859 = vunpack.c.l.b16 %v844
        %v860 = vunpack.c.l.b16 %v845
        %v861 = vunpack.c.l.b16 %v846
        %v862 = vpack.c.b16 %v859, %v858
        %v863 = vpack.c.b16 %v861, %v860
        %vm866 = vcmask 261120
        %v868 = vsel %vm866, %v842, 0
        %870 = vmatprep.subr.bf16.mxu0 0
        %871 = vmatpush1.bf16.msra.mxu0 %v862
        %872 = vmatprep.subr.bf16.mxu0 0
        %873 = vmatpush1.bf16.msra.mxu0 %v863
        %874 = vmatprep.subr.bf16.mxu0 0
        %875 = vmatpush1.bf16.msra.mxu0 0
        %876 = vmatprep.subr.bf16.mxu0 0
        %877 = vmatpush1.bf16.msra.mxu0 0
        %878 = vmatprep.subr.bf16.mxu0 0
        %879 = vmatpush1.bf16.msra.mxu0 0
        %880 = vmatprep.subr.bf16.mxu0 0
        %881 = vmatpush1.bf16.msra.mxu0 0
        %882 = vmatprep.subr.bf16.mxu0 0
        %883 = vmatpush1.bf16.msra.mxu0 0
        %884 = vmatprep.subr.bf16.mxu0 0
        %885 = vmatpush1.bf16.msra.mxu0 0
        %886 = vmatprep.subr.bf16.mxu0 0
        %887 = vmatpush1.bf16.msra.mxu0 0
        %888 = vmatprep.subr.bf16.mxu0 0
        %889 = vmatpush1.bf16.msra.mxu0 0
        %890 = vmatprep.subr.bf16.mxu0 0
        %891 = vmatpush1.bf16.msra.mxu0 0
        %892 = vmatprep.subr.bf16.mxu0 0
        %893 = vmatpush1.bf16.msra.mxu0 0
        %894 = vmatprep.subr.bf16.mxu0 0
        %895 = vmatpush1.bf16.msra.mxu0 0
        %896 = vmatprep.subr.bf16.mxu0 0
        %897 = vmatpush1.bf16.msra.mxu0 0
        %898 = vmatprep.subr.bf16.mxu0 0
        %899 = vmatpush1.bf16.msra.mxu0 0
        %900 = vmatprep.subr.bf16.mxu0 0
        %901 = vmatpush1.bf16.msra.mxu0 0
        %902 = vmatprep.mubr.bf16.mxu0 0
        %903 = vmatmul.mubr.bf16.gmra.mrb[0].mxu0 %v868
        %v904 = vpop.f32.mrb[0].mxu0
        %v905 = vadd.f32 %v852, %v904
        %v906 = vpop.f32.mrb[0].mxu0
        %v907 = vpop.f32.mrb[0].mxu0
        %v908 = vpop.f32.mrb[0].mxu0
        %909 = vdwg.mxu0
        %v910 = vpack.c.bf16 %v905, %v905
        %v911 = vld [vmem:[%s714] sm:$0xff]
        %v912 = vpack.c.bf16 %v911, %v911
        %v913 = vld [vmem:[#allocation11] sm:$0xf]
        %v914 = vld [vmem:[#allocation11 + $0x4] sm:$0xf]
        %v915 = vld [vmem:[#allocation11 + $0x8] sm:$0xf]
        %v916 = vld [vmem:[#allocation11 + $0xc] sm:$0xf]
        %v917 = vld [vmem:[#allocation13] sm:$0x1]
        %v919 = vlaneseq
        %v920 = vshrl.u32 %v919, 7
        %v921 = vsub.s32 0, %v920
        %v922 = vrot.slane %v917, %v921
        %v928 = vunpack.c.l.b16 %v913
        %v929 = vunpack.c.l.b16 %v914
        %v930 = vunpack.c.l.b16 %v915
        %v931 = vunpack.c.l.b16 %v916
        %v932 = vpack.c.b16 %v929, %v928
        %v933 = vpack.c.b16 %v931, %v930
        %v937 = vsel %vm866, %v912, 0
        %939 = vmatprep.subr.bf16.mxu0 0
        %940 = vmatpush1.bf16.msra.mxu0 %v932
        %941 = vmatprep.subr.bf16.mxu0 0
        %942 = vmatpush1.bf16.msra.mxu0 %v933
        %943 = vmatprep.subr.bf16.mxu0 0
        %944 = vmatpush1.bf16.msra.mxu0 0
        %945 = vmatprep.subr.bf16.mxu0 0
        %946 = vmatpush1.bf16.msra.mxu0 0
        %947 = vmatprep.subr.bf16.mxu0 0
        %948 = vmatpush1.bf16.msra.mxu0 0
        %949 = vmatprep.subr.bf16.mxu0 0
        %950 = vmatpush1.bf16.msra.mxu0 0
        %951 = vmatprep.subr.bf16.mxu0 0
        %952 = vmatpush1.bf16.msra.mxu0 0
        %953 = vmatprep.subr.bf16.mxu0 0
        %954 = vmatpush1.bf16.msra.mxu0 0
        %955 = vmatprep.subr.bf16.mxu0 0
        %956 = vmatpush1.bf16.msra.mxu0 0
        %957 = vmatprep.subr.bf16.mxu0 0
        %958 = vmatpush1.bf16.msra.mxu0 0
        %959 = vmatprep.subr.bf16.mxu0 0
        %960 = vmatpush1.bf16.msra.mxu0 0
        %961 = vmatprep.subr.bf16.mxu0 0
        %962 = vmatpush1.bf16.msra.mxu0 0
        %963 = vmatprep.subr.bf16.mxu0 0
        %964 = vmatpush1.bf16.msra.mxu0 0
        %965 = vmatprep.subr.bf16.mxu0 0
        %966 = vmatpush1.bf16.msra.mxu0 0
        %967 = vmatprep.subr.bf16.mxu0 0
        %968 = vmatpush1.bf16.msra.mxu0 0
        %969 = vmatprep.subr.bf16.mxu0 0
        %970 = vmatpush1.bf16.msra.mxu0 0
        %971 = vmatprep.mubr.bf16.mxu0 0
        %972 = vmatmul.mubr.bf16.gmra.mrb[0].mxu0 %v937
        %v973 = vpop.f32.mrb[0].mxu0
        %v974 = vadd.f32 %v922, %v973
        %v975 = vpop.f32.mrb[0].mxu0
        %v976 = vpop.f32.mrb[0].mxu0
        %v977 = vpop.f32.mrb[0].mxu0
        %978 = vdwg.mxu0
        %v979 = vpack.c.bf16 %v974, %v974
        %v980 = vld [vmem:[%s723] sm:$0xf]
        %v981 = vunpack.c.l.bf16 %v980
        %v982 = vmul.f32 %v981, -1e+09
        %vm983 = vcmask 64512
        %v985 = vsel %vm983, %v910, 0
        %v988 = vsel %vm983, %v979, 0
        %990 = vmatprep.subr.bf16.mxu0 0
        %991 = vmatpush1.bf16.xpose.msra.mxu0 %v988
        %992 = vmatprep.subr.bf16.mxu0 0
        %993 = vmatpush1.bf16.xpose.msra.mxu0 0
        %994 = vmatprep.subr.bf16.mxu0 0
        %995 = vmatpush1.bf16.xpose.msra.mxu0 0
        %996 = vmatprep.subr.bf16.mxu0 0
        %997 = vmatpush1.bf16.xpose.msra.mxu0 0
        %998 = vmatprep.subr.bf16.mxu0 0
        %999 = vmatpush1.bf16.xpose.msra.mxu0 0
        %1000 = vmatprep.subr.bf16.mxu0 0
        %1001 = vmatpush1.bf16.xpose.msra.mxu0 0
        %1002 = vmatprep.subr.bf16.mxu0 0
        %1003 = vmatpush1.bf16.xpose.msra.mxu0 0
        %1004 = vmatprep.subr.bf16.mxu0 0
        %1005 = vmatpush1.bf16.xpose.msra.mxu0 0
        %1006 = vmatprep.subr.bf16.mxu0 0
        %1007 = vmatpush1.bf16.xpose.msra.mxu0 0
        %1008 = vmatprep.subr.bf16.mxu0 0
        %1009 = vmatpush1.bf16.xpose.msra.mxu0 0
        %1010 = vmatprep.subr.bf16.mxu0 0
        %1011 = vmatpush1.bf16.xpose.msra.mxu0 0
        %1012 = vmatprep.subr.bf16.mxu0 0
        %1013 = vmatpush1.bf16.xpose.msra.mxu0 0
        %1014 = vmatprep.subr.bf16.mxu0 0
        %1015 = vmatpush1.bf16.xpose.msra.mxu0 0
        %1016 = vmatprep.subr.bf16.mxu0 0
        %1017 = vmatpush1.bf16.xpose.msra.mxu0 0
        %1018 = vmatprep.subr.bf16.mxu0 0
        %1019 = vmatpush1.bf16.xpose.msra.mxu0 0
        %1020 = vmatprep.subr.bf16.mxu0 0
        %1021 = vmatpush1.bf16.xpose.msra.mxu0 0
        %1022 = vmatprep.mubr.bf16.mxu0 0
        %1023 = vmatmul.mubr.bf16.gmra.mrb[0].mxu0 %v985
        %v1024 = vpop.f32.mrb[0].mxu0
        %v1025 = vadd.f32 %v982, %v1024
        %v1026 = vpop.f32.mrb[0].mxu0
        %v1027 = vpop.f32.mrb[0].mxu0
        %v1028 = vpop.f32.mrb[0].mxu0
        %1029 = vdwg.mxu0
        %v1030 = vsel %vm983, %v1025, -inf
        %1031 = vmax.xlane.f32.xlu0 %v1030
        %v1032 = vpop.xlane.xlu0 %1031
        %v1033 = vsub.f32 %v1025, %v1032
        %v1034 = vmul.f32 %v1033, 1.442695
        %v1035 = vpow.pop %v1034
        %v1036 = vsel %vm983, %v1035, 0.0
        %1037 = vadd.xlane.f32.xlu0 %v1036
        %v1038 = vpop.xlane.xlu0 %1037
        %v1039 = vpack.c.bf16 %v1035, %v1035
        %1041 = vrot.lane.b32.xlu0 %v979, 96
        %v1042 = vpop.permute.xlu0 %1041
        %v1044 = vsel %vm983, %v1039, 0
        %vm1046 = vcmask 1043456
        %v1048 = vsel %vm1046, %v1042, 0
        %1050 = vmatprep.subr.bf16.mxu0 0
        %1051 = vmatpush1.bf16.msra.mxu0 %v1048
        %1052 = vmatprep.subr.bf16.mxu0 0
        %1053 = vmatpush1.bf16.msra.mxu0 0
        %1054 = vmatprep.subr.bf16.mxu0 0
        %1055 = vmatpush1.bf16.msra.mxu0 0
        %1056 = vmatprep.subr.bf16.mxu0 0
        %1057 = vmatpush1.bf16.msra.mxu0 0
        %1058 = vmatprep.subr.bf16.mxu0 0
        %1059 = vmatpush1.bf16.msra.mxu0 0
        %1060 = vmatprep.subr.bf16.mxu0 0
        %1061 = vmatpush1.bf16.msra.mxu0 0
        %1062 = vmatprep.subr.bf16.mxu0 0
        %1063 = vmatpush1.bf16.msra.mxu0 0
        %1064 = vmatprep.subr.bf16.mxu0 0
        %1065 = vmatpush1.bf16.msra.mxu0 0
        %1066 = vmatprep.subr.bf16.mxu0 0
        %1067 = vmatpush1.bf16.msra.mxu0 0
        %1068 = vmatprep.subr.bf16.mxu0 0
        %1069 = vmatpush1.bf16.msra.mxu0 0
        %1070 = vmatprep.subr.bf16.mxu0 0
        %1071 = vmatpush1.bf16.msra.mxu0 0
        %1072 = vmatprep.subr.bf16.mxu0 0
        %1073 = vmatpush1.bf16.msra.mxu0 0
        %1074 = vmatprep.subr.bf16.mxu0 0
        %1075 = vmatpush1.bf16.msra.mxu0 0
        %1076 = vmatprep.subr.bf16.mxu0 0
        %1077 = vmatpush1.bf16.msra.mxu0 0
        %1078 = vmatprep.subr.bf16.mxu0 0
        %1079 = vmatpush1.bf16.msra.mxu0 0
        %1080 = vmatprep.subr.bf16.mxu0 0
        %1081 = vmatpush1.bf16.msra.mxu0 0
        %1082 = vmatprep.mubr.bf16.mxu0 0
        %1083 = vmatmul.mubr.bf16.gmra.mrb[0].mxu0 %v1044
        %v1084 = vpop.f32.mrb[0].mxu0
        %v1085 = vadd.f32 0.0, %v1084
        %v1086 = vpop.f32.mrb[0].mxu0
        %v1087 = vpop.f32.mrb[0].mxu0
        %v1088 = vpop.f32.mrb[0].mxu0
        %1089 = vdwg.mxu0
        %v1090 = vrcp.pop %v1038
        %v1091 = vmul.f32 %v1085, %v1090
        %v1092 = vpack.c.bf16 %v1091, %v1091
        %v1093 = vld [vmem:[#allocation14] sm:$0xf]
        %1095 = vrot.lane.b32.xlu0 %v910, 120
        %v1096 = vpop.permute.xlu0 %1095
        %1097 = vrot.lane.b32.xlu0 %v979, 120
        %v1098 = vpop.permute.xlu0 %1097
        %v1100 = vsel %vm983, %v1096, 0
        %v1103 = vsel %vm983, %v1098, 0
        %1105 = vmatprep.subr.bf16.mxu0 0
        %1106 = vmatpush1.bf16.xpose.msra.mxu0 %v1103
        %1107 = vmatprep.subr.bf16.mxu0 0
        %1108 = vmatpush1.bf16.xpose.msra.mxu0 0
        %1109 = vmatprep.subr.bf16.mxu0 0
        %1110 = vmatpush1.bf16.xpose.msra.mxu0 0
        %1111 = vmatprep.subr.bf16.mxu0 0
        %1112 = vmatpush1.bf16.xpose.msra.mxu0 0
        %1113 = vmatprep.subr.bf16.mxu0 0
        %1114 = vmatpush1.bf16.xpose.msra.mxu0 0
        %1115 = vmatprep.subr.bf16.mxu0 0
        %1116 = vmatpush1.bf16.xpose.msra.mxu0 0
        %1117 = vmatprep.subr.bf16.mxu0 0
        %1118 = vmatpush1.bf16.xpose.msra.mxu0 0
        %1119 = vmatprep.subr.bf16.mxu0 0
        %1120 = vmatpush1.bf16.xpose.msra.mxu0 0
        %1121 = vmatprep.subr.bf16.mxu0 0
        %1122 = vmatpush1.bf16.xpose.msra.mxu0 0
        %1123 = vmatprep.subr.bf16.mxu0 0
        %1124 = vmatpush1.bf16.xpose.msra.mxu0 0
        %1125 = vmatprep.subr.bf16.mxu0 0
        %1126 = vmatpush1.bf16.xpose.msra.mxu0 0
        %1127 = vmatprep.subr.bf16.mxu0 0
        %1128 = vmatpush1.bf16.xpose.msra.mxu0 0
        %1129 = vmatprep.subr.bf16.mxu0 0
        %1130 = vmatpush1.bf16.xpose.msra.mxu0 0
        %1131 = vmatprep.subr.bf16.mxu0 0
        %1132 = vmatpush1.bf16.xpose.msra.mxu0 0
        %1133 = vmatprep.subr.bf16.mxu0 0
        %1134 = vmatpush1.bf16.xpose.msra.mxu0 0
        %1135 = vmatprep.subr.bf16.mxu0 0
        %1136 = vmatpush1.bf16.xpose.msra.mxu0 0
        %1137 = vmatprep.mubr.bf16.mxu0 0
        %1138 = vmatmul.mubr.bf16.gmra.mrb[0].mxu0 %v1100
        %v1139 = vpop.f32.mrb[0].mxu0
        %v1140 = vadd.f32 %v982, %v1139
        %v1141 = vpop.f32.mrb[0].mxu0
        %v1142 = vpop.f32.mrb[0].mxu0
        %v1143 = vpop.f32.mrb[0].mxu0
        %1144 = vdwg.mxu0
        %v1145 = vsel %vm983, %v1140, -inf
        %1146 = vmax.xlane.f32.xlu0 %v1145
        %v1147 = vpop.xlane.xlu0 %1146
        %v1148 = vsub.f32 %v1140, %v1147
        %v1149 = vmul.f32 %v1148, 1.442695
        %v1150 = vpow.pop %v1149
        %v1151 = vsel %vm983, %v1150, 0.0
        %1152 = vadd.xlane.f32.xlu0 %v1151
        %v1153 = vpop.xlane.xlu0 %1152
        %v1154 = vpack.c.bf16 %v1150, %v1150
        %1155 = vrot.lane.b32.xlu0 %v979, 88
        %v1156 = vpop.permute.xlu0 %1155
        %v1158 = vsel %vm983, %v1154, 0
        %v1161 = vsel %vm1046, %v1156, 0
        %1163 = vmatprep.subr.bf16.mxu0 0
        %1164 = vmatpush1.bf16.msra.mxu0 %v1161
        %1165 = vmatprep.subr.bf16.mxu0 0
        %1166 = vmatpush1.bf16.msra.mxu0 0
        %1167 = vmatprep.subr.bf16.mxu0 0
        %1168 = vmatpush1.bf16.msra.mxu0 0
        %1169 = vmatprep.subr.bf16.mxu0 0
        %1170 = vmatpush1.bf16.msra.mxu0 0
        %1171 = vmatprep.subr.bf16.mxu0 0
        %1172 = vmatpush1.bf16.msra.mxu0 0
        %1173 = vmatprep.subr.bf16.mxu0 0
        %1174 = vmatpush1.bf16.msra.mxu0 0
        %1175 = vmatprep.subr.bf16.mxu0 0
        %1176 = vmatpush1.bf16.msra.mxu0 0
        %1177 = vmatprep.subr.bf16.mxu0 0
        %1178 = vmatpush1.bf16.msra.mxu0 0
        %1179 = vmatprep.subr.bf16.mxu0 0
        %1180 = vmatpush1.bf16.msra.mxu0 0
        %1181 = vmatprep.subr.bf16.mxu0 0
        %1182 = vmatpush1.bf16.msra.mxu0 0
        %1183 = vmatprep.subr.bf16.mxu0 0
        %1184 = vmatpush1.bf16.msra.mxu0 0
        %1185 = vmatprep.subr.bf16.mxu0 0
        %1186 = vmatpush1.bf16.msra.mxu0 0
        %1187 = vmatprep.subr.bf16.mxu0 0
        %1188 = vmatpush1.bf16.msra.mxu0 0
        %1189 = vmatprep.subr.bf16.mxu0 0
        %1190 = vmatpush1.bf16.msra.mxu0 0
        %1191 = vmatprep.subr.bf16.mxu0 0
        %1192 = vmatpush1.bf16.msra.mxu0 0
        %1193 = vmatprep.subr.bf16.mxu0 0
        %1194 = vmatpush1.bf16.msra.mxu0 0
        %1195 = vmatprep.mubr.bf16.mxu0 0
        %1196 = vmatmul.mubr.bf16.gmra.mrb[0].mxu0 %v1158
        %v1197 = vpop.f32.mrb[0].mxu0
        %v1198 = vadd.f32 0.0, %v1197
        %v1199 = vpop.f32.mrb[0].mxu0
        %v1200 = vpop.f32.mrb[0].mxu0
        %v1201 = vpop.f32.mrb[0].mxu0
        %1202 = vdwg.mxu0
        %v1203 = vrcp.pop %v1153
        %v1204 = vmul.f32 %v1198, %v1203
        %v1205 = vpack.c.bf16 %v1204, %v1204
        %s1206 = scalar_lea.vmem [#allocation14], 4
        %v1207 = vld [vmem:[%s1206] sm:$0xf]
        %v1209 = vsel %vm983, %v1205, 0
        %v1212 = vsel %vm1046, %v1207, 0
        %1214 = vmatprep.subr.bf16.mxu0 0
        %1215 = vmatpush1.bf16.msra.mxu0 %v1212
        %1216 = vmatprep.subr.bf16.mxu0 0
        %1217 = vmatpush1.bf16.msra.mxu0 0
        %1218 = vmatprep.subr.bf16.mxu0 0
        %1219 = vmatpush1.bf16.msra.mxu0 0
        %1220 = vmatprep.subr.bf16.mxu0 0
        %1221 = vmatpush1.bf16.msra.mxu0 0
        %1222 = vmatprep.subr.bf16.mxu0 0
        %1223 = vmatpush1.bf16.msra.mxu0 0
        %1224 = vmatprep.subr.bf16.mxu0 0
        %1225 = vmatpush1.bf16.msra.mxu0 0
        %1226 = vmatprep.subr.bf16.mxu0 0
        %1227 = vmatpush1.bf16.msra.mxu0 0
        %1228 = vmatprep.subr.bf16.mxu0 0
        %1229 = vmatpush1.bf16.msra.mxu0 0
        %1230 = vmatprep.subr.bf16.mxu0 0
        %1231 = vmatpush1.bf16.msra.mxu0 0
        %1232 = vmatprep.subr.bf16.mxu0 0
        %1233 = vmatpush1.bf16.msra.mxu0 0
        %1234 = vmatprep.subr.bf16.mxu0 0
        %1235 = vmatpush1.bf16.msra.mxu0 0
        %1236 = vmatprep.subr.bf16.mxu0 0
        %1237 = vmatpush1.bf16.msra.mxu0 0
        %1238 = vmatprep.subr.bf16.mxu0 0
        %1239 = vmatpush1.bf16.msra.mxu0 0
        %1240 = vmatprep.subr.bf16.mxu0 0
        %1241 = vmatpush1.bf16.msra.mxu0 0
        %1242 = vmatprep.subr.bf16.mxu0 0
        %1243 = vmatpush1.bf16.msra.mxu0 0
        %1244 = vmatprep.subr.bf16.mxu0 0
        %1245 = vmatpush1.bf16.msra.mxu0 0
        %1246 = vmatprep.mubr.bf16.mxu0 0
        %1247 = vmatmul.mubr.bf16.gmra.mrb[0].mxu0 %v1209
        %v1248 = vpop.f32.mrb[0].mxu0
        %v1249 = vadd.f32 0.0, %v1248
        %v1250 = vpop.f32.mrb[0].mxu0
        %v1251 = vpop.f32.mrb[0].mxu0
        %v1252 = vpop.f32.mrb[0].mxu0
        %1253 = vdwg.mxu0
        %v1255 = vsel %vm983, %v1092, 0
        %v1258 = vsel %vm1046, %v1093, 0
        %1260 = vmatprep.subr.bf16.mxu0 0
        %1261 = vmatpush1.bf16.msra.mxu0 %v1258
        %1262 = vmatprep.subr.bf16.mxu0 0
        %1263 = vmatpush1.bf16.msra.mxu0 0
        %1264 = vmatprep.subr.bf16.mxu0 0
        %1265 = vmatpush1.bf16.msra.mxu0 0
        %1266 = vmatprep.subr.bf16.mxu0 0
        %1267 = vmatpush1.bf16.msra.mxu0 0
        %1268 = vmatprep.subr.bf16.mxu0 0
        %1269 = vmatpush1.bf16.msra.mxu0 0
        %1270 = vmatprep.subr.bf16.mxu0 0
        %1271 = vmatpush1.bf16.msra.mxu0 0
        %1272 = vmatprep.subr.bf16.mxu0 0
        %1273 = vmatpush1.bf16.msra.mxu0 0
        %1274 = vmatprep.subr.bf16.mxu0 0
        %1275 = vmatpush1.bf16.msra.mxu0 0
        %1276 = vmatprep.subr.bf16.mxu0 0
        %1277 = vmatpush1.bf16.msra.mxu0 0
        %1278 = vmatprep.subr.bf16.mxu0 0
        %1279 = vmatpush1.bf16.msra.mxu0 0
        %1280 = vmatprep.subr.bf16.mxu0 0
        %1281 = vmatpush1.bf16.msra.mxu0 0
        %1282 = vmatprep.subr.bf16.mxu0 0
        %1283 = vmatpush1.bf16.msra.mxu0 0
        %1284 = vmatprep.subr.bf16.mxu0 0
        %1285 = vmatpush1.bf16.msra.mxu0 0
        %1286 = vmatprep.subr.bf16.mxu0 0
        %1287 = vmatpush1.bf16.msra.mxu0 0
        %1288 = vmatprep.subr.bf16.mxu0 0
        %1289 = vmatpush1.bf16.msra.mxu0 0
        %1290 = vmatprep.subr.bf16.mxu0 0
        %1291 = vmatpush1.bf16.msra.mxu0 0
        %1292 = vmatprep.mubr.bf16.mxu0 0
        %1293 = vmatmul.mubr.bf16.gmra.mrb[0].mxu0 %v1255
        %v1294 = vpop.f32.mrb[0].mxu0
        %v1295 = vadd.f32 %v1249, %v1294
        %v1296 = vpop.f32.mrb[0].mxu0
        %v1297 = vpop.f32.mrb[0].mxu0
        %v1298 = vpop.f32.mrb[0].mxu0
        %1299 = vdwg.mxu0
        %1300 = vrot.lane.b32.xlu0 %v910, 112
        %v1301 = vpop.permute.xlu0 %1300
        %1302 = vrot.lane.b32.xlu0 %v979, 112
        %v1303 = vpop.permute.xlu0 %1302
        %v1305 = vsel %vm983, %v1301, 0
        %v1308 = vsel %vm983, %v1303, 0
        %1310 = vmatprep.subr.bf16.mxu0 0
        %1311 = vmatpush1.bf16.xpose.msra.mxu0 %v1308
        %1312 = vmatprep.subr.bf16.mxu0 0
        %1313 = vmatpush1.bf16.xpose.msra.mxu0 0
        %1314 = vmatprep.subr.bf16.mxu0 0
        %1315 = vmatpush1.bf16.xpose.msra.mxu0 0
        %1316 = vmatprep.subr.bf16.mxu0 0
        %1317 = vmatpush1.bf16.xpose.msra.mxu0 0
        %1318 = vmatprep.subr.bf16.mxu0 0
        %1319 = vmatpush1.bf16.xpose.msra.mxu0 0
        %1320 = vmatprep.subr.bf16.mxu0 0
        %1321 = vmatpush1.bf16.xpose.msra.mxu0 0
        %1322 = vmatprep.subr.bf16.mxu0 0
        %1323 = vmatpush1.bf16.xpose.msra.mxu0 0
        %1324 = vmatprep.subr.bf16.mxu0 0
        %1325 = vmatpush1.bf16.xpose.msra.mxu0 0
        %1326 = vmatprep.subr.bf16.mxu0 0
        %1327 = vmatpush1.bf16.xpose.msra.mxu0 0
        %1328 = vmatprep.subr.bf16.mxu0 0
        %1329 = vmatpush1.bf16.xpose.msra.mxu0 0
        %1330 = vmatprep.subr.bf16.mxu0 0
        %1331 = vmatpush1.bf16.xpose.msra.mxu0 0
        %1332 = vmatprep.subr.bf16.mxu0 0
        %1333 = vmatpush1.bf16.xpose.msra.mxu0 0
        %1334 = vmatprep.subr.bf16.mxu0 0
        %1335 = vmatpush1.bf16.xpose.msra.mxu0 0
        %1336 = vmatprep.subr.bf16.mxu0 0
        %1337 = vmatpush1.bf16.xpose.msra.mxu0 0
        %1338 = vmatprep.subr.bf16.mxu0 0
        %1339 = vmatpush1.bf16.xpose.msra.mxu0 0
        %1340 = vmatprep.subr.bf16.mxu0 0
        %1341 = vmatpush1.bf16.xpose.msra.mxu0 0
        %1342 = vmatprep.mubr.bf16.mxu0 0
        %1343 = vmatmul.mubr.bf16.gmra.mrb[0].mxu0 %v1305
        %v1344 = vpop.f32.mrb[0].mxu0
        %v1345 = vadd.f32 %v982, %v1344
        %v1346 = vpop.f32.mrb[0].mxu0
        %v1347 = vpop.f32.mrb[0].mxu0
        %v1348 = vpop.f32.mrb[0].mxu0
        %1349 = vdwg.mxu0
        %v1350 = vsel %vm983, %v1345, -inf
        %1351 = vmax.xlane.f32.xlu0 %v1350
        %v1352 = vpop.xlane.xlu0 %1351
        %v1353 = vsub.f32 %v1345, %v1352
        %v1354 = vmul.f32 %v1353, 1.442695
        %v1355 = vpow.pop %v1354
        %v1356 = vsel %vm983, %v1355, 0.0
        %1357 = vadd.xlane.f32.xlu0 %v1356
        %v1358 = vpop.xlane.xlu0 %1357
        %v1359 = vpack.c.bf16 %v1355, %v1355
        %1360 = vrot.lane.b32.xlu0 %v979, 80
        %v1361 = vpop.permute.xlu0 %1360
        %v1363 = vsel %vm983, %v1359, 0
        %v1366 = vsel %vm1046, %v1361, 0
        %1368 = vmatprep.subr.bf16.mxu0 0
        %1369 = vmatpush1.bf16.msra.mxu0 %v1366
        %1370 = vmatprep.subr.bf16.mxu0 0
        %1371 = vmatpush1.bf16.msra.mxu0 0
        %1372 = vmatprep.subr.bf16.mxu0 0
        %1373 = vmatpush1.bf16.msra.mxu0 0
        %1374 = vmatprep.subr.bf16.mxu0 0
        %1375 = vmatpush1.bf16.msra.mxu0 0
        %1376 = vmatprep.subr.bf16.mxu0 0
        %1377 = vmatpush1.bf16.msra.mxu0 0
        %1378 = vmatprep.subr.bf16.mxu0 0
        %1379 = vmatpush1.bf16.msra.mxu0 0
        %1380 = vmatprep.subr.bf16.mxu0 0
        %1381 = vmatpush1.bf16.msra.mxu0 0
        %1382 = vmatprep.subr.bf16.mxu0 0
        %1383 = vmatpush1.bf16.msra.mxu0 0
        %1384 = vmatprep.subr.bf16.mxu0 0
        %1385 = vmatpush1.bf16.msra.mxu0 0
        %1386 = vmatprep.subr.bf16.mxu0 0
        %1387 = vmatpush1.bf16.msra.mxu0 0
        %1388 = vmatprep.subr.bf16.mxu0 0
        %1389 = vmatpush1.bf16.msra.mxu0 0
        %1390 = vmatprep.subr.bf16.mxu0 0
        %1391 = vmatpush1.bf16.msra.mxu0 0
        %1392 = vmatprep.subr.bf16.mxu0 0
        %1393 = vmatpush1.bf16.msra.mxu0 0
        %1394 = vmatprep.subr.bf16.mxu0 0
        %1395 = vmatpush1.bf16.msra.mxu0 0
        %1396 = vmatprep.subr.bf16.mxu0 0
        %1397 = vmatpush1.bf16.msra.mxu0 0
        %1398 = vmatprep.subr.bf16.mxu0 0
        %1399 = vmatpush1.bf16.msra.mxu0 0
        %1400 = vmatprep.mubr.bf16.mxu0 0
        %1401 = vmatmul.mubr.bf16.gmra.mrb[0].mxu0 %v1363
        %v1402 = vpop.f32.mrb[0].mxu0
        %v1403 = vadd.f32 0.0, %v1402
        %v1404 = vpop.f32.mrb[0].mxu0
        %v1405 = vpop.f32.mrb[0].mxu0
        %v1406 = vpop.f32.mrb[0].mxu0
        %1407 = vdwg.mxu0
        %v1408 = vrcp.pop %v1358
        %v1409 = vmul.f32 %v1403, %v1408
        %v1410 = vpack.c.bf16 %v1409, %v1409
        %s1411 = scalar_lea.vmem [#allocation14], 8
        %v1412 = vld [vmem:[%s1411] sm:$0xf]
        %v1414 = vsel %vm983, %v1410, 0
        %v1417 = vsel %vm1046, %v1412, 0
        %1419 = vmatprep.subr.bf16.mxu0 0
        %1420 = vmatpush1.bf16.msra.mxu0 %v1417
        %1421 = vmatprep.subr.bf16.mxu0 0
        %1422 = vmatpush1.bf16.msra.mxu0 0
        %1423 = vmatprep.subr.bf16.mxu0 0
        %1424 = vmatpush1.bf16.msra.mxu0 0
        %1425 = vmatprep.subr.bf16.mxu0 0
        %1426 = vmatpush1.bf16.msra.mxu0 0
        %1427 = vmatprep.subr.bf16.mxu0 0
        %1428 = vmatpush1.bf16.msra.mxu0 0
        %1429 = vmatprep.subr.bf16.mxu0 0
        %1430 = vmatpush1.bf16.msra.mxu0 0
        %1431 = vmatprep.subr.bf16.mxu0 0
        %1432 = vmatpush1.bf16.msra.mxu0 0
        %1433 = vmatprep.subr.bf16.mxu0 0
        %1434 = vmatpush1.bf16.msra.mxu0 0
        %1435 = vmatprep.subr.bf16.mxu0 0
        %1436 = vmatpush1.bf16.msra.mxu0 0
        %1437 = vmatprep.subr.bf16.mxu0 0
        %1438 = vmatpush1.bf16.msra.mxu0 0
        %1439 = vmatprep.subr.bf16.mxu0 0
        %1440 = vmatpush1.bf16.msra.mxu0 0
        %1441 = vmatprep.subr.bf16.mxu0 0
        %1442 = vmatpush1.bf16.msra.mxu0 0
        %1443 = vmatprep.subr.bf16.mxu0 0
        %1444 = vmatpush1.bf16.msra.mxu0 0
        %1445 = vmatprep.subr.bf16.mxu0 0
        %1446 = vmatpush1.bf16.msra.mxu0 0
        %1447 = vmatprep.subr.bf16.mxu0 0
        %1448 = vmatpush1.bf16.msra.mxu0 0
        %1449 = vmatprep.subr.bf16.mxu0 0
        %1450 = vmatpush1.bf16.msra.mxu0 0
        %1451 = vmatprep.mubr.bf16.mxu0 0
        %1452 = vmatmul.mubr.bf16.gmra.mrb[0].mxu0 %v1414
        %v1453 = vpop.f32.mrb[0].mxu0
        %v1454 = vadd.f32 0.0, %v1453
        %v1455 = vpop.f32.mrb[0].mxu0
        %v1456 = vpop.f32.mrb[0].mxu0
        %v1457 = vpop.f32.mrb[0].mxu0
        %1458 = vdwg.mxu0
        %v1459 = vadd.f32 %v1295, %v1454
        %1460 = vrot.lane.b32.xlu0 %v910, 104
        %v1461 = vpop.permute.xlu0 %1460
        %1462 = vrot.lane.b32.xlu0 %v979, 104
        %v1463 = vpop.permute.xlu0 %1462
        %v1465 = vsel %vm983, %v1461, 0
        %v1468 = vsel %vm983, %v1463, 0
        %1470 = vmatprep.subr.bf16.mxu0 0
        %1471 = vmatpush1.bf16.xpose.msra.mxu0 %v1468
        %1472 = vmatprep.subr.bf16.mxu0 0
        %1473 = vmatpush1.bf16.xpose.msra.mxu0 0
        %1474 = vmatprep.subr.bf16.mxu0 0
        %1475 = vmatpush1.bf16.xpose.msra.mxu0 0
        %1476 = vmatprep.subr.bf16.mxu0 0
        %1477 = vmatpush1.bf16.xpose.msra.mxu0 0
        %1478 = vmatprep.subr.bf16.mxu0 0
        %1479 = vmatpush1.bf16.xpose.msra.mxu0 0
        %1480 = vmatprep.subr.bf16.mxu0 0
        %1481 = vmatpush1.bf16.xpose.msra.mxu0 0
        %1482 = vmatprep.subr.bf16.mxu0 0
        %1483 = vmatpush1.bf16.xpose.msra.mxu0 0
        %1484 = vmatprep.subr.bf16.mxu0 0
        %1485 = vmatpush1.bf16.xpose.msra.mxu0 0
        %1486 = vmatprep.subr.bf16.mxu0 0
        %1487 = vmatpush1.bf16.xpose.msra.mxu0 0
        %1488 = vmatprep.subr.bf16.mxu0 0
        %1489 = vmatpush1.bf16.xpose.msra.mxu0 0
        %1490 = vmatprep.subr.bf16.mxu0 0
        %1491 = vmatpush1.bf16.xpose.msra.mxu0 0
        %1492 = vmatprep.subr.bf16.mxu0 0
        %1493 = vmatpush1.bf16.xpose.msra.mxu0 0
        %1494 = vmatprep.subr.bf16.mxu0 0
        %1495 = vmatpush1.bf16.xpose.msra.mxu0 0
        %1496 = vmatprep.subr.bf16.mxu0 0
        %1497 = vmatpush1.bf16.xpose.msra.mxu0 0
        %1498 = vmatprep.subr.bf16.mxu0 0
        %1499 = vmatpush1.bf16.xpose.msra.mxu0 0
        %1500 = vmatprep.subr.bf16.mxu0 0
        %1501 = vmatpush1.bf16.xpose.msra.mxu0 0
        %1502 = vmatprep.mubr.bf16.mxu0 0
        %1503 = vmatmul.mubr.bf16.gmra.mrb[0].mxu0 %v1465
        %v1504 = vpop.f32.mrb[0].mxu0
        %v1505 = vadd.f32 %v982, %v1504
        %v1506 = vpop.f32.mrb[0].mxu0
        %v1507 = vpop.f32.mrb[0].mxu0
        %v1508 = vpop.f32.mrb[0].mxu0
        %1509 = vdwg.mxu0
        %v1510 = vsel %vm983, %v1505, -inf
        %1511 = vmax.xlane.f32.xlu0 %v1510
        %v1512 = vpop.xlane.xlu0 %1511
        %v1513 = vsub.f32 %v1505, %v1512
        %v1514 = vmul.f32 %v1513, 1.442695
        %v1515 = vpow.pop %v1514
        %v1516 = vsel %vm983, %v1515, 0.0
        %1517 = vadd.xlane.f32.xlu0 %v1516
        %v1518 = vpop.xlane.xlu0 %1517
        %v1519 = vpack.c.bf16 %v1515, %v1515
        %1520 = vrot.lane.b32.xlu0 %v979, 72
        %v1521 = vpop.permute.xlu0 %1520
        %v1523 = vsel %vm983, %v1519, 0
        %v1526 = vsel %vm1046, %v1521, 0
        %1528 = vmatprep.subr.bf16.mxu0 0
        %1529 = vmatpush1.bf16.msra.mxu0 %v1526
        %1530 = vmatprep.subr.bf16.mxu0 0
        %1531 = vmatpush1.bf16.msra.mxu0 0
        %1532 = vmatprep.subr.bf16.mxu0 0
        %1533 = vmatpush1.bf16.msra.mxu0 0
        %1534 = vmatprep.subr.bf16.mxu0 0
        %1535 = vmatpush1.bf16.msra.mxu0 0
        %1536 = vmatprep.subr.bf16.mxu0 0
        %1537 = vmatpush1.bf16.msra.mxu0 0
        %1538 = vmatprep.subr.bf16.mxu0 0
        %1539 = vmatpush1.bf16.msra.mxu0 0
        %1540 = vmatprep.subr.bf16.mxu0 0
        %1541 = vmatpush1.bf16.msra.mxu0 0
        %1542 = vmatprep.subr.bf16.mxu0 0
        %1543 = vmatpush1.bf16.msra.mxu0 0
        %1544 = vmatprep.subr.bf16.mxu0 0
        %1545 = vmatpush1.bf16.msra.mxu0 0
        %1546 = vmatprep.subr.bf16.mxu0 0
        %1547 = vmatpush1.bf16.msra.mxu0 0
        %1548 = vmatprep.subr.bf16.mxu0 0
        %1549 = vmatpush1.bf16.msra.mxu0 0
        %1550 = vmatprep.subr.bf16.mxu0 0
        %1551 = vmatpush1.bf16.msra.mxu0 0
        %1552 = vmatprep.subr.bf16.mxu0 0
        %1553 = vmatpush1.bf16.msra.mxu0 0
        %1554 = vmatprep.subr.bf16.mxu0 0
        %1555 = vmatpush1.bf16.msra.mxu0 0
        %1556 = vmatprep.subr.bf16.mxu0 0
        %1557 = vmatpush1.bf16.msra.mxu0 0
        %1558 = vmatprep.subr.bf16.mxu0 0
        %1559 = vmatpush1.bf16.msra.mxu0 0
        %1560 = vmatprep.mubr.bf16.mxu0 0
        %1561 = vmatmul.mubr.bf16.gmra.mrb[0].mxu0 %v1523
        %v1562 = vpop.f32.mrb[0].mxu0
        %v1563 = vadd.f32 0.0, %v1562
        %v1564 = vpop.f32.mrb[0].mxu0
        %v1565 = vpop.f32.mrb[0].mxu0
        %v1566 = vpop.f32.mrb[0].mxu0
        %1567 = vdwg.mxu0
        %v1568 = vrcp.pop %v1518
        %v1569 = vmul.f32 %v1563, %v1568
        %v1570 = vpack.c.bf16 %v1569, %v1569
        %s1571 = scalar_lea.vmem [#allocation14], 12
        %v1572 = vld [vmem:[%s1571] sm:$0xf]
        %v1574 = vsel %vm983, %v1570, 0
        %v1577 = vsel %vm1046, %v1572, 0
        %1579 = vmatprep.subr.bf16.mxu0 0
        %1580 = vmatpush1.bf16.msra.mxu0 %v1577
        %1581 = vmatprep.subr.bf16.mxu0 0
        %1582 = vmatpush1.bf16.msra.mxu0 0
        %1583 = vmatprep.subr.bf16.mxu0 0
        %1584 = vmatpush1.bf16.msra.mxu0 0
        %1585 = vmatprep.subr.bf16.mxu0 0
        %1586 = vmatpush1.bf16.msra.mxu0 0
        %1587 = vmatprep.subr.bf16.mxu0 0
        %1588 = vmatpush1.bf16.msra.mxu0 0
        %1589 = vmatprep.subr.bf16.mxu0 0
        %1590 = vmatpush1.bf16.msra.mxu0 0
        %1591 = vmatprep.subr.bf16.mxu0 0
        %1592 = vmatpush1.bf16.msra.mxu0 0
        %1593 = vmatprep.subr.bf16.mxu0 0
        %1594 = vmatpush1.bf16.msra.mxu0 0
        %1595 = vmatprep.subr.bf16.mxu0 0
        %1596 = vmatpush1.bf16.msra.mxu0 0
        %1597 = vmatprep.subr.bf16.mxu0 0
        %1598 = vmatpush1.bf16.msra.mxu0 0
        %1599 = vmatprep.subr.bf16.mxu0 0
        %1600 = vmatpush1.bf16.msra.mxu0 0
        %1601 = vmatprep.subr.bf16.mxu0 0
        %1602 = vmatpush1.bf16.msra.mxu0 0
        %1603 = vmatprep.subr.bf16.mxu0 0
        %1604 = vmatpush1.bf16.msra.mxu0 0
        %1605 = vmatprep.subr.bf16.mxu0 0
        %1606 = vmatpush1.bf16.msra.mxu0 0
        %1607 = vmatprep.subr.bf16.mxu0 0
        %1608 = vmatpush1.bf16.msra.mxu0 0
        %1609 = vmatprep.subr.bf16.mxu0 0
        %1610 = vmatpush1.bf16.msra.mxu0 0
        %1611 = vmatprep.mubr.bf16.mxu0 0
        %1612 = vmatmul.mubr.bf16.gmra.mrb[0].mxu0 %v1574
        %v1613 = vpop.f32.mrb[0].mxu0
        %v1614 = vadd.f32 0.0, %v1613
        %v1615 = vpop.f32.mrb[0].mxu0
        %v1616 = vpop.f32.mrb[0].mxu0
        %v1617 = vpop.f32.mrb[0].mxu0
        %1618 = vdwg.mxu0
        %v1619 = vadd.f32 %v1459, %v1614
        %v1620 = vld [vmem:[#allocation16] sm:$0x1]
        %v1622 = vlaneseq
        %v1623 = vshrl.u32 %v1622, 7
        %v1624 = vsub.s32 0, %v1623
        %v1625 = vrot.slane %v1620, %v1624
        %v1627 = vadd.f32 %v1619, %v1625
        %v1628 = vadd.f32 %v841, %v1627
        %v1629 = vld [vmem:[#allocation17] sm:$0x1]
        %v1630 = vld [vmem:[#allocation19] sm:$0x1]
        %v1631 = vsel %vm866, %v1628, 0.0
        %1632 = vadd.xlane.f32.xlu0 %v1631
        %v1633 = vpop.xlane.xlu0 %1632
        %v1634 = vrcp.pop 32.0
        %v1635 = vmul.f32 %v1633, %v1634
        %v1636 = vsub.f32 %v1628, %v1635
        %v1637 = vmul.f32 %v1636, %v1636
        %v1638 = vsel %vm866, %v1637, 0.0
        %1639 = vadd.xlane.f32.xlu0 %v1638
        %v1640 = vpop.xlane.xlu0 %1639
        %v1641 = vmul.f32 %v1640, %v1634
        %v1642 = vadd.f32 %v1641, 1e-05
        %v1643 = vrsqrt.pop %v1642
        %v1644 = vmul.f32 %v1636, %v1643
        %v1646 = vlaneseq
        %v1647 = vshrl.u32 %v1646, 7
        %v1648 = vsub.s32 0, %v1647
        %v1649 = vrot.slane %v1629, %v1648
        %v1651 = vmul.f32 %v1644, %v1649
        %v1653 = vlaneseq
        %v1654 = vshrl.u32 %v1653, 7
        %v1655 = vsub.s32 0, %v1654
        %v1656 = vrot.slane %v1630, %v1655
        %v1658 = vadd.f32 %v1651, %v1656
        %v1659 = vpack.c.bf16 %v1658, %v1658
        %v1660 = vld [vmem:[#allocation20] sm:$0xf]
        %v1661 = vld [vmem:[#allocation20 + $0x4] sm:$0xf]
        %v1662 = vld [vmem:[#allocation20 + $0x8] sm:$0xf]
        %v1663 = vld [vmem:[#allocation20 + $0xc] sm:$0xf]
        %v1664 = vld [vmem:[#allocation22] sm:$0x1]
        %v1666 = vlaneseq
        %v1667 = vshrl.u32 %v1666, 7
        %v1668 = vsub.s32 0, %v1667
        %v1669 = vrot.slane %v1664, %v1668
        %v1675 = vunpack.c.l.b16 %v1660
        %v1676 = vunpack.c.l.b16 %v1661
        %v1677 = vunpack.c.l.b16 %v1662
        %v1678 = vunpack.c.l.b16 %v1663
        %v1679 = vpack.c.b16 %v1676, %v1675
        %v1680 = vpack.c.b16 %v1678, %v1677
        %v1684 = vsel %vm866, %v1659, 0
        %1686 = vmatprep.subr.bf16.mxu0 0
        %1687 = vmatpush1.bf16.msra.mxu0 %v1679
        %1688 = vmatprep.subr.bf16.mxu0 0
        %1689 = vmatpush1.bf16.msra.mxu0 %v1680
        %1690 = vmatprep.subr.bf16.mxu0 0
        %1691 = vmatpush1.bf16.msra.mxu0 0
        %1692 = vmatprep.subr.bf16.mxu0 0
        %1693 = vmatpush1.bf16.msra.mxu0 0
        %1694 = vmatprep.subr.bf16.mxu0 0
        %1695 = vmatpush1.bf16.msra.mxu0 0
        %1696 = vmatprep.subr.bf16.mxu0 0
        %1697 = vmatpush1.bf16.msra.mxu0 0
        %1698 = vmatprep.subr.bf16.mxu0 0
        %1699 = vmatpush1.bf16.msra.mxu0 0
        %1700 = vmatprep.subr.bf16.mxu0 0
        %1701 = vmatpush1.bf16.msra.mxu0 0
        %1702 = vmatprep.subr.bf16.mxu0 0
        %1703 = vmatpush1.bf16.msra.mxu0 0
        %1704 = vmatprep.subr.bf16.mxu0 0
        %1705 = vmatpush1.bf16.msra.mxu0 0
        %1706 = vmatprep.subr.bf16.mxu0 0
        %1707 = vmatpush1.bf16.msra.mxu0 0
        %1708 = vmatprep.subr.bf16.mxu0 0
        %1709 = vmatpush1.bf16.msra.mxu0 0
        %1710 = vmatprep.subr.bf16.mxu0 0
        %1711 = vmatpush1.bf16.msra.mxu0 0
        %1712 = vmatprep.subr.bf16.mxu0 0
        %1713 = vmatpush1.bf16.msra.mxu0 0
        %1714 = vmatprep.subr.bf16.mxu0 0
        %1715 = vmatpush1.bf16.msra.mxu0 0
        %1716 = vmatprep.subr.bf16.mxu0 0
        %1717 = vmatpush1.bf16.msra.mxu0 0
        %1718 = vmatprep.mubr.bf16.mxu0 0
        %1719 = vmatmul.mubr.bf16.gmra.mrb[0].mxu0 %v1684
        %v1720 = vpop.f32.mrb[0].mxu0
        %v1721 = vadd.f32 %v1669, %v1720
        %v1722 = vpop.f32.mrb[0].mxu0
        %v1723 = vpop.f32.mrb[0].mxu0
        %v1724 = vpop.f32.mrb[0].mxu0
        %1725 = vdwg.mxu0
        %v1726 = vmax.f32 %v1721, 0.0
        %v1727 = vpack.c.bf16 %v1726, %v1726
        %v1728 = vld [vmem:[#allocation23] sm:$0xf]
        %v1729 = vld [vmem:[#allocation23 + $0x4] sm:$0xf]
        %v1730 = vld [vmem:[#allocation23 + $0x8] sm:$0xf]
        %v1731 = vld [vmem:[#allocation23 + $0xc] sm:$0xf]
        %v1732 = vld [vmem:[#allocation23 + $0x10] sm:$0xf]
        %v1733 = vld [vmem:[#allocation23 + $0x14] sm:$0xf]
        %v1734 = vld [vmem:[#allocation23 + $0x18] sm:$0xf]
        %v1735 = vld [vmem:[#allocation23 + $0x1c] sm:$0xf]
        %v1736 = vld [vmem:[#allocation25] sm:$0x1]
        %v1738 = vlaneseq
        %v1739 = vshrl.u32 %v1738, 7
        %v1740 = vsub.s32 0, %v1739
        %v1741 = vrot.slane %v1736, %v1740
        %v1751 = vunpack.c.l.b16 %v1728
        %v1752 = vunpack.c.l.b16 %v1729
        %v1753 = vunpack.c.l.b16 %v1730
        %v1754 = vunpack.c.l.b16 %v1731
        %v1755 = vunpack.c.l.b16 %v1732
        %v1756 = vunpack.c.l.b16 %v1733
        %v1757 = vunpack.c.l.b16 %v1734
        %v1758 = vunpack.c.l.b16 %v1735
        %v1759 = vpack.c.b16 %v1752, %v1751
        %v1760 = vpack.c.b16 %v1754, %v1753
        %v1761 = vpack.c.b16 %v1756, %v1755
        %v1762 = vpack.c.b16 %v1758, %v1757
        %vm1767 = vcmask 523264
        %v1769 = vsel %vm1767, %v1727, 0
        %1771 = vmatprep.subr.bf16.mxu0 0
        %1772 = vmatpush1.bf16.msra.mxu0 %v1759
        %1773 = vmatprep.subr.bf16.mxu0 0
        %1774 = vmatpush1.bf16.msra.mxu0 %v1760
        %1775 = vmatprep.subr.bf16.mxu0 0
        %1776 = vmatpush1.bf16.msra.mxu0 %v1761
        %1777 = vmatprep.subr.bf16.mxu0 0
        %1778 = vmatpush1.bf16.msra.mxu0 %v1762
        %1779 = vmatprep.subr.bf16.mxu0 0
        %1780 = vmatpush1.bf16.msra.mxu0 0
        %1781 = vmatprep.subr.bf16.mxu0 0
        %1782 = vmatpush1.bf16.msra.mxu0 0
        %1783 = vmatprep.subr.bf16.mxu0 0
        %1784 = vmatpush1.bf16.msra.mxu0 0
        %1785 = vmatprep.subr.bf16.mxu0 0
        %1786 = vmatpush1.bf16.msra.mxu0 0
        %1787 = vmatprep.subr.bf16.mxu0 0
        %1788 = vmatpush1.bf16.msra.mxu0 0
        %1789 = vmatprep.subr.bf16.mxu0 0
        %1790 = vmatpush1.bf16.msra.mxu0 0
        %1791 = vmatprep.subr.bf16.mxu0 0
        %1792 = vmatpush1.bf16.msra.mxu0 0
        %1793 = vmatprep.subr.bf16.mxu0 0
        %1794 = vmatpush1.bf16.msra.mxu0 0
        %1795 = vmatprep.subr.bf16.mxu0 0
        %1796 = vmatpush1.bf16.msra.mxu0 0
        %1797 = vmatprep.subr.bf16.mxu0 0
        %1798 = vmatpush1.bf16.msra.mxu0 0
        %1799 = vmatprep.subr.bf16.mxu0 0
        %1800 = vmatpush1.bf16.msra.mxu0 0
        %1801 = vmatprep.subr.bf16.mxu0 0
        %1802 = vmatpush1.bf16.msra.mxu0 0
        %1803 = vmatprep.mubr.bf16.mxu0 0
        %1804 = vmatmul.mubr.bf16.gmra.mrb[0].mxu0 %v1769
        %v1805 = vpop.f32.mrb[0].mxu0
        %v1806 = vadd.f32 %v1741, %v1805
        %v1807 = vpop.f32.mrb[0].mxu0
        %v1808 = vpop.f32.mrb[0].mxu0
        %v1809 = vpop.f32.mrb[0].mxu0
        %1810 = vdwg.mxu0
        %v1811 = vadd.f32 %v1658, %v1806
        %v1812 = vld [vmem:[#allocation26] sm:$0x1]
        %v1813 = vld [vmem:[#allocation28] sm:$0x1]
        %v1814 = vsel %vm866, %v1811, 0.0
        %1815 = vadd.xlane.f32.xlu0 %v1814
        %v1816 = vpop.xlane.xlu0 %1815
        %v1817 = vmul.f32 %v1816, %v1634
        %v1818 = vsub.f32 %v1811, %v1817
        %v1819 = vmul.f32 %v1818, %v1818
        %v1820 = vsel %vm866, %v1819, 0.0
        %1821 = vadd.xlane.f32.xlu0 %v1820
        %v1822 = vpop.xlane.xlu0 %1821
        %v1823 = vmul.f32 %v1822, %v1634
        %v1824 = vadd.f32 %v1823, 1e-05
        %v1825 = vrsqrt.pop %v1824
        %v1826 = vmul.f32 %v1818, %v1825
        %v1828 = vlaneseq
        %v1829 = vshrl.u32 %v1828, 7
        %v1830 = vsub.s32 0, %v1829
        %v1831 = vrot.slane %v1812, %v1830
        %v1833 = vmul.f32 %v1826, %v1831
        %v1835 = vlaneseq
        %v1836 = vshrl.u32 %v1835, 7
        %v1837 = vsub.s32 0, %v1836
        %v1838 = vrot.slane %v1813, %v1837
        %v1840 = vadd.f32 %v1833, %v1838
        %1841 = vst.msk [vmem:[%s839] sm:$0xff] %vm866, %v1840
        %s1842 = sand.u32 %s442, 1
        %s1843 = scalar_lea.sflag [#allocation4], %s1842
        %s1844 = sand.u32 %s442, 1
        %s1845 = smul.addr %s1844, 8
        %s1846 = scalar_lea.vmem [#allocation29], %s1845
        // Predicated region
        $region157: #{tpu_custom_call.1} parent=87 // pred_check
          %p1847 = pneg %p452
        $region158: #{tpu_custom_call.1} parent=87 // pred_check_branch
          %1849 = sbr.rel (%p1847) target = $region160
        $region159: #{tpu_custom_call.1} parent=87 // pred_region
          %s1851 = ssub.s32 128, 128
          %1852 = vsyncadd %s1843, %s1851
          %s1853 = sadd.s32 %s49, %s48
          %s1854 = smul.addr %s1853, 128
          %s1855 = scalar_lea.hbm %s17, %s1854
          %s1857 = sshll.u32 %s1846, 4
          %s1858 = int_to_ptr.vmem [resolvable:$true] %s1857
          %1860 = dma.vmem_to_hbm [thread:$0]  %s1858, 128, %s1855, %s1843
        $region160: #{tpu_custom_call.1} parent=87 // pred_fallthru
          _
      $region88: #{tpu_custom_call.1} parent=5 // pred_fallthru
        _
      %p1861 = scmp.le.s32.totalorder 2, %s39
      // Predicated region
      $region161: #{tpu_custom_call.1} parent=5 // pred_check
        %p1862 = pneg %p1861
      $region162: #{tpu_custom_call.1} parent=5 // pred_check_branch
        %1864 = sbr.rel (%p1862) target = $region164
      $region163: #{tpu_custom_call.1} parent=5 // pred_region
        %s1865 = ssub.s32 %s39, 2
        // Predicated region
        $region165: #{tpu_custom_call.1} parent=163 // pred_check
          %p1866 = pneg %p458
        $region166: #{tpu_custom_call.1} parent=163 // pred_check_branch
          %1868 = sbr.rel (%p1866) target = $region168
        $region167: #{tpu_custom_call.1} parent=163 // pred_region
          %s1869 = sand.u32 %s443, 1
          %s1870 = scalar_lea.sflag [#allocation4], %s1869
          %s1871 = sand.u32 %s443, 1
          %s1872 = smul.addr %s1871, 8
          %s1873 = scalar_lea.vmem [#allocation29], %s1872
          %1874 = dma.done %s1870, 128
        $region168: #{tpu_custom_call.1} parent=163 // pred_fallthru
          _
      $region164: #{tpu_custom_call.1} parent=5 // pred_fallthru
        _
    $region6: #{tpu_custom_call.1} parent=1 // loop_footer
      %s43 = sadd.s32 1, %s39
    $region7: #{tpu_custom_call.1} parent=1 // loop_footer_branch
      %38 = sbr.rel target = $region3
    $region8: #{tpu_custom_call.1} parent=1 // loop_exit
      _
    %1875 = vsyncpa [#allocation3], 1
    %s1876 = scalar_lea.sflag [#allocation3], 1
    %1877 = vsyncpa %s1876, 1
    %1878 = vsyncpa [#allocation6], 1
    %s1879 = scalar_lea.sflag [#allocation6], 1
    %1880 = vsyncpa %s1879, 1
    %1881 = vsyncpa [#allocation9], 1
    %1882 = vsyncpa [#allocation12], 1
    %1883 = vsyncpa [#allocation15], 1
    %1884 = vsyncpa [#allocation18], 1
    %1885 = vsyncpa [#allocation21], 1
    %1886 = vsyncpa [#allocation24], 1
    %1887 = vsyncpa [#allocation27], 1
    %1888 = vsyncpa [#allocation4], 1
    %s1889 = scalar_lea.sflag [#allocation4], 1
    %1890 = vsyncpa %s1889, 1

</llo_original>
